<compile_context>
chip_gen: v5e
topology: v5e:2x2
jax: 0.10.0
libtpu: 0.0.40
codegen_flags: <defaults>
</compile_context>

<pallas_src>
import functools

import numpy as np
import jax
import jax.numpy as jnp
from jax import lax
from jax.experimental import pallas as pl
from jax.experimental.pallas import tpu as pltpu

IN_DIM = 64
MEM_DIM = 128          # 3*MEM_DIM slices land on lane-aligned (128) boundaries
PAD_IN = 128           # IN_DIM zero-padded to a full lane tile -> fused K = 256
MAX_CHILDREN = 4
SEQ_LEN = 8


# ----------------------------------------------------------------------------- kernel
def _tree_kernel(num_nodes, mem_dim, max_children, pad_in,
                 # --- scalar-prefetch refs (SMEM) ---
                 order_ref, child_ref,
                 # --- VMEM inputs (resident: constant index_map, single grid step) ---
                 x_ref, w_ref, b_iou_ref, b_f_ref,
                 # --- VMEM outputs (resident; extra always-zero row at index seq_len) ---
                 c_state_ref, h_state_ref,
                 # --- VMEM scratch ---
                 lhs_ref, cc_ref):
    n_rows = 1 + max_children

    # Zero-init resident state.  Row `seq_len` is the dedicated always-zero row that
    # padded child-table entries point at; it is never written afterwards.
    c_state_ref[...] = jnp.zeros_like(c_state_ref)
    h_state_ref[...] = jnp.zeros_like(h_state_ref)
    lhs_ref[...] = jnp.zeros_like(lhs_ref)

    def body(step, carry):
        node = order_ref[step]                               # node processed this step

        # ---- stage the fused LHS: rows [x | h_sum] ; [x | child_h[k]] ----
        x = x_ref[pl.ds(node, 1), :]                         # (1, pad_in) dynamic gather
        lhs_ref[:, 0:pad_in] = jnp.broadcast_to(x, (n_rows, pad_in))

        h_sum = jnp.zeros((1, mem_dim), jnp.float32)
        for k in range(max_children):                        # static unroll
            cidx = child_ref[step * max_children + k]        # padded slot -> zero row
            ch = h_state_ref[pl.ds(cidx, 1), :]              # (1, mem_dim)
            lhs_ref[1 + k:2 + k, pad_in:] = ch
            cc_ref[k:k + 1, :] = c_state_ref[pl.ds(cidx, 1), :]
            h_sum = h_sum + ch
        lhs_ref[0:1, pad_in:] = h_sum

        # ---- one MXU push per node: (1+max_children, 256) x (256, 512) ----
        res = jnp.dot(lhs_ref[...], w_ref[...], preferred_element_type=jnp.float32)

        iou = res[0:1, 0:3 * mem_dim] + b_iou_ref[...]       # (1, 3*mem)
        f_lin = res[1:n_rows, 3 * mem_dim:] + b_f_ref[...]   # (max_children, mem)

        i_g = jax.nn.sigmoid(iou[:, 0:mem_dim])
        o_g = jax.nn.sigmoid(iou[:, mem_dim:2 * mem_dim])
        u_g = jnp.tanh(iou[:, 2 * mem_dim:3 * mem_dim])
        f = jax.nn.sigmoid(f_lin)

        c = i_g * u_g + jnp.sum(f * cc_ref[...], axis=0, keepdims=True)
        h = o_g * jnp.tanh(c)

        c_state_ref[pl.ds(node, 1), :] = c
        h_state_ref[pl.ds(node, 1), :] = h
        return carry

    # Small fixed trip count -> unroll for LLO scheduler visibility.
    lax.fori_loop(0, num_nodes, body, None, unroll=True)


def make_tree_forward(seq_len, pad_in, mem_dim, max_children, num_nodes):
    const2d = lambda i, *_: (0, 0)    # every tensor is whole-array & VMEM-resident
    k_dim = pad_in + mem_dim          # fused contraction width (256)
    n_out = 3 * mem_dim + mem_dim     # fused output width (512)

    grid_spec = pltpu.PrefetchScalarGridSpec(
        num_scalar_prefetch=2,                      # post-order node list, child table
        grid=(1,),                                  # whole tree in one kernel invocation
        in_specs=[
            pl.BlockSpec((seq_len, pad_in), const2d),          # padded inputs
            pl.BlockSpec((k_dim, n_out), const2d),             # fused W  (256, 512)
            pl.BlockSpec((1, 3 * mem_dim), const2d),           # b_iou
            pl.BlockSpec((1, mem_dim), const2d),               # b_f
        ],
        out_specs=(
            # NOTE: constant index_map + "arbitrary" semantics keep these buffers
            # resident across the (single) grid step; row seq_len is the zero row.
            pl.BlockSpec((seq_len + 1, mem_dim), const2d),     # c state
            pl.BlockSpec((seq_len + 1, mem_dim), const2d),     # h state == hiddens
        ),
        scratch_shapes=[
            pltpu.VMEM((1 + max_children, k_dim), jnp.float32),    # fused LHS staging
            pltpu.VMEM((max_children, mem_dim), jnp.float32),      # child_c staging
        ],
    )

    call = pl.pallas_call(
        functools.partial(_tree_kernel, num_nodes, mem_dim, max_children, pad_in),
        grid_spec=grid_spec,
        out_shape=(jax.ShapeDtypeStruct((seq_len + 1, mem_dim), jnp.float32),
                   jax.ShapeDtypeStruct((seq_len + 1, mem_dim), jnp.float32)),
        compiler_params=pltpu.CompilerParams(
            dimension_semantics=("arbitrary",)),
    )

    @jax.jit
    def run(order, child_tbl, inputs, w_fused, b_iou, b_f):
        x_pad = jnp.zeros((seq_len, pad_in), jnp.float32).at[:, :inputs.shape[1]].set(inputs)
        c_full, h_full = call(order, child_tbl, x_pad, w_fused, b_iou, b_f)
        return c_full[:seq_len], h_full[:seq_len]

    return run


# ----------------------------------------------------------------------------- tree glue
class Tree:
    def __init__(self, idx, children=()):
        self.idx = idx
        self.children = list(children)
        self.num_children = len(self.children)
        self.state = None

    def all_nodes(self):
        out = [self]
        for c in self.children:
            out.extend(c.all_nodes())
        return out


def build_tree_tables(tree, max_children, zero_row_idx):
    """Host-side, once per tree: post-order eval order + flattened child table.
    Padded child slots point at `zero_row_idx` (the dedicated always-zero state row)."""
    order, nodes = [], []

    def post(t):
        for c in t.children:
            post(c)
        order.append(t.idx)
        nodes.append(t)

    post(tree)
    num_nodes = len(order)
    child_tbl = np.full((num_nodes, max_children), zero_row_idx, np.int32)
    for pos, node in enumerate(nodes):
        assert node.num_children <= max_children, "increase MAX_CHILDREN"
        for k, c in enumerate(node.children):
            child_tbl[pos, k] = c.idx
    return np.asarray(order, np.int32), child_tbl.reshape(-1)   # 1-D -> compact SMEM


class ChildSumTreeLSTMPallas:
    def __init__(self, in_dim, mem_dim, max_children, key, pad_in=PAD_IN):
        self.in_dim = in_dim
        self.mem_dim = mem_dim
        self.max_children = max_children
        self.pad_in = pad_in
        ks = jax.random.split(key, 8)

        def lin(kw, kb, fan_in, fan_out):
            bound = 1.0 / float(np.sqrt(fan_in))
            w = jax.random.uniform(kw, (fan_in, fan_out), jnp.float32, -bound, bound)
            b = jax.random.uniform(kb, (1, fan_out), jnp.float32, -bound, bound)
            return w, b

        w_ioux, b_ioux = lin(ks[0], ks[1], in_dim, 3 * mem_dim)
        w_iouh, b_iouh = lin(ks[2], ks[3], mem_dim, 3 * mem_dim)
        w_fx, b_fx = lin(ks[4], ks[5], in_dim, mem_dim)
        w_fh, b_fh = lin(ks[6], ks[7], mem_dim, mem_dim)

        # Un-fused params kept only for the pure-JAX reference check.
        self.params = dict(w_ioux=w_ioux, b_ioux=b_ioux, w_iouh=w_iouh, b_iouh=b_iouh,
                           w_fx=w_fx, b_fx=b_fx, w_fh=w_fh, b_fh=b_fh)

        # One-time weight fusion with zero-padding of the x rows to pad_in (=128),
        # giving a single lane-aligned (256, 512) RHS -> one MXU push per node.
        w_ioux_pad = jnp.zeros((pad_in, 3 * mem_dim), jnp.float32).at[:in_dim].set(w_ioux)
        w_fx_pad = jnp.zeros((pad_in, mem_dim), jnp.float32).at[:in_dim].set(w_fx)
        self.w_fused = jnp.concatenate([
            jnp.concatenate([w_ioux_pad, w_fx_pad], axis=1),   # x block   (128, 512)
            jnp.concatenate([w_iouh, w_fh], axis=1),           # h block   (128, 512)
        ], axis=0)                                             # (256, 512)
        self.b_iou = b_ioux + b_iouh                           # (1, 384)
        self.b_f = b_fx + b_fh                                 # (1, 128)

        self._runners = {}   # cached per (seq_len, num_nodes) -> compiled call

    def forward(self, tree, inputs):
        seq_len = inputs.shape[0]
        zero_row = seq_len                      # dedicated always-zero state row
        order, child_tbl = build_tree_tables(tree, self.max_children, zero_row)
        num_nodes = int(order.shape[0])
        cache_key = (seq_len, num_nodes)
        if cache_key not in self._runners:
            self._runners[cache_key] = make_tree_forward(
                seq_len, self.pad_in, self.mem_dim, self.max_children, num_nodes)
        run = self._runners[cache_key]

        c_state, h_state = run(jnp.asarray(order), jnp.asarray(child_tbl), inputs,
                               self.w_fused, self.b_iou, self.b_f)

        # Mirror the PyTorch module's per-node .state side effect (one host transfer).
        c_np, h_np = np.asarray(c_state), np.asarray(h_state)
        for node in tree.all_nodes():
            node.state = (c_np[node.idx:node.idx + 1], h_np[node.idx:node.idx + 1])

        root_idx = int(order[-1])
        # TODO(synk): tree.hidden_traversal is undefined in the reference module; we
        # assume "scatter each node's hidden state into row node.idx", which is exactly
        # the h_state output written row-by-row inside the kernel.
        hiddens = h_state
        return c_state[root_idx][None, :], h_state[root_idx][None, :], hiddens


# ----------------------------------------------------------------------------- pure-JAX reference
def _ref_node_forward(p, x, child_c, child_h):
    h_sum = jnp.sum(child_h, axis=0, keepdims=True)
    iou = x @ p["w_ioux"] + p["b_ioux"] + h_sum @ p["w_iouh"] + p["b_iouh"]
    i = jax.nn.sigmoid(iou[:, :MEM_DIM])
    o = jax.nn.sigmoid(iou[:, MEM_DIM:2 * MEM_DIM])
    u = jnp.tanh(iou[:, 2 * MEM_DIM:])
    f = jax.nn.sigmoid(child_h @ p["w_fh"] + p["b_fh"] + x @ p["w_fx"] + p["b_fx"])
    c = i * u + jnp.sum(f * child_c, axis=0, keepdims=True)
    h = o * jnp.tanh(c)
    return c, h


def _ref_forward(p, tree, inputs):
    states = {}

    def rec(t):
        for ch in t.children:
            rec(ch)
        if t.num_children == 0:
            child_c = jnp.zeros((1, MEM_DIM), jnp.float32)
            child_h = jnp.zeros((1, MEM_DIM), jnp.float32)
        else:
            child_c = jnp.concatenate([states[ch.idx][0] for ch in t.children], axis=0)
            child_h = jnp.concatenate([states[ch.idx][1] for ch in t.children], axis=0)
        states[t.idx] = _ref_node_forward(p, inputs[t.idx][None, :], child_c, child_h)

    rec(tree)
    hiddens = jnp.zeros((inputs.shape[0], MEM_DIM), jnp.float32)
    for idx, (_, h) in states.items():
        hiddens = hiddens.at[idx].set(h[0])
    return states[tree.idx][0], states[tree.idx][1], hiddens


# ----------------------------------------------------------------------------- main
if __name__ == "__main__":
    key = jax.random.PRNGKey(0)
    k_in, k_par = jax.random.split(key)

    inputs = jax.random.normal(k_in, (SEQ_LEN, IN_DIM), jnp.float32)

    # small deterministic tree over SEQ_LEN = 8 nodes (root has 3 children; max arity 3)
    tree = Tree(0, [
        Tree(1, [Tree(4), Tree(5)]),
        Tree(2, [Tree(6)]),
        Tree(3, [Tree(7)]),
    ])

    model = ChildSumTreeLSTMPallas(IN_DIM, MEM_DIM, MAX_CHILDREN, k_par)
    c_root, h_root, hiddens = model.forward(tree, inputs)
    jax.block_until_ready((c_root, h_root, hiddens))

    # full pure-JAX reference of the recursive ChildSum-TreeLSTM forward
    c_exp, h_exp, hid_exp = _ref_forward(model.params, tree, inputs)
    assert jnp.allclose(c_root, c_exp, atol=1e-5), "c mismatch"
    assert jnp.allclose(h_root, h_exp, atol=1e-5), "h mismatch"
    assert jnp.allclose(hiddens, hid_exp, atol=1e-5), "hiddens mismatch"

    print("KERNEL_OK")
</pallas_src>

<mosaic_0001>
module attributes {stable_mosaic.version = 11 : i64} {
  func.func @_tree_kernel(%arg0: i32, %arg1: memref<8xi32, #tpu.memory_space<smem>>, %arg2: memref<32xi32, #tpu.memory_space<smem>>, %arg3: memref<8x128xf32, #tpu.memory_space<vmem>>, %arg4: memref<256x512xf32, #tpu.memory_space<vmem>>, %arg5: memref<1x384xf32, #tpu.memory_space<vmem>>, %arg6: memref<1x128xf32, #tpu.memory_space<vmem>>, %arg7: memref<9x128xf32, #tpu.memory_space<vmem>>, %arg8: memref<9x128xf32, #tpu.memory_space<vmem>>, %arg9: memref<5x256xf32, #tpu.memory_space<vmem>>, %arg10: memref<4x128xf32, #tpu.memory_space<vmem>>) attributes {dimension_semantics = [#tpu.dimension_semantics<arbitrary>], iteration_bounds = array<i64: 1>, scalar_prefetch = 2 : i64, scratch_operands = 2 : i64, tpu.core_type = #tpu.core_type<tc>, window_params = [{pipeline_mode = #tpu.pipeline_mode<synchronous>, transform_indices = @transform_0, window_bounds = array<i64: 8, 128>}, {pipeline_mode = #tpu.pipeline_mode<synchronous>, transform_indices = @transform_1, window_bounds = array<i64: 256, 512>}, {pipeline_mode = #tpu.pipeline_mode<synchronous>, transform_indices = @transform_2, window_bounds = array<i64: 1, 384>}, {pipeline_mode = #tpu.pipeline_mode<synchronous>, transform_indices = @transform_3, window_bounds = array<i64: 1, 128>}, {pipeline_mode = #tpu.pipeline_mode<synchronous>, transform_indices = @transform_4, window_bounds = array<i64: 9, 128>}, {pipeline_mode = #tpu.pipeline_mode<synchronous>, transform_indices = @transform_5, window_bounds = array<i64: 9, 128>}]} {
    %cst = arith.constant 0.000000e+00 : f32
    %0 = vector.broadcast %cst : f32 to vector<9x128xf32>
    %c0 = arith.constant 0 : index
    %c0_0 = arith.constant 0 : index
    %1 = vector.load %arg7[%c0, %c0_0] : memref<9x128xf32, #tpu.memory_space<vmem>>, vector<9x128xf32>
    tpu.vector_store %arg7[%c0, %c0_0], %0 {strides = array<i32>} : memref<9x128xf32, #tpu.memory_space<vmem>>, vector<9x128xf32>,
    %cst_1 = arith.constant 0.000000e+00 : f32
    %2 = vector.broadcast %cst_1 : f32 to vector<9x128xf32>
    %c0_2 = arith.constant 0 : index
    %c0_3 = arith.constant 0 : index
    %3 = vector.load %arg8[%c0_2, %c0_3] : memref<9x128xf32, #tpu.memory_space<vmem>>, vector<9x128xf32>
    tpu.vector_store %arg8[%c0_2, %c0_3], %2 {strides = array<i32>} : memref<9x128xf32, #tpu.memory_space<vmem>>, vector<9x128xf32>,
    %cst_4 = arith.constant 0.000000e+00 : f32
    %4 = vector.broadcast %cst_4 : f32 to vector<5x256xf32>
    %c0_5 = arith.constant 0 : index
    %c0_6 = arith.constant 0 : index
    %5 = vector.load %arg9[%c0_5, %c0_6] : memref<5x256xf32, #tpu.memory_space<vmem>>, vector<5x256xf32>
    tpu.vector_store %arg9[%c0_5, %c0_6], %4 {strides = array<i32>} : memref<5x256xf32, #tpu.memory_space<vmem>>, vector<5x256xf32>,
    %c0_i32 = arith.constant 0 : i32
    %6 = arith.index_cast %c0_i32 : i32 to index
    %7 = memref.load %arg1[%6] : memref<8xi32, #tpu.memory_space<smem>>
    %8 = arith.index_cast %7 : i32 to index
    %c0_7 = arith.constant 0 : index
    %9 = vector.load %arg3[%8, %c0_7] : memref<8x128xf32, #tpu.memory_space<vmem>>, vector<1x128xf32>
    %10 = vector.shape_cast %9 : vector<1x128xf32> to vector<1x128xf32>
    %11 = vector.broadcast %10 : vector<1x128xf32> to vector<5x128xf32>
    %c0_8 = arith.constant 0 : index
    %c0_9 = arith.constant 0 : index
    %12 = vector.load %arg9[%c0_8, %c0_9] : memref<5x256xf32, #tpu.memory_space<vmem>>, vector<5x128xf32>
    tpu.vector_store %arg9[%c0_8, %c0_9], %11 {strides = array<i32>} : memref<5x256xf32, #tpu.memory_space<vmem>>, vector<5x128xf32>,
    %cst_10 = arith.constant 0.000000e+00 : f32
    %13 = vector.broadcast %cst_10 : f32 to vector<1x128xf32>
    %c4_i32 = arith.constant 4 : i32
    %14 = arith.muli %c0_i32, %c4_i32 : i32
    %c0_i32_11 = arith.constant 0 : i32
    %15 = arith.addi %14, %c0_i32_11 : i32
    %16 = arith.index_cast %15 : i32 to index
    %17 = memref.load %arg2[%16] : memref<32xi32, #tpu.memory_space<smem>>
    %18 = arith.index_cast %17 : i32 to index
    %c0_12 = arith.constant 0 : index
    %19 = vector.load %arg8[%18, %c0_12] : memref<9x128xf32, #tpu.memory_space<vmem>>, vector<1x128xf32>
    %c1 = arith.constant 1 : index
    %c128 = arith.constant 128 : index
    %20 = vector.load %arg9[%c1, %c128] : memref<5x256xf32, #tpu.memory_space<vmem>>, vector<1x128xf32>
    tpu.vector_store %arg9[%c1, %c128], %19 {strides = array<i32>} : memref<5x256xf32, #tpu.memory_space<vmem>>, vector<1x128xf32>,
    %21 = arith.index_cast %17 : i32 to index
    %c0_13 = arith.constant 0 : index
    %22 = vector.load %arg7[%21, %c0_13] : memref<9x128xf32, #tpu.memory_space<vmem>>, vector<1x128xf32>
    %c0_14 = arith.constant 0 : index
    %c0_15 = arith.constant 0 : index
    %23 = vector.load %arg10[%c0_14, %c0_15] : memref<4x128xf32, #tpu.memory_space<vmem>>, vector<1x128xf32>
    tpu.vector_store %arg10[%c0_14, %c0_15], %22 {strides = array<i32>} : memref<4x128xf32, #tpu.memory_space<vmem>>, vector<1x128xf32>,
    %24 = arith.addf %13, %19 : vector<1x128xf32>
    %c4_i32_16 = arith.constant 4 : i32
    %25 = arith.muli %c0_i32, %c4_i32_16 : i32
    %c1_i32 = arith.constant 1 : i32
    %26 = arith.addi %25, %c1_i32 : i32
    %27 = arith.index_cast %26 : i32 to index
    %28 = memref.load %arg2[%27] : memref<32xi32, #tpu.memory_space<smem>>
    %29 = arith.index_cast %28 : i32 to index
    %c0_17 = arith.constant 0 : index
    %30 = vector.load %arg8[%29, %c0_17] : memref<9x128xf32, #tpu.memory_space<vmem>>, vector<1x128xf32>
    %c2 = arith.constant 2 : index
    %c128_18 = arith.constant 128 : index
    %31 = vector.load %arg9[%c2, %c128_18] : memref<5x256xf32, #tpu.memory_space<vmem>>, vector<1x128xf32>
    tpu.vector_store %arg9[%c2, %c128_18], %30 {strides = array<i32>} : memref<5x256xf32, #tpu.memory_space<vmem>>, vector<1x128xf32>,
    %32 = arith.index_cast %28 : i32 to index
    %c0_19 = arith.constant 0 : index
    %33 = vector.load %arg7[%32, %c0_19] : memref<9x128xf32, #tpu.memory_space<vmem>>, vector<1x128xf32>
    %c1_20 = arith.constant 1 : index
    %c0_21 = arith.constant 0 : index
    %34 = vector.load %arg10[%c1_20, %c0_21] : memref<4x128xf32, #tpu.memory_space<vmem>>, vector<1x128xf32>
    tpu.vector_store %arg10[%c1_20, %c0_21], %33 {strides = array<i32>} : memref<4x128xf32, #tpu.memory_space<vmem>>, vector<1x128xf32>,
    %35 = arith.addf %24, %30 : vector<1x128xf32>
    %c4_i32_22 = arith.constant 4 : i32
    %36 = arith.muli %c0_i32, %c4_i32_22 : i32
    %c2_i32 = arith.constant 2 : i32
    %37 = arith.addi %36, %c2_i32 : i32
    %38 = arith.index_cast %37 : i32 to index
    %39 = memref.load %arg2[%38] : memref<32xi32, #tpu.memory_space<smem>>
    %40 = arith.index_cast %39 : i32 to index
    %c0_23 = arith.constant 0 : index
    %41 = vector.load %arg8[%40, %c0_23] : memref<9x128xf32, #tpu.memory_space<vmem>>, vector<1x128xf32>
    %c3 = arith.constant 3 : index
    %c128_24 = arith.constant 128 : index
    %42 = vector.load %arg9[%c3, %c128_24] : memref<5x256xf32, #tpu.memory_space<vmem>>, vector<1x128xf32>
    tpu.vector_store %arg9[%c3, %c128_24], %41 {strides = array<i32>} : memref<5x256xf32, #tpu.memory_space<vmem>>, vector<1x128xf32>,
    %43 = arith.index_cast %39 : i32 to index
    %c0_25 = arith.constant 0 : index
    %44 = vector.load %arg7[%43, %c0_25] : memref<9x128xf32, #tpu.memory_space<vmem>>, vector<1x128xf32>
    %c2_26 = arith.constant 2 : index
    %c0_27 = arith.constant 0 : index
    %45 = vector.load %arg10[%c2_26, %c0_27] : memref<4x128xf32, #tpu.memory_space<vmem>>, vector<1x128xf32>
    tpu.vector_store %arg10[%c2_26, %c0_27], %44 {strides = array<i32>} : memref<4x128xf32, #tpu.memory_space<vmem>>, vector<1x128xf32>,
    %46 = arith.addf %35, %41 : vector<1x128xf32>
    %c4_i32_28 = arith.constant 4 : i32
    %47 = arith.muli %c0_i32, %c4_i32_28 : i32
    %c3_i32 = arith.constant 3 : i32
    %48 = arith.addi %47, %c3_i32 : i32
    %49 = arith.index_cast %48 : i32 to index
    %50 = memref.load %arg2[%49] : memref<32xi32, #tpu.memory_space<smem>>
    %51 = arith.index_cast %50 : i32 to index
    %c0_29 = arith.constant 0 : index
    %52 = vector.load %arg8[%51, %c0_29] : memref<9x128xf32, #tpu.memory_space<vmem>>, vector<1x128xf32>
    %c4 = arith.constant 4 : index
    %c128_30 = arith.constant 128 : index
    %53 = vector.load %arg9[%c4, %c128_30] : memref<5x256xf32, #tpu.memory_space<vmem>>, vector<1x128xf32>
    tpu.vector_store %arg9[%c4, %c128_30], %52 {strides = array<i32>} : memref<5x256xf32, #tpu.memory_space<vmem>>, vector<1x128xf32>,
    %54 = arith.index_cast %50 : i32 to index
    %c0_31 = arith.constant 0 : index
    %55 = vector.load %arg7[%54, %c0_31] : memref<9x128xf32, #tpu.memory_space<vmem>>, vector<1x128xf32>
    %c3_32 = arith.constant 3 : index
    %c0_33 = arith.constant 0 : index
    %56 = vector.load %arg10[%c3_32, %c0_33] : memref<4x128xf32, #tpu.memory_space<vmem>>, vector<1x128xf32>
    tpu.vector_store %arg10[%c3_32, %c0_33], %55 {strides = array<i32>} : memref<4x128xf32, #tpu.memory_space<vmem>>, vector<1x128xf32>,
    %57 = arith.addf %46, %52 : vector<1x128xf32>
    %c0_34 = arith.constant 0 : index
    %c128_35 = arith.constant 128 : index
    %58 = vector.load %arg9[%c0_34, %c128_35] : memref<5x256xf32, #tpu.memory_space<vmem>>, vector<1x128xf32>
    tpu.vector_store %arg9[%c0_34, %c128_35], %57 {strides = array<i32>} : memref<5x256xf32, #tpu.memory_space<vmem>>, vector<1x128xf32>,
    %c0_36 = arith.constant 0 : index
    %c0_37 = arith.constant 0 : index
    %59 = vector.load %arg9[%c0_36, %c0_37] : memref<5x256xf32, #tpu.memory_space<vmem>>, vector<5x256xf32>
    %c0_38 = arith.constant 0 : index
    %c0_39 = arith.constant 0 : index
    %60 = vector.load %arg4[%c0_38, %c0_39] : memref<256x512xf32, #tpu.memory_space<vmem>>, vector<256x512xf32>
    %cst_40 = arith.constant dense<0.000000e+00> : vector<5x512xf32>
    %61 = tpu.matmul %59, %60, %cst_40 {dimension_numbers = #tpu.dot_dimension_numbers<[1], [0], [0], [1], [0, 0, 1, 1], [], []>} : vector<5x256xf32>, vector<256x512xf32>, vector<5x512xf32> -> vector<5x512xf32>
    %62 = vector.extract_strided_slice %61 {offsets = [0, 0], sizes = [1, 384], strides = [1, 1]} : vector<5x512xf32> to vector<1x384xf32>
    %c0_41 = arith.constant 0 : index
    %c0_42 = arith.constant 0 : index
    %63 = vector.load %arg5[%c0_41, %c0_42] : memref<1x384xf32, #tpu.memory_space<vmem>>, vector<1x384xf32>
    %64 = arith.addf %62, %63 : vector<1x384xf32>
    %65 = vector.extract_strided_slice %61 {offsets = [1, 384], sizes = [4, 128], strides = [1, 1]} : vector<5x512xf32> to vector<4x128xf32>
    %c0_43 = arith.constant 0 : index
    %c0_44 = arith.constant 0 : index
    %66 = vector.load %arg6[%c0_43, %c0_44] : memref<1x128xf32, #tpu.memory_space<vmem>>, vector<1x128xf32>
    %67 = vector.broadcast %66 : vector<1x128xf32> to vector<4x128xf32>
    %68 = arith.addf %65, %67 : vector<4x128xf32>
    %69 = vector.extract_strided_slice %64 {offsets = [0, 0], sizes = [1, 128], strides = [1, 1]} : vector<1x384xf32> to vector<1x128xf32>
    %70 = arith.negf %69 : vector<1x128xf32>
    %71 = math.exp %70 : vector<1x128xf32>
    %cst_45 = arith.constant 1.000000e+00 : f32
    %72 = vector.broadcast %cst_45 : f32 to vector<1x128xf32>
    %73 = arith.addf %72, %71 : vector<1x128xf32>
    %74 = arith.divf %72, %73 : vector<1x128xf32>
    %75 = vector.extract_strided_slice %64 {offsets = [0, 128], sizes = [1, 128], strides = [1, 1]} : vector<1x384xf32> to vector<1x128xf32>
    %76 = arith.negf %75 : vector<1x128xf32>
    %77 = math.exp %76 : vector<1x128xf32>
    %cst_46 = arith.constant 1.000000e+00 : f32
    %78 = vector.broadcast %cst_46 : f32 to vector<1x128xf32>
    %79 = arith.addf %78, %77 : vector<1x128xf32>
    %80 = arith.divf %78, %79 : vector<1x128xf32>
    %81 = vector.extract_strided_slice %64 {offsets = [0, 256], sizes = [1, 128], strides = [1, 1]} : vector<1x384xf32> to vector<1x128xf32>
    %82 = math.tanh %81 : vector<1x128xf32>
    %83 = arith.negf %68 : vector<4x128xf32>
    %84 = math.exp %83 : vector<4x128xf32>
    %cst_47 = arith.constant 1.000000e+00 : f32
    %85 = vector.broadcast %cst_47 : f32 to vector<4x128xf32>
    %86 = arith.addf %85, %84 : vector<4x128xf32>
    %87 = arith.divf %85, %86 : vector<4x128xf32>
    %88 = arith.mulf %74, %82 : vector<1x128xf32>
    %c0_48 = arith.constant 0 : index
    %c0_49 = arith.constant 0 : index
    %89 = vector.load %arg10[%c0_48, %c0_49] : memref<4x128xf32, #tpu.memory_space<vmem>>, vector<4x128xf32>
    %90 = arith.mulf %87, %89 : vector<4x128xf32>
    %cst_50 = arith.constant dense<0.000000e+00> : vector<128xf32>
    %91 = vector.multi_reduction <add>, %90, %cst_50 [0] : vector<4x128xf32> to vector<128xf32>
    %92 = vector.shape_cast %91 : vector<128xf32> to vector<1x128xf32>
    %93 = arith.addf %88, %92 : vector<1x128xf32>
    %94 = math.tanh %93 : vector<1x128xf32>
    %95 = arith.mulf %80, %94 : vector<1x128xf32>
    %96 = arith.index_cast %7 : i32 to index
    %c0_51 = arith.constant 0 : index
    %97 = vector.load %arg7[%96, %c0_51] : memref<9x128xf32, #tpu.memory_space<vmem>>, vector<1x128xf32>
    tpu.vector_store %arg7[%96, %c0_51], %93 {strides = array<i32>} : memref<9x128xf32, #tpu.memory_space<vmem>>, vector<1x128xf32>,
    %98 = arith.index_cast %7 : i32 to index
    %c0_52 = arith.constant 0 : index
    %99 = vector.load %arg8[%98, %c0_52] : memref<9x128xf32, #tpu.memory_space<vmem>>, vector<1x128xf32>
    tpu.vector_store %arg8[%98, %c0_52], %95 {strides = array<i32>} : memref<9x128xf32, #tpu.memory_space<vmem>>, vector<1x128xf32>,
    %c1_i32_53 = arith.constant 1 : i32
    %100 = arith.index_cast %c1_i32_53 : i32 to index
    %101 = memref.load %arg1[%100] : memref<8xi32, #tpu.memory_space<smem>>
    %102 = arith.index_cast %101 : i32 to index
    %c0_54 = arith.constant 0 : index
    %103 = vector.load %arg3[%102, %c0_54] : memref<8x128xf32, #tpu.memory_space<vmem>>, vector<1x128xf32>
    %104 = vector.shape_cast %103 : vector<1x128xf32> to vector<1x128xf32>
    %105 = vector.broadcast %104 : vector<1x128xf32> to vector<5x128xf32>
    %c0_55 = arith.constant 0 : index
    %c0_56 = arith.constant 0 : index
    %106 = vector.load %arg9[%c0_55, %c0_56] : memref<5x256xf32, #tpu.memory_space<vmem>>, vector<5x128xf32>
    tpu.vector_store %arg9[%c0_55, %c0_56], %105 {strides = array<i32>} : memref<5x256xf32, #tpu.memory_space<vmem>>, vector<5x128xf32>,
    %cst_57 = arith.constant 0.000000e+00 : f32
    %107 = vector.broadcast %cst_57 : f32 to vector<1x128xf32>
    %c4_i32_58 = arith.constant 4 : i32
    %108 = arith.muli %c1_i32_53, %c4_i32_58 : i32
    %c0_i32_59 = arith.constant 0 : i32
    %109 = arith.addi %108, %c0_i32_59 : i32
    %110 = arith.index_cast %109 : i32 to index
    %111 = memref.load %arg2[%110] : memref<32xi32, #tpu.memory_space<smem>>
    %112 = arith.index_cast %111 : i32 to index
    %c0_60 = arith.constant 0 : index
    %113 = vector.load %arg8[%112, %c0_60] : memref<9x128xf32, #tpu.memory_space<vmem>>, vector<1x128xf32>
    %c1_61 = arith.constant 1 : index
    %c128_62 = arith.constant 128 : index
    %114 = vector.load %arg9[%c1_61, %c128_62] : memref<5x256xf32, #tpu.memory_space<vmem>>, vector<1x128xf32>
    tpu.vector_store %arg9[%c1_61, %c128_62], %113 {strides = array<i32>} : memref<5x256xf32, #tpu.memory_space<vmem>>, vector<1x128xf32>,
    %115 = arith.index_cast %111 : i32 to index
    %c0_63 = arith.constant 0 : index
    %116 = vector.load %arg7[%115, %c0_63] : memref<9x128xf32, #tpu.memory_space<vmem>>, vector<1x128xf32>
    %c0_64 = arith.constant 0 : index
    %c0_65 = arith.constant 0 : index
    %117 = vector.load %arg10[%c0_64, %c0_65] : memref<4x128xf32, #tpu.memory_space<vmem>>, vector<1x128xf32>
    tpu.vector_store %arg10[%c0_64, %c0_65], %116 {strides = array<i32>} : memref<4x128xf32, #tpu.memory_space<vmem>>, vector<1x128xf32>,
    %118 = arith.addf %107, %113 : vector<1x128xf32>
    %c4_i32_66 = arith.constant 4 : i32
    %119 = arith.muli %c1_i32_53, %c4_i32_66 : i32
    %c1_i32_67 = arith.constant 1 : i32
    %120 = arith.addi %119, %c1_i32_67 : i32
    %121 = arith.index_cast %120 : i32 to index
    %122 = memref.load %arg2[%121] : memref<32xi32, #tpu.memory_space<smem>>
    %123 = arith.index_cast %122 : i32 to index
    %c0_68 = arith.constant 0 : index
    %124 = vector.load %arg8[%123, %c0_68] : memref<9x128xf32, #tpu.memory_space<vmem>>, vector<1x128xf32>
    %c2_69 = arith.constant 2 : index
    %c128_70 = arith.constant 128 : index
    %125 = vector.load %arg9[%c2_69, %c128_70] : memref<5x256xf32, #tpu.memory_space<vmem>>, vector<1x128xf32>
    tpu.vector_store %arg9[%c2_69, %c128_70], %124 {strides = array<i32>} : memref<5x256xf32, #tpu.memory_space<vmem>>, vector<1x128xf32>,
    %126 = arith.index_cast %122 : i32 to index
    %c0_71 = arith.constant 0 : index
    %127 = vector.load %arg7[%126, %c0_71] : memref<9x128xf32, #tpu.memory_space<vmem>>, vector<1x128xf32>
    %c1_72 = arith.constant 1 : index
    %c0_73 = arith.constant 0 : index
    %128 = vector.load %arg10[%c1_72, %c0_73] : memref<4x128xf32, #tpu.memory_space<vmem>>, vector<1x128xf32>
    tpu.vector_store %arg10[%c1_72, %c0_73], %127 {strides = array<i32>} : memref<4x128xf32, #tpu.memory_space<vmem>>, vector<1x128xf32>,
    %129 = arith.addf %118, %124 : vector<1x128xf32>
    %c4_i32_74 = arith.constant 4 : i32
    %130 = arith.muli %c1_i32_53, %c4_i32_74 : i32
    %c2_i32_75 = arith.constant 2 : i32
    %131 = arith.addi %130, %c2_i32_75 : i32
    %132 = arith.index_cast %131 : i32 to index
    %133 = memref.load %arg2[%132] : memref<32xi32, #tpu.memory_space<smem>>
    %134 = arith.index_cast %133 : i32 to index
    %c0_76 = arith.constant 0 : index
    %135 = vector.load %arg8[%134, %c0_76] : memref<9x128xf32, #tpu.memory_space<vmem>>, vector<1x128xf32>
    %c3_77 = arith.constant 3 : index
    %c128_78 = arith.constant 128 : index
    %136 = vector.load %arg9[%c3_77, %c128_78] : memref<5x256xf32, #tpu.memory_space<vmem>>, vector<1x128xf32>
    tpu.vector_store %arg9[%c3_77, %c128_78], %135 {strides = array<i32>} : memref<5x256xf32, #tpu.memory_space<vmem>>, vector<1x128xf32>,
    %137 = arith.index_cast %133 : i32 to index
    %c0_79 = arith.constant 0 : index
    %138 = vector.load %arg7[%137, %c0_79] : memref<9x128xf32, #tpu.memory_space<vmem>>, vector<1x128xf32>
    %c2_80 = arith.constant 2 : index
    %c0_81 = arith.constant 0 : index
    %139 = vector.load %arg10[%c2_80, %c0_81] : memref<4x128xf32, #tpu.memory_space<vmem>>, vector<1x128xf32>
    tpu.vector_store %arg10[%c2_80, %c0_81], %138 {strides = array<i32>} : memref<4x128xf32, #tpu.memory_space<vmem>>, vector<1x128xf32>,
    %140 = arith.addf %129, %135 : vector<1x128xf32>
    %c4_i32_82 = arith.constant 4 : i32
    %141 = arith.muli %c1_i32_53, %c4_i32_82 : i32
    %c3_i32_83 = arith.constant 3 : i32
    %142 = arith.addi %141, %c3_i32_83 : i32
    %143 = arith.index_cast %142 : i32 to index
    %144 = memref.load %arg2[%143] : memref<32xi32, #tpu.memory_space<smem>>
    %145 = arith.index_cast %144 : i32 to index
    %c0_84 = arith.constant 0 : index
    %146 = vector.load %arg8[%145, %c0_84] : memref<9x128xf32, #tpu.memory_space<vmem>>, vector<1x128xf32>
    %c4_85 = arith.constant 4 : index
    %c128_86 = arith.constant 128 : index
    %147 = vector.load %arg9[%c4_85, %c128_86] : memref<5x256xf32, #tpu.memory_space<vmem>>, vector<1x128xf32>
    tpu.vector_store %arg9[%c4_85, %c128_86], %146 {strides = array<i32>} : memref<5x256xf32, #tpu.memory_space<vmem>>, vector<1x128xf32>,
    %148 = arith.index_cast %144 : i32 to index
    %c0_87 = arith.constant 0 : index
    %149 = vector.load %arg7[%148, %c0_87] : memref<9x128xf32, #tpu.memory_space<vmem>>, vector<1x128xf32>
    %c3_88 = arith.constant 3 : index
    %c0_89 = arith.constant 0 : index
    %150 = vector.load %arg10[%c3_88, %c0_89] : memref<4x128xf32, #tpu.memory_space<vmem>>, vector<1x128xf32>
    tpu.vector_store %arg10[%c3_88, %c0_89], %149 {strides = array<i32>} : memref<4x128xf32, #tpu.memory_space<vmem>>, vector<1x128xf32>,
    %151 = arith.addf %140, %146 : vector<1x128xf32>
    %c0_90 = arith.constant 0 : index
    %c128_91 = arith.constant 128 : index
    %152 = vector.load %arg9[%c0_90, %c128_91] : memref<5x256xf32, #tpu.memory_space<vmem>>, vector<1x128xf32>
    tpu.vector_store %arg9[%c0_90, %c128_91], %151 {strides = array<i32>} : memref<5x256xf32, #tpu.memory_space<vmem>>, vector<1x128xf32>,
    %c0_92 = arith.constant 0 : index
    %c0_93 = arith.constant 0 : index
    %153 = vector.load %arg9[%c0_92, %c0_93] : memref<5x256xf32, #tpu.memory_space<vmem>>, vector<5x256xf32>
    %c0_94 = arith.constant 0 : index
    %c0_95 = arith.constant 0 : index
    %154 = vector.load %arg4[%c0_94, %c0_95] : memref<256x512xf32, #tpu.memory_space<vmem>>, vector<256x512xf32>
    %cst_96 = arith.constant dense<0.000000e+00> : vector<5x512xf32>
    %155 = tpu.matmul %153, %154, %cst_96 {dimension_numbers = #tpu.dot_dimension_numbers<[1], [0], [0], [1], [0, 0, 1, 1], [], []>} : vector<5x256xf32>, vector<256x512xf32>, vector<5x512xf32> -> vector<5x512xf32>
    %156 = vector.extract_strided_slice %155 {offsets = [0, 0], sizes = [1, 384], strides = [1, 1]} : vector<5x512xf32> to vector<1x384xf32>
    %c0_97 = arith.constant 0 : index
    %c0_98 = arith.constant 0 : index
    %157 = vector.load %arg5[%c0_97, %c0_98] : memref<1x384xf32, #tpu.memory_space<vmem>>, vector<1x384xf32>
    %158 = arith.addf %156, %157 : vector<1x384xf32>
    %159 = vector.extract_strided_slice %155 {offsets = [1, 384], sizes = [4, 128], strides = [1, 1]} : vector<5x512xf32> to vector<4x128xf32>
    %c0_99 = arith.constant 0 : index
    %c0_100 = arith.constant 0 : index
    %160 = vector.load %arg6[%c0_99, %c0_100] : memref<1x128xf32, #tpu.memory_space<vmem>>, vector<1x128xf32>
    %161 = vector.broadcast %160 : vector<1x128xf32> to vector<4x128xf32>
    %162 = arith.addf %159, %161 : vector<4x128xf32>
    %163 = vector.extract_strided_slice %158 {offsets = [0, 0], sizes = [1, 128], strides = [1, 1]} : vector<1x384xf32> to vector<1x128xf32>
    %164 = arith.negf %163 : vector<1x128xf32>
    %165 = math.exp %164 : vector<1x128xf32>
    %cst_101 = arith.constant 1.000000e+00 : f32
    %166 = vector.broadcast %cst_101 : f32 to vector<1x128xf32>
    %167 = arith.addf %166, %165 : vector<1x128xf32>
    %168 = arith.divf %166, %167 : vector<1x128xf32>
    %169 = vector.extract_strided_slice %158 {offsets = [0, 128], sizes = [1, 128], strides = [1, 1]} : vector<1x384xf32> to vector<1x128xf32>
    %170 = arith.negf %169 : vector<1x128xf32>
    %171 = math.exp %170 : vector<1x128xf32>
    %cst_102 = arith.constant 1.000000e+00 : f32
    %172 = vector.broadcast %cst_102 : f32 to vector<1x128xf32>
    %173 = arith.addf %172, %171 : vector<1x128xf32>
    %174 = arith.divf %172, %173 : vector<1x128xf32>
    %175 = vector.extract_strided_slice %158 {offsets = [0, 256], sizes = [1, 128], strides = [1, 1]} : vector<1x384xf32> to vector<1x128xf32>
    %176 = math.tanh %175 : vector<1x128xf32>
    %177 = arith.negf %162 : vector<4x128xf32>
    %178 = math.exp %177 : vector<4x128xf32>
    %cst_103 = arith.constant 1.000000e+00 : f32
    %179 = vector.broadcast %cst_103 : f32 to vector<4x128xf32>
    %180 = arith.addf %179, %178 : vector<4x128xf32>
    %181 = arith.divf %179, %180 : vector<4x128xf32>
    %182 = arith.mulf %168, %176 : vector<1x128xf32>
    %c0_104 = arith.constant 0 : index
    %c0_105 = arith.constant 0 : index
    %183 = vector.load %arg10[%c0_104, %c0_105] : memref<4x128xf32, #tpu.memory_space<vmem>>, vector<4x128xf32>
    %184 = arith.mulf %181, %183 : vector<4x128xf32>
    %cst_106 = arith.constant dense<0.000000e+00> : vector<128xf32>
    %185 = vector.multi_reduction <add>, %184, %cst_106 [0] : vector<4x128xf32> to vector<128xf32>
    %186 = vector.shape_cast %185 : vector<128xf32> to vector<1x128xf32>
    %187 = arith.addf %182, %186 : vector<1x128xf32>
    %188 = math.tanh %187 : vector<1x128xf32>
    %189 = arith.mulf %174, %188 : vector<1x128xf32>
    %190 = arith.index_cast %101 : i32 to index
    %c0_107 = arith.constant 0 : index
    %191 = vector.load %arg7[%190, %c0_107] : memref<9x128xf32, #tpu.memory_space<vmem>>, vector<1x128xf32>
    tpu.vector_store %arg7[%190, %c0_107], %187 {strides = array<i32>} : memref<9x128xf32, #tpu.memory_space<vmem>>, vector<1x128xf32>,
    %192 = arith.index_cast %101 : i32 to index
    %c0_108 = arith.constant 0 : index
    %193 = vector.load %arg8[%192, %c0_108] : memref<9x128xf32, #tpu.memory_space<vmem>>, vector<1x128xf32>
    tpu.vector_store %arg8[%192, %c0_108], %189 {strides = array<i32>} : memref<9x128xf32, #tpu.memory_space<vmem>>, vector<1x128xf32>,
    %c2_i32_109 = arith.constant 2 : i32
    %194 = arith.index_cast %c2_i32_109 : i32 to index
    %195 = memref.load %arg1[%194] : memref<8xi32, #tpu.memory_space<smem>>
    %196 = arith.index_cast %195 : i32 to index
    %c0_110 = arith.constant 0 : index
    %197 = vector.load %arg3[%196, %c0_110] : memref<8x128xf32, #tpu.memory_space<vmem>>, vector<1x128xf32>
    %198 = vector.shape_cast %197 : vector<1x128xf32> to vector<1x128xf32>
    %199 = vector.broadcast %198 : vector<1x128xf32> to vector<5x128xf32>
    %c0_111 = arith.constant 0 : index
    %c0_112 = arith.constant 0 : index
    %200 = vector.load %arg9[%c0_111, %c0_112] : memref<5x256xf32, #tpu.memory_space<vmem>>, vector<5x128xf32>
    tpu.vector_store %arg9[%c0_111, %c0_112], %199 {strides = array<i32>} : memref<5x256xf32, #tpu.memory_space<vmem>>, vector<5x128xf32>,
    %cst_113 = arith.constant 0.000000e+00 : f32
    %201 = vector.broadcast %cst_113 : f32 to vector<1x128xf32>
    %c4_i32_114 = arith.constant 4 : i32
    %202 = arith.muli %c2_i32_109, %c4_i32_114 : i32
    %c0_i32_115 = arith.constant 0 : i32
    %203 = arith.addi %202, %c0_i32_115 : i32
    %204 = arith.index_cast %203 : i32 to index
    %205 = memref.load %arg2[%204] : memref<32xi32, #tpu.memory_space<smem>>
    %206 = arith.index_cast %205 : i32 to index
    %c0_116 = arith.constant 0 : index
    %207 = vector.load %arg8[%206, %c0_116] : memref<9x128xf32, #tpu.memory_space<vmem>>, vector<1x128xf32>
    %c1_117 = arith.constant 1 : index
    %c128_118 = arith.constant 128 : index
    %208 = vector.load %arg9[%c1_117, %c128_118] : memref<5x256xf32, #tpu.memory_space<vmem>>, vector<1x128xf32>
    tpu.vector_store %arg9[%c1_117, %c128_118], %207 {strides = array<i32>} : memref<5x256xf32, #tpu.memory_space<vmem>>, vector<1x128xf32>,
    %209 = arith.index_cast %205 : i32 to index
    %c0_119 = arith.constant 0 : index
    %210 = vector.load %arg7[%209, %c0_119] : memref<9x128xf32, #tpu.memory_space<vmem>>, vector<1x128xf32>
    %c0_120 = arith.constant 0 : index
    %c0_121 = arith.constant 0 : index
    %211 = vector.load %arg10[%c0_120, %c0_121] : memref<4x128xf32, #tpu.memory_space<vmem>>, vector<1x128xf32>
    tpu.vector_store %arg10[%c0_120, %c0_121], %210 {strides = array<i32>} : memref<4x128xf32, #tpu.memory_space<vmem>>, vector<1x128xf32>,
    %212 = arith.addf %201, %207 : vector<1x128xf32>
    %c4_i32_122 = arith.constant 4 : i32
    %213 = arith.muli %c2_i32_109, %c4_i32_122 : i32
    %c1_i32_123 = arith.constant 1 : i32
    %214 = arith.addi %213, %c1_i32_123 : i32
    %215 = arith.index_cast %214 : i32 to index
    %216 = memref.load %arg2[%215] : memref<32xi32, #tpu.memory_space<smem>>
    %217 = arith.index_cast %216 : i32 to index
    %c0_124 = arith.constant 0 : index
    %218 = vector.load %arg8[%217, %c0_124] : memref<9x128xf32, #tpu.memory_space<vmem>>, vector<1x128xf32>
    %c2_125 = arith.constant 2 : index
    %c128_126 = arith.constant 128 : index
    %219 = vector.load %arg9[%c2_125, %c128_126] : memref<5x256xf32, #tpu.memory_space<vmem>>, vector<1x128xf32>
    tpu.vector_store %arg9[%c2_125, %c128_126], %218 {strides = array<i32>} : memref<5x256xf32, #tpu.memory_space<vmem>>, vector<1x128xf32>,
    %220 = arith.index_cast %216 : i32 to index
    %c0_127 = arith.constant 0 : index
    %221 = vector.load %arg7[%220, %c0_127] : memref<9x128xf32, #tpu.memory_space<vmem>>, vector<1x128xf32>
    %c1_128 = arith.constant 1 : index
    %c0_129 = arith.constant 0 : index
    %222 = vector.load %arg10[%c1_128, %c0_129] : memref<4x128xf32, #tpu.memory_space<vmem>>, vector<1x128xf32>
    tpu.vector_store %arg10[%c1_128, %c0_129], %221 {strides = array<i32>} : memref<4x128xf32, #tpu.memory_space<vmem>>, vector<1x128xf32>,
    %223 = arith.addf %212, %218 : vector<1x128xf32>
    %c4_i32_130 = arith.constant 4 : i32
    %224 = arith.muli %c2_i32_109, %c4_i32_130 : i32
    %c2_i32_131 = arith.constant 2 : i32
    %225 = arith.addi %224, %c2_i32_131 : i32
    %226 = arith.index_cast %225 : i32 to index
    %227 = memref.load %arg2[%226] : memref<32xi32, #tpu.memory_space<smem>>
    %228 = arith.index_cast %227 : i32 to index
    %c0_132 = arith.constant 0 : index
    %229 = vector.load %arg8[%228, %c0_132] : memref<9x128xf32, #tpu.memory_space<vmem>>, vector<1x128xf32>
    %c3_133 = arith.constant 3 : index
    %c128_134 = arith.constant 128 : index
    %230 = vector.load %arg9[%c3_133, %c128_134] : memref<5x256xf32, #tpu.memory_space<vmem>>, vector<1x128xf32>
    tpu.vector_store %arg9[%c3_133, %c128_134], %229 {strides = array<i32>} : memref<5x256xf32, #tpu.memory_space<vmem>>, vector<1x128xf32>,
    %231 = arith.index_cast %227 : i32 to index
    %c0_135 = arith.constant 0 : index
    %232 = vector.load %arg7[%231, %c0_135] : memref<9x128xf32, #tpu.memory_space<vmem>>, vector<1x128xf32>
    %c2_136 = arith.constant 2 : index
    %c0_137 = arith.constant 0 : index
    %233 = vector.load %arg10[%c2_136, %c0_137] : memref<4x128xf32, #tpu.memory_space<vmem>>, vector<1x128xf32>
    tpu.vector_store %arg10[%c2_136, %c0_137], %232 {strides = array<i32>} : memref<4x128xf32, #tpu.memory_space<vmem>>, vector<1x128xf32>,
    %234 = arith.addf %223, %229 : vector<1x128xf32>
    %c4_i32_138 = arith.constant 4 : i32
    %235 = arith.muli %c2_i32_109, %c4_i32_138 : i32
    %c3_i32_139 = arith.constant 3 : i32
    %236 = arith.addi %235, %c3_i32_139 : i32
    %237 = arith.index_cast %236 : i32 to index
    %238 = memref.load %arg2[%237] : memref<32xi32, #tpu.memory_space<smem>>
    %239 = arith.index_cast %238 : i32 to index
    %c0_140 = arith.constant 0 : index
    %240 = vector.load %arg8[%239, %c0_140] : memref<9x128xf32, #tpu.memory_space<vmem>>, vector<1x128xf32>
    %c4_141 = arith.constant 4 : index
    %c128_142 = arith.constant 128 : index
    %241 = vector.load %arg9[%c4_141, %c128_142] : memref<5x256xf32, #tpu.memory_space<vmem>>, vector<1x128xf32>
    tpu.vector_store %arg9[%c4_141, %c128_142], %240 {strides = array<i32>} : memref<5x256xf32, #tpu.memory_space<vmem>>, vector<1x128xf32>,
    %242 = arith.index_cast %238 : i32 to index
    %c0_143 = arith.constant 0 : index
    %243 = vector.load %arg7[%242, %c0_143] : memref<9x128xf32, #tpu.memory_space<vmem>>, vector<1x128xf32>
    %c3_144 = arith.constant 3 : index
    %c0_145 = arith.constant 0 : index
    %244 = vector.load %arg10[%c3_144, %c0_145] : memref<4x128xf32, #tpu.memory_space<vmem>>, vector<1x128xf32>
    tpu.vector_store %arg10[%c3_144, %c0_145], %243 {strides = array<i32>} : memref<4x128xf32, #tpu.memory_space<vmem>>, vector<1x128xf32>,
    %245 = arith.addf %234, %240 : vector<1x128xf32>
    %c0_146 = arith.constant 0 : index
    %c128_147 = arith.constant 128 : index
    %246 = vector.load %arg9[%c0_146, %c128_147] : memref<5x256xf32, #tpu.memory_space<vmem>>, vector<1x128xf32>
    tpu.vector_store %arg9[%c0_146, %c128_147], %245 {strides = array<i32>} : memref<5x256xf32, #tpu.memory_space<vmem>>, vector<1x128xf32>,
    %c0_148 = arith.constant 0 : index
    %c0_149 = arith.constant 0 : index
    %247 = vector.load %arg9[%c0_148, %c0_149] : memref<5x256xf32, #tpu.memory_space<vmem>>, vector<5x256xf32>
    %c0_150 = arith.constant 0 : index
    %c0_151 = arith.constant 0 : index
    %248 = vector.load %arg4[%c0_150, %c0_151] : memref<256x512xf32, #tpu.memory_space<vmem>>, vector<256x512xf32>
    %cst_152 = arith.constant dense<0.000000e+00> : vector<5x512xf32>
    %249 = tpu.matmul %247, %248, %cst_152 {dimension_numbers = #tpu.dot_dimension_numbers<[1], [0], [0], [1], [0, 0, 1, 1], [], []>} : vector<5x256xf32>, vector<256x512xf32>, vector<5x512xf32> -> vector<5x512xf32>
    %250 = vector.extract_strided_slice %249 {offsets = [0, 0], sizes = [1, 384], strides = [1, 1]} : vector<5x512xf32> to vector<1x384xf32>
    %c0_153 = arith.constant 0 : index
    %c0_154 = arith.constant 0 : index
    %251 = vector.load %arg5[%c0_153, %c0_154] : memref<1x384xf32, #tpu.memory_space<vmem>>, vector<1x384xf32>
    %252 = arith.addf %250, %251 : vector<1x384xf32>
    %253 = vector.extract_strided_slice %249 {offsets = [1, 384], sizes = [4, 128], strides = [1, 1]} : vector<5x512xf32> to vector<4x128xf32>
    %c0_155 = arith.constant 0 : index
    %c0_156 = arith.constant 0 : index
    %254 = vector.load %arg6[%c0_155, %c0_156] : memref<1x128xf32, #tpu.memory_space<vmem>>, vector<1x128xf32>
    %255 = vector.broadcast %254 : vector<1x128xf32> to vector<4x128xf32>
    %256 = arith.addf %253, %255 : vector<4x128xf32>
    %257 = vector.extract_strided_slice %252 {offsets = [0, 0], sizes = [1, 128], strides = [1, 1]} : vector<1x384xf32> to vector<1x128xf32>
    %258 = arith.negf %257 : vector<1x128xf32>
    %259 = math.exp %258 : vector<1x128xf32>
    %cst_157 = arith.constant 1.000000e+00 : f32
    %260 = vector.broadcast %cst_157 : f32 to vector<1x128xf32>
    %261 = arith.addf %260, %259 : vector<1x128xf32>
    %262 = arith.divf %260, %261 : vector<1x128xf32>
    %263 = vector.extract_strided_slice %252 {offsets = [0, 128], sizes = [1, 128], strides = [1, 1]} : vector<1x384xf32> to vector<1x128xf32>
    %264 = arith.negf %263 : vector<1x128xf32>
    %265 = math.exp %264 : vector<1x128xf32>
    %cst_158 = arith.constant 1.000000e+00 : f32
    %266 = vector.broadcast %cst_158 : f32 to vector<1x128xf32>
    %267 = arith.addf %266, %265 : vector<1x128xf32>
    %268 = arith.divf %266, %267 : vector<1x128xf32>
    %269 = vector.extract_strided_slice %252 {offsets = [0, 256], sizes = [1, 128], strides = [1, 1]} : vector<1x384xf32> to vector<1x128xf32>
    %270 = math.tanh %269 : vector<1x128xf32>
    %271 = arith.negf %256 : vector<4x128xf32>
    %272 = math.exp %271 : vector<4x128xf32>
    %cst_159 = arith.constant 1.000000e+00 : f32
    %273 = vector.broadcast %cst_159 : f32 to vector<4x128xf32>
    %274 = arith.addf %273, %272 : vector<4x128xf32>
    %275 = arith.divf %273, %274 : vector<4x128xf32>
    %276 = arith.mulf %262, %270 : vector<1x128xf32>
    %c0_160 = arith.constant 0 : index
    %c0_161 = arith.constant 0 : index
    %277 = vector.load %arg10[%c0_160, %c0_161] : memref<4x128xf32, #tpu.memory_space<vmem>>, vector<4x128xf32>
    %278 = arith.mulf %275, %277 : vector<4x128xf32>
    %cst_162 = arith.constant dense<0.000000e+00> : vector<128xf32>
    %279 = vector.multi_reduction <add>, %278, %cst_162 [0] : vector<4x128xf32> to vector<128xf32>
    %280 = vector.shape_cast %279 : vector<128xf32> to vector<1x128xf32>
    %281 = arith.addf %276, %280 : vector<1x128xf32>
    %282 = math.tanh %281 : vector<1x128xf32>
    %283 = arith.mulf %268, %282 : vector<1x128xf32>
    %284 = arith.index_cast %195 : i32 to index
    %c0_163 = arith.constant 0 : index
    %285 = vector.load %arg7[%284, %c0_163] : memref<9x128xf32, #tpu.memory_space<vmem>>, vector<1x128xf32>
    tpu.vector_store %arg7[%284, %c0_163], %281 {strides = array<i32>} : memref<9x128xf32, #tpu.memory_space<vmem>>, vector<1x128xf32>,
    %286 = arith.index_cast %195 : i32 to index
    %c0_164 = arith.constant 0 : index
    %287 = vector.load %arg8[%286, %c0_164] : memref<9x128xf32, #tpu.memory_space<vmem>>, vector<1x128xf32>
    tpu.vector_store %arg8[%286, %c0_164], %283 {strides = array<i32>} : memref<9x128xf32, #tpu.memory_space<vmem>>, vector<1x128xf32>,
    %c3_i32_165 = arith.constant 3 : i32
    %288 = arith.index_cast %c3_i32_165 : i32 to index
    %289 = memref.load %arg1[%288] : memref<8xi32, #tpu.memory_space<smem>>
    %290 = arith.index_cast %289 : i32 to index
    %c0_166 = arith.constant 0 : index
    %291 = vector.load %arg3[%290, %c0_166] : memref<8x128xf32, #tpu.memory_space<vmem>>, vector<1x128xf32>
    %292 = vector.shape_cast %291 : vector<1x128xf32> to vector<1x128xf32>
    %293 = vector.broadcast %292 : vector<1x128xf32> to vector<5x128xf32>
    %c0_167 = arith.constant 0 : index
    %c0_168 = arith.constant 0 : index
    %294 = vector.load %arg9[%c0_167, %c0_168] : memref<5x256xf32, #tpu.memory_space<vmem>>, vector<5x128xf32>
    tpu.vector_store %arg9[%c0_167, %c0_168], %293 {strides = array<i32>} : memref<5x256xf32, #tpu.memory_space<vmem>>, vector<5x128xf32>,
    %cst_169 = arith.constant 0.000000e+00 : f32
    %295 = vector.broadcast %cst_169 : f32 to vector<1x128xf32>
    %c4_i32_170 = arith.constant 4 : i32
    %296 = arith.muli %c3_i32_165, %c4_i32_170 : i32
    %c0_i32_171 = arith.constant 0 : i32
    %297 = arith.addi %296, %c0_i32_171 : i32
    %298 = arith.index_cast %297 : i32 to index
    %299 = memref.load %arg2[%298] : memref<32xi32, #tpu.memory_space<smem>>
    %300 = arith.index_cast %299 : i32 to index
    %c0_172 = arith.constant 0 : index
    %301 = vector.load %arg8[%300, %c0_172] : memref<9x128xf32, #tpu.memory_space<vmem>>, vector<1x128xf32>
    %c1_173 = arith.constant 1 : index
    %c128_174 = arith.constant 128 : index
    %302 = vector.load %arg9[%c1_173, %c128_174] : memref<5x256xf32, #tpu.memory_space<vmem>>, vector<1x128xf32>
    tpu.vector_store %arg9[%c1_173, %c128_174], %301 {strides = array<i32>} : memref<5x256xf32, #tpu.memory_space<vmem>>, vector<1x128xf32>,
    %303 = arith.index_cast %299 : i32 to index
    %c0_175 = arith.constant 0 : index
    %304 = vector.load %arg7[%303, %c0_175] : memref<9x128xf32, #tpu.memory_space<vmem>>, vector<1x128xf32>
    %c0_176 = arith.constant 0 : index
    %c0_177 = arith.constant 0 : index
    %305 = vector.load %arg10[%c0_176, %c0_177] : memref<4x128xf32, #tpu.memory_space<vmem>>, vector<1x128xf32>
    tpu.vector_store %arg10[%c0_176, %c0_177], %304 {strides = array<i32>} : memref<4x128xf32, #tpu.memory_space<vmem>>, vector<1x128xf32>,
    %306 = arith.addf %295, %301 : vector<1x128xf32>
    %c4_i32_178 = arith.constant 4 : i32
    %307 = arith.muli %c3_i32_165, %c4_i32_178 : i32
    %c1_i32_179 = arith.constant 1 : i32
    %308 = arith.addi %307, %c1_i32_179 : i32
    %309 = arith.index_cast %308 : i32 to index
    %310 = memref.load %arg2[%309] : memref<32xi32, #tpu.memory_space<smem>>
    %311 = arith.index_cast %310 : i32 to index
    %c0_180 = arith.constant 0 : index
    %312 = vector.load %arg8[%311, %c0_180] : memref<9x128xf32, #tpu.memory_space<vmem>>, vector<1x128xf32>
    %c2_181 = arith.constant 2 : index
    %c128_182 = arith.constant 128 : index
    %313 = vector.load %arg9[%c2_181, %c128_182] : memref<5x256xf32, #tpu.memory_space<vmem>>, vector<1x128xf32>
    tpu.vector_store %arg9[%c2_181, %c128_182], %312 {strides = array<i32>} : memref<5x256xf32, #tpu.memory_space<vmem>>, vector<1x128xf32>,
    %314 = arith.index_cast %310 : i32 to index
    %c0_183 = arith.constant 0 : index
    %315 = vector.load %arg7[%314, %c0_183] : memref<9x128xf32, #tpu.memory_space<vmem>>, vector<1x128xf32>
    %c1_184 = arith.constant 1 : index
    %c0_185 = arith.constant 0 : index
    %316 = vector.load %arg10[%c1_184, %c0_185] : memref<4x128xf32, #tpu.memory_space<vmem>>, vector<1x128xf32>
    tpu.vector_store %arg10[%c1_184, %c0_185], %315 {strides = array<i32>} : memref<4x128xf32, #tpu.memory_space<vmem>>, vector<1x128xf32>,
    %317 = arith.addf %306, %312 : vector<1x128xf32>
    %c4_i32_186 = arith.constant 4 : i32
    %318 = arith.muli %c3_i32_165, %c4_i32_186 : i32
    %c2_i32_187 = arith.constant 2 : i32
    %319 = arith.addi %318, %c2_i32_187 : i32
    %320 = arith.index_cast %319 : i32 to index
    %321 = memref.load %arg2[%320] : memref<32xi32, #tpu.memory_space<smem>>
    %322 = arith.index_cast %321 : i32 to index
    %c0_188 = arith.constant 0 : index
    %323 = vector.load %arg8[%322, %c0_188] : memref<9x128xf32, #tpu.memory_space<vmem>>, vector<1x128xf32>
    %c3_189 = arith.constant 3 : index
    %c128_190 = arith.constant 128 : index
    %324 = vector.load %arg9[%c3_189, %c128_190] : memref<5x256xf32, #tpu.memory_space<vmem>>, vector<1x128xf32>
    tpu.vector_store %arg9[%c3_189, %c128_190], %323 {strides = array<i32>} : memref<5x256xf32, #tpu.memory_space<vmem>>, vector<1x128xf32>,
    %325 = arith.index_cast %321 : i32 to index
    %c0_191 = arith.constant 0 : index
    %326 = vector.load %arg7[%325, %c0_191] : memref<9x128xf32, #tpu.memory_space<vmem>>, vector<1x128xf32>
    %c2_192 = arith.constant 2 : index
    %c0_193 = arith.constant 0 : index
    %327 = vector.load %arg10[%c2_192, %c0_193] : memref<4x128xf32, #tpu.memory_space<vmem>>, vector<1x128xf32>
    tpu.vector_store %arg10[%c2_192, %c0_193], %326 {strides = array<i32>} : memref<4x128xf32, #tpu.memory_space<vmem>>, vector<1x128xf32>,
    %328 = arith.addf %317, %323 : vector<1x128xf32>
    %c4_i32_194 = arith.constant 4 : i32
    %329 = arith.muli %c3_i32_165, %c4_i32_194 : i32
    %c3_i32_195 = arith.constant 3 : i32
    %330 = arith.addi %329, %c3_i32_195 : i32
    %331 = arith.index_cast %330 : i32 to index
    %332 = memref.load %arg2[%331] : memref<32xi32, #tpu.memory_space<smem>>
    %333 = arith.index_cast %332 : i32 to index
    %c0_196 = arith.constant 0 : index
    %334 = vector.load %arg8[%333, %c0_196] : memref<9x128xf32, #tpu.memory_space<vmem>>, vector<1x128xf32>
    %c4_197 = arith.constant 4 : index
    %c128_198 = arith.constant 128 : index
    %335 = vector.load %arg9[%c4_197, %c128_198] : memref<5x256xf32, #tpu.memory_space<vmem>>, vector<1x128xf32>
    tpu.vector_store %arg9[%c4_197, %c128_198], %334 {strides = array<i32>} : memref<5x256xf32, #tpu.memory_space<vmem>>, vector<1x128xf32>,
    %336 = arith.index_cast %332 : i32 to index
    %c0_199 = arith.constant 0 : index
    %337 = vector.load %arg7[%336, %c0_199] : memref<9x128xf32, #tpu.memory_space<vmem>>, vector<1x128xf32>
    %c3_200 = arith.constant 3 : index
    %c0_201 = arith.constant 0 : index
    %338 = vector.load %arg10[%c3_200, %c0_201] : memref<4x128xf32, #tpu.memory_space<vmem>>, vector<1x128xf32>
    tpu.vector_store %arg10[%c3_200, %c0_201], %337 {strides = array<i32>} : memref<4x128xf32, #tpu.memory_space<vmem>>, vector<1x128xf32>,
    %339 = arith.addf %328, %334 : vector<1x128xf32>
    %c0_202 = arith.constant 0 : index
    %c128_203 = arith.constant 128 : index
    %340 = vector.load %arg9[%c0_202, %c128_203] : memref<5x256xf32, #tpu.memory_space<vmem>>, vector<1x128xf32>
    tpu.vector_store %arg9[%c0_202, %c128_203], %339 {strides = array<i32>} : memref<5x256xf32, #tpu.memory_space<vmem>>, vector<1x128xf32>,
    %c0_204 = arith.constant 0 : index
    %c0_205 = arith.constant 0 : index
    %341 = vector.load %arg9[%c0_204, %c0_205] : memref<5x256xf32, #tpu.memory_space<vmem>>, vector<5x256xf32>
    %c0_206 = arith.constant 0 : index
    %c0_207 = arith.constant 0 : index
    %342 = vector.load %arg4[%c0_206, %c0_207] : memref<256x512xf32, #tpu.memory_space<vmem>>, vector<256x512xf32>
    %cst_208 = arith.constant dense<0.000000e+00> : vector<5x512xf32>
    %343 = tpu.matmul %341, %342, %cst_208 {dimension_numbers = #tpu.dot_dimension_numbers<[1], [0], [0], [1], [0, 0, 1, 1], [], []>} : vector<5x256xf32>, vector<256x512xf32>, vector<5x512xf32> -> vector<5x512xf32>
    %344 = vector.extract_strided_slice %343 {offsets = [0, 0], sizes = [1, 384], strides = [1, 1]} : vector<5x512xf32> to vector<1x384xf32>
    %c0_209 = arith.constant 0 : index
    %c0_210 = arith.constant 0 : index
    %345 = vector.load %arg5[%c0_209, %c0_210] : memref<1x384xf32, #tpu.memory_space<vmem>>, vector<1x384xf32>
    %346 = arith.addf %344, %345 : vector<1x384xf32>
    %347 = vector.extract_strided_slice %343 {offsets = [1, 384], sizes = [4, 128], strides = [1, 1]} : vector<5x512xf32> to vector<4x128xf32>
    %c0_211 = arith.constant 0 : index
    %c0_212 = arith.constant 0 : index
    %348 = vector.load %arg6[%c0_211, %c0_212] : memref<1x128xf32, #tpu.memory_space<vmem>>, vector<1x128xf32>
    %349 = vector.broadcast %348 : vector<1x128xf32> to vector<4x128xf32>
    %350 = arith.addf %347, %349 : vector<4x128xf32>
    %351 = vector.extract_strided_slice %346 {offsets = [0, 0], sizes = [1, 128], strides = [1, 1]} : vector<1x384xf32> to vector<1x128xf32>
    %352 = arith.negf %351 : vector<1x128xf32>
    %353 = math.exp %352 : vector<1x128xf32>
    %cst_213 = arith.constant 1.000000e+00 : f32
    %354 = vector.broadcast %cst_213 : f32 to vector<1x128xf32>
    %355 = arith.addf %354, %353 : vector<1x128xf32>
    %356 = arith.divf %354, %355 : vector<1x128xf32>
    %357 = vector.extract_strided_slice %346 {offsets = [0, 128], sizes = [1, 128], strides = [1, 1]} : vector<1x384xf32> to vector<1x128xf32>
    %358 = arith.negf %357 : vector<1x128xf32>
    %359 = math.exp %358 : vector<1x128xf32>
    %cst_214 = arith.constant 1.000000e+00 : f32
    %360 = vector.broadcast %cst_214 : f32 to vector<1x128xf32>
    %361 = arith.addf %360, %359 : vector<1x128xf32>
    %362 = arith.divf %360, %361 : vector<1x128xf32>
    %363 = vector.extract_strided_slice %346 {offsets = [0, 256], sizes = [1, 128], strides = [1, 1]} : vector<1x384xf32> to vector<1x128xf32>
    %364 = math.tanh %363 : vector<1x128xf32>
    %365 = arith.negf %350 : vector<4x128xf32>
    %366 = math.exp %365 : vector<4x128xf32>
    %cst_215 = arith.constant 1.000000e+00 : f32
    %367 = vector.broadcast %cst_215 : f32 to vector<4x128xf32>
    %368 = arith.addf %367, %366 : vector<4x128xf32>
    %369 = arith.divf %367, %368 : vector<4x128xf32>
    %370 = arith.mulf %356, %364 : vector<1x128xf32>
    %c0_216 = arith.constant 0 : index
    %c0_217 = arith.constant 0 : index
    %371 = vector.load %arg10[%c0_216, %c0_217] : memref<4x128xf32, #tpu.memory_space<vmem>>, vector<4x128xf32>
    %372 = arith.mulf %369, %371 : vector<4x128xf32>
    %cst_218 = arith.constant dense<0.000000e+00> : vector<128xf32>
    %373 = vector.multi_reduction <add>, %372, %cst_218 [0] : vector<4x128xf32> to vector<128xf32>
    %374 = vector.shape_cast %373 : vector<128xf32> to vector<1x128xf32>
    %375 = arith.addf %370, %374 : vector<1x128xf32>
    %376 = math.tanh %375 : vector<1x128xf32>
    %377 = arith.mulf %362, %376 : vector<1x128xf32>
    %378 = arith.index_cast %289 : i32 to index
    %c0_219 = arith.constant 0 : index
    %379 = vector.load %arg7[%378, %c0_219] : memref<9x128xf32, #tpu.memory_space<vmem>>, vector<1x128xf32>
    tpu.vector_store %arg7[%378, %c0_219], %375 {strides = array<i32>} : memref<9x128xf32, #tpu.memory_space<vmem>>, vector<1x128xf32>,
    %380 = arith.index_cast %289 : i32 to index
    %c0_220 = arith.constant 0 : index
    %381 = vector.load %arg8[%380, %c0_220] : memref<9x128xf32, #tpu.memory_space<vmem>>, vector<1x128xf32>
    tpu.vector_store %arg8[%380, %c0_220], %377 {strides = array<i32>} : memref<9x128xf32, #tpu.memory_space<vmem>>, vector<1x128xf32>,
    %c4_i32_221 = arith.constant 4 : i32
    %382 = arith.index_cast %c4_i32_221 : i32 to index
    %383 = memref.load %arg1[%382] : memref<8xi32, #tpu.memory_space<smem>>
    %384 = arith.index_cast %383 : i32 to index
    %c0_222 = arith.constant 0 : index
    %385 = vector.load %arg3[%384, %c0_222] : memref<8x128xf32, #tpu.memory_space<vmem>>, vector<1x128xf32>
    %386 = vector.shape_cast %385 : vector<1x128xf32> to vector<1x128xf32>
    %387 = vector.broadcast %386 : vector<1x128xf32> to vector<5x128xf32>
    %c0_223 = arith.constant 0 : index
    %c0_224 = arith.constant 0 : index
    %388 = vector.load %arg9[%c0_223, %c0_224] : memref<5x256xf32, #tpu.memory_space<vmem>>, vector<5x128xf32>
    tpu.vector_store %arg9[%c0_223, %c0_224], %387 {strides = array<i32>} : memref<5x256xf32, #tpu.memory_space<vmem>>, vector<5x128xf32>,
    %cst_225 = arith.constant 0.000000e+00 : f32
    %389 = vector.broadcast %cst_225 : f32 to vector<1x128xf32>
    %c4_i32_226 = arith.constant 4 : i32
    %390 = arith.muli %c4_i32_221, %c4_i32_226 : i32
    %c0_i32_227 = arith.constant 0 : i32
    %391 = arith.addi %390, %c0_i32_227 : i32
    %392 = arith.index_cast %391 : i32 to index
    %393 = memref.load %arg2[%392] : memref<32xi32, #tpu.memory_space<smem>>
    %394 = arith.index_cast %393 : i32 to index
    %c0_228 = arith.constant 0 : index
    %395 = vector.load %arg8[%394, %c0_228] : memref<9x128xf32, #tpu.memory_space<vmem>>, vector<1x128xf32>
    %c1_229 = arith.constant 1 : index
    %c128_230 = arith.constant 128 : index
    %396 = vector.load %arg9[%c1_229, %c128_230] : memref<5x256xf32, #tpu.memory_space<vmem>>, vector<1x128xf32>
    tpu.vector_store %arg9[%c1_229, %c128_230], %395 {strides = array<i32>} : memref<5x256xf32, #tpu.memory_space<vmem>>, vector<1x128xf32>,
    %397 = arith.index_cast %393 : i32 to index
    %c0_231 = arith.constant 0 : index
    %398 = vector.load %arg7[%397, %c0_231] : memref<9x128xf32, #tpu.memory_space<vmem>>, vector<1x128xf32>
    %c0_232 = arith.constant 0 : index
    %c0_233 = arith.constant 0 : index
    %399 = vector.load %arg10[%c0_232, %c0_233] : memref<4x128xf32, #tpu.memory_space<vmem>>, vector<1x128xf32>
    tpu.vector_store %arg10[%c0_232, %c0_233], %398 {strides = array<i32>} : memref<4x128xf32, #tpu.memory_space<vmem>>, vector<1x128xf32>,
    %400 = arith.addf %389, %395 : vector<1x128xf32>
    %c4_i32_234 = arith.constant 4 : i32
    %401 = arith.muli %c4_i32_221, %c4_i32_234 : i32
    %c1_i32_235 = arith.constant 1 : i32
    %402 = arith.addi %401, %c1_i32_235 : i32
    %403 = arith.index_cast %402 : i32 to index
    %404 = memref.load %arg2[%403] : memref<32xi32, #tpu.memory_space<smem>>
    %405 = arith.index_cast %404 : i32 to index
    %c0_236 = arith.constant 0 : index
    %406 = vector.load %arg8[%405, %c0_236] : memref<9x128xf32, #tpu.memory_space<vmem>>, vector<1x128xf32>
    %c2_237 = arith.constant 2 : index
    %c128_238 = arith.constant 128 : index
    %407 = vector.load %arg9[%c2_237, %c128_238] : memref<5x256xf32, #tpu.memory_space<vmem>>, vector<1x128xf32>
    tpu.vector_store %arg9[%c2_237, %c128_238], %406 {strides = array<i32>} : memref<5x256xf32, #tpu.memory_space<vmem>>, vector<1x128xf32>,
    %408 = arith.index_cast %404 : i32 to index
    %c0_239 = arith.constant 0 : index
    %409 = vector.load %arg7[%408, %c0_239] : memref<9x128xf32, #tpu.memory_space<vmem>>, vector<1x128xf32>
    %c1_240 = arith.constant 1 : index
    %c0_241 = arith.constant 0 : index
    %410 = vector.load %arg10[%c1_240, %c0_241] : memref<4x128xf32, #tpu.memory_space<vmem>>, vector<1x128xf32>
    tpu.vector_store %arg10[%c1_240, %c0_241], %409 {strides = array<i32>} : memref<4x128xf32, #tpu.memory_space<vmem>>, vector<1x128xf32>,
    %411 = arith.addf %400, %406 : vector<1x128xf32>
    %c4_i32_242 = arith.constant 4 : i32
    %412 = arith.muli %c4_i32_221, %c4_i32_242 : i32
    %c2_i32_243 = arith.constant 2 : i32
    %413 = arith.addi %412, %c2_i32_243 : i32
    %414 = arith.index_cast %413 : i32 to index
    %415 = memref.load %arg2[%414] : memref<32xi32, #tpu.memory_space<smem>>
    %416 = arith.index_cast %415 : i32 to index
    %c0_244 = arith.constant 0 : index
    %417 = vector.load %arg8[%416, %c0_244] : memref<9x128xf32, #tpu.memory_space<vmem>>, vector<1x128xf32>
    %c3_245 = arith.constant 3 : index
    %c128_246 = arith.constant 128 : index
    %418 = vector.load %arg9[%c3_245, %c128_246] : memref<5x256xf32, #tpu.memory_space<vmem>>, vector<1x128xf32>
    tpu.vector_store %arg9[%c3_245, %c128_246], %417 {strides = array<i32>} : memref<5x256xf32, #tpu.memory_space<vmem>>, vector<1x128xf32>,
    %419 = arith.index_cast %415 : i32 to index
    %c0_247 = arith.constant 0 : index
    %420 = vector.load %arg7[%419, %c0_247] : memref<9x128xf32, #tpu.memory_space<vmem>>, vector<1x128xf32>
    %c2_248 = arith.constant 2 : index
    %c0_249 = arith.constant 0 : index
    %421 = vector.load %arg10[%c2_248, %c0_249] : memref<4x128xf32, #tpu.memory_space<vmem>>, vector<1x128xf32>
    tpu.vector_store %arg10[%c2_248, %c0_249], %420 {strides = array<i32>} : memref<4x128xf32, #tpu.memory_space<vmem>>, vector<1x128xf32>,
    %422 = arith.addf %411, %417 : vector<1x128xf32>
    %c4_i32_250 = arith.constant 4 : i32
    %423 = arith.muli %c4_i32_221, %c4_i32_250 : i32
    %c3_i32_251 = arith.constant 3 : i32
    %424 = arith.addi %423, %c3_i32_251 : i32
    %425 = arith.index_cast %424 : i32 to index
    %426 = memref.load %arg2[%425] : memref<32xi32, #tpu.memory_space<smem>>
    %427 = arith.index_cast %426 : i32 to index
    %c0_252 = arith.constant 0 : index
    %428 = vector.load %arg8[%427, %c0_252] : memref<9x128xf32, #tpu.memory_space<vmem>>, vector<1x128xf32>
    %c4_253 = arith.constant 4 : index
    %c128_254 = arith.constant 128 : index
    %429 = vector.load %arg9[%c4_253, %c128_254] : memref<5x256xf32, #tpu.memory_space<vmem>>, vector<1x128xf32>
    tpu.vector_store %arg9[%c4_253, %c128_254], %428 {strides = array<i32>} : memref<5x256xf32, #tpu.memory_space<vmem>>, vector<1x128xf32>,
    %430 = arith.index_cast %426 : i32 to index
    %c0_255 = arith.constant 0 : index
    %431 = vector.load %arg7[%430, %c0_255] : memref<9x128xf32, #tpu.memory_space<vmem>>, vector<1x128xf32>
    %c3_256 = arith.constant 3 : index
    %c0_257 = arith.constant 0 : index
    %432 = vector.load %arg10[%c3_256, %c0_257] : memref<4x128xf32, #tpu.memory_space<vmem>>, vector<1x128xf32>
    tpu.vector_store %arg10[%c3_256, %c0_257], %431 {strides = array<i32>} : memref<4x128xf32, #tpu.memory_space<vmem>>, vector<1x128xf32>,
    %433 = arith.addf %422, %428 : vector<1x128xf32>
    %c0_258 = arith.constant 0 : index
    %c128_259 = arith.constant 128 : index
    %434 = vector.load %arg9[%c0_258, %c128_259] : memref<5x256xf32, #tpu.memory_space<vmem>>, vector<1x128xf32>
    tpu.vector_store %arg9[%c0_258, %c128_259], %433 {strides = array<i32>} : memref<5x256xf32, #tpu.memory_space<vmem>>, vector<1x128xf32>,
    %c0_260 = arith.constant 0 : index
    %c0_261 = arith.constant 0 : index
    %435 = vector.load %arg9[%c0_260, %c0_261] : memref<5x256xf32, #tpu.memory_space<vmem>>, vector<5x256xf32>
    %c0_262 = arith.constant 0 : index
    %c0_263 = arith.constant 0 : index
    %436 = vector.load %arg4[%c0_262, %c0_263] : memref<256x512xf32, #tpu.memory_space<vmem>>, vector<256x512xf32>
    %cst_264 = arith.constant dense<0.000000e+00> : vector<5x512xf32>
    %437 = tpu.matmul %435, %436, %cst_264 {dimension_numbers = #tpu.dot_dimension_numbers<[1], [0], [0], [1], [0, 0, 1, 1], [], []>} : vector<5x256xf32>, vector<256x512xf32>, vector<5x512xf32> -> vector<5x512xf32>
    %438 = vector.extract_strided_slice %437 {offsets = [0, 0], sizes = [1, 384], strides = [1, 1]} : vector<5x512xf32> to vector<1x384xf32>
    %c0_265 = arith.constant 0 : index
    %c0_266 = arith.constant 0 : index
    %439 = vector.load %arg5[%c0_265, %c0_266] : memref<1x384xf32, #tpu.memory_space<vmem>>, vector<1x384xf32>
    %440 = arith.addf %438, %439 : vector<1x384xf32>
    %441 = vector.extract_strided_slice %437 {offsets = [1, 384], sizes = [4, 128], strides = [1, 1]} : vector<5x512xf32> to vector<4x128xf32>
    %c0_267 = arith.constant 0 : index
    %c0_268 = arith.constant 0 : index
    %442 = vector.load %arg6[%c0_267, %c0_268] : memref<1x128xf32, #tpu.memory_space<vmem>>, vector<1x128xf32>
    %443 = vector.broadcast %442 : vector<1x128xf32> to vector<4x128xf32>
    %444 = arith.addf %441, %443 : vector<4x128xf32>
    %445 = vector.extract_strided_slice %440 {offsets = [0, 0], sizes = [1, 128], strides = [1, 1]} : vector<1x384xf32> to vector<1x128xf32>
    %446 = arith.negf %445 : vector<1x128xf32>
    %447 = math.exp %446 : vector<1x128xf32>
    %cst_269 = arith.constant 1.000000e+00 : f32
    %448 = vector.broadcast %cst_269 : f32 to vector<1x128xf32>
    %449 = arith.addf %448, %447 : vector<1x128xf32>
    %450 = arith.divf %448, %449 : vector<1x128xf32>
    %451 = vector.extract_strided_slice %440 {offsets = [0, 128], sizes = [1, 128], strides = [1, 1]} : vector<1x384xf32> to vector<1x128xf32>
    %452 = arith.negf %451 : vector<1x128xf32>
    %453 = math.exp %452 : vector<1x128xf32>
    %cst_270 = arith.constant 1.000000e+00 : f32
    %454 = vector.broadcast %cst_270 : f32 to vector<1x128xf32>
    %455 = arith.addf %454, %453 : vector<1x128xf32>
    %456 = arith.divf %454, %455 : vector<1x128xf32>
    %457 = vector.extract_strided_slice %440 {offsets = [0, 256], sizes = [1, 128], strides = [1, 1]} : vector<1x384xf32> to vector<1x128xf32>
    %458 = math.tanh %457 : vector<1x128xf32>
    %459 = arith.negf %444 : vector<4x128xf32>
    %460 = math.exp %459 : vector<4x128xf32>
    %cst_271 = arith.constant 1.000000e+00 : f32
    %461 = vector.broadcast %cst_271 : f32 to vector<4x128xf32>
    %462 = arith.addf %461, %460 : vector<4x128xf32>
    %463 = arith.divf %461, %462 : vector<4x128xf32>
    %464 = arith.mulf %450, %458 : vector<1x128xf32>
    %c0_272 = arith.constant 0 : index
    %c0_273 = arith.constant 0 : index
    %465 = vector.load %arg10[%c0_272, %c0_273] : memref<4x128xf32, #tpu.memory_space<vmem>>, vector<4x128xf32>
    %466 = arith.mulf %463, %465 : vector<4x128xf32>
    %cst_274 = arith.constant dense<0.000000e+00> : vector<128xf32>
    %467 = vector.multi_reduction <add>, %466, %cst_274 [0] : vector<4x128xf32> to vector<128xf32>
    %468 = vector.shape_cast %467 : vector<128xf32> to vector<1x128xf32>
    %469 = arith.addf %464, %468 : vector<1x128xf32>
    %470 = math.tanh %469 : vector<1x128xf32>
    %471 = arith.mulf %456, %470 : vector<1x128xf32>
    %472 = arith.index_cast %383 : i32 to index
    %c0_275 = arith.constant 0 : index
    %473 = vector.load %arg7[%472, %c0_275] : memref<9x128xf32, #tpu.memory_space<vmem>>, vector<1x128xf32>
    tpu.vector_store %arg7[%472, %c0_275], %469 {strides = array<i32>} : memref<9x128xf32, #tpu.memory_space<vmem>>, vector<1x128xf32>,
    %474 = arith.index_cast %383 : i32 to index
    %c0_276 = arith.constant 0 : index
    %475 = vector.load %arg8[%474, %c0_276] : memref<9x128xf32, #tpu.memory_space<vmem>>, vector<1x128xf32>
    tpu.vector_store %arg8[%474, %c0_276], %471 {strides = array<i32>} : memref<9x128xf32, #tpu.memory_space<vmem>>, vector<1x128xf32>,
    %c5_i32 = arith.constant 5 : i32
    %476 = arith.index_cast %c5_i32 : i32 to index
    %477 = memref.load %arg1[%476] : memref<8xi32, #tpu.memory_space<smem>>
    %478 = arith.index_cast %477 : i32 to index
    %c0_277 = arith.constant 0 : index
    %479 = vector.load %arg3[%478, %c0_277] : memref<8x128xf32, #tpu.memory_space<vmem>>, vector<1x128xf32>
    %480 = vector.shape_cast %479 : vector<1x128xf32> to vector<1x128xf32>
    %481 = vector.broadcast %480 : vector<1x128xf32> to vector<5x128xf32>
    %c0_278 = arith.constant 0 : index
    %c0_279 = arith.constant 0 : index
    %482 = vector.load %arg9[%c0_278, %c0_279] : memref<5x256xf32, #tpu.memory_space<vmem>>, vector<5x128xf32>
    tpu.vector_store %arg9[%c0_278, %c0_279], %481 {strides = array<i32>} : memref<5x256xf32, #tpu.memory_space<vmem>>, vector<5x128xf32>,
    %cst_280 = arith.constant 0.000000e+00 : f32
    %483 = vector.broadcast %cst_280 : f32 to vector<1x128xf32>
    %c4_i32_281 = arith.constant 4 : i32
    %484 = arith.muli %c5_i32, %c4_i32_281 : i32
    %c0_i32_282 = arith.constant 0 : i32
    %485 = arith.addi %484, %c0_i32_282 : i32
    %486 = arith.index_cast %485 : i32 to index
    %487 = memref.load %arg2[%486] : memref<32xi32, #tpu.memory_space<smem>>
    %488 = arith.index_cast %487 : i32 to index
    %c0_283 = arith.constant 0 : index
    %489 = vector.load %arg8[%488, %c0_283] : memref<9x128xf32, #tpu.memory_space<vmem>>, vector<1x128xf32>
    %c1_284 = arith.constant 1 : index
    %c128_285 = arith.constant 128 : index
    %490 = vector.load %arg9[%c1_284, %c128_285] : memref<5x256xf32, #tpu.memory_space<vmem>>, vector<1x128xf32>
    tpu.vector_store %arg9[%c1_284, %c128_285], %489 {strides = array<i32>} : memref<5x256xf32, #tpu.memory_space<vmem>>, vector<1x128xf32>,
    %491 = arith.index_cast %487 : i32 to index
    %c0_286 = arith.constant 0 : index
    %492 = vector.load %arg7[%491, %c0_286] : memref<9x128xf32, #tpu.memory_space<vmem>>, vector<1x128xf32>
    %c0_287 = arith.constant 0 : index
    %c0_288 = arith.constant 0 : index
    %493 = vector.load %arg10[%c0_287, %c0_288] : memref<4x128xf32, #tpu.memory_space<vmem>>, vector<1x128xf32>
    tpu.vector_store %arg10[%c0_287, %c0_288], %492 {strides = array<i32>} : memref<4x128xf32, #tpu.memory_space<vmem>>, vector<1x128xf32>,
    %494 = arith.addf %483, %489 : vector<1x128xf32>
    %c4_i32_289 = arith.constant 4 : i32
    %495 = arith.muli %c5_i32, %c4_i32_289 : i32
    %c1_i32_290 = arith.constant 1 : i32
    %496 = arith.addi %495, %c1_i32_290 : i32
    %497 = arith.index_cast %496 : i32 to index
    %498 = memref.load %arg2[%497] : memref<32xi32, #tpu.memory_space<smem>>
    %499 = arith.index_cast %498 : i32 to index
    %c0_291 = arith.constant 0 : index
    %500 = vector.load %arg8[%499, %c0_291] : memref<9x128xf32, #tpu.memory_space<vmem>>, vector<1x128xf32>
    %c2_292 = arith.constant 2 : index
    %c128_293 = arith.constant 128 : index
    %501 = vector.load %arg9[%c2_292, %c128_293] : memref<5x256xf32, #tpu.memory_space<vmem>>, vector<1x128xf32>
    tpu.vector_store %arg9[%c2_292, %c128_293], %500 {strides = array<i32>} : memref<5x256xf32, #tpu.memory_space<vmem>>, vector<1x128xf32>,
    %502 = arith.index_cast %498 : i32 to index
    %c0_294 = arith.constant 0 : index
    %503 = vector.load %arg7[%502, %c0_294] : memref<9x128xf32, #tpu.memory_space<vmem>>, vector<1x128xf32>
    %c1_295 = arith.constant 1 : index
    %c0_296 = arith.constant 0 : index
    %504 = vector.load %arg10[%c1_295, %c0_296] : memref<4x128xf32, #tpu.memory_space<vmem>>, vector<1x128xf32>
    tpu.vector_store %arg10[%c1_295, %c0_296], %503 {strides = array<i32>} : memref<4x128xf32, #tpu.memory_space<vmem>>, vector<1x128xf32>,
    %505 = arith.addf %494, %500 : vector<1x128xf32>
    %c4_i32_297 = arith.constant 4 : i32
    %506 = arith.muli %c5_i32, %c4_i32_297 : i32
    %c2_i32_298 = arith.constant 2 : i32
    %507 = arith.addi %506, %c2_i32_298 : i32
    %508 = arith.index_cast %507 : i32 to index
    %509 = memref.load %arg2[%508] : memref<32xi32, #tpu.memory_space<smem>>
    %510 = arith.index_cast %509 : i32 to index
    %c0_299 = arith.constant 0 : index
    %511 = vector.load %arg8[%510, %c0_299] : memref<9x128xf32, #tpu.memory_space<vmem>>, vector<1x128xf32>
    %c3_300 = arith.constant 3 : index
    %c128_301 = arith.constant 128 : index
    %512 = vector.load %arg9[%c3_300, %c128_301] : memref<5x256xf32, #tpu.memory_space<vmem>>, vector<1x128xf32>
    tpu.vector_store %arg9[%c3_300, %c128_301], %511 {strides = array<i32>} : memref<5x256xf32, #tpu.memory_space<vmem>>, vector<1x128xf32>,
    %513 = arith.index_cast %509 : i32 to index
    %c0_302 = arith.constant 0 : index
    %514 = vector.load %arg7[%513, %c0_302] : memref<9x128xf32, #tpu.memory_space<vmem>>, vector<1x128xf32>
    %c2_303 = arith.constant 2 : index
    %c0_304 = arith.constant 0 : index
    %515 = vector.load %arg10[%c2_303, %c0_304] : memref<4x128xf32, #tpu.memory_space<vmem>>, vector<1x128xf32>
    tpu.vector_store %arg10[%c2_303, %c0_304], %514 {strides = array<i32>} : memref<4x128xf32, #tpu.memory_space<vmem>>, vector<1x128xf32>,
    %516 = arith.addf %505, %511 : vector<1x128xf32>
    %c4_i32_305 = arith.constant 4 : i32
    %517 = arith.muli %c5_i32, %c4_i32_305 : i32
    %c3_i32_306 = arith.constant 3 : i32
    %518 = arith.addi %517, %c3_i32_306 : i32
    %519 = arith.index_cast %518 : i32 to index
    %520 = memref.load %arg2[%519] : memref<32xi32, #tpu.memory_space<smem>>
    %521 = arith.index_cast %520 : i32 to index
    %c0_307 = arith.constant 0 : index
    %522 = vector.load %arg8[%521, %c0_307] : memref<9x128xf32, #tpu.memory_space<vmem>>, vector<1x128xf32>
    %c4_308 = arith.constant 4 : index
    %c128_309 = arith.constant 128 : index
    %523 = vector.load %arg9[%c4_308, %c128_309] : memref<5x256xf32, #tpu.memory_space<vmem>>, vector<1x128xf32>
    tpu.vector_store %arg9[%c4_308, %c128_309], %522 {strides = array<i32>} : memref<5x256xf32, #tpu.memory_space<vmem>>, vector<1x128xf32>,
    %524 = arith.index_cast %520 : i32 to index
    %c0_310 = arith.constant 0 : index
    %525 = vector.load %arg7[%524, %c0_310] : memref<9x128xf32, #tpu.memory_space<vmem>>, vector<1x128xf32>
    %c3_311 = arith.constant 3 : index
    %c0_312 = arith.constant 0 : index
    %526 = vector.load %arg10[%c3_311, %c0_312] : memref<4x128xf32, #tpu.memory_space<vmem>>, vector<1x128xf32>
    tpu.vector_store %arg10[%c3_311, %c0_312], %525 {strides = array<i32>} : memref<4x128xf32, #tpu.memory_space<vmem>>, vector<1x128xf32>,
    %527 = arith.addf %516, %522 : vector<1x128xf32>
    %c0_313 = arith.constant 0 : index
    %c128_314 = arith.constant 128 : index
    %528 = vector.load %arg9[%c0_313, %c128_314] : memref<5x256xf32, #tpu.memory_space<vmem>>, vector<1x128xf32>
    tpu.vector_store %arg9[%c0_313, %c128_314], %527 {strides = array<i32>} : memref<5x256xf32, #tpu.memory_space<vmem>>, vector<1x128xf32>,
    %c0_315 = arith.constant 0 : index
    %c0_316 = arith.constant 0 : index
    %529 = vector.load %arg9[%c0_315, %c0_316] : memref<5x256xf32, #tpu.memory_space<vmem>>, vector<5x256xf32>
    %c0_317 = arith.constant 0 : index
    %c0_318 = arith.constant 0 : index
    %530 = vector.load %arg4[%c0_317, %c0_318] : memref<256x512xf32, #tpu.memory_space<vmem>>, vector<256x512xf32>
    %cst_319 = arith.constant dense<0.000000e+00> : vector<5x512xf32>
    %531 = tpu.matmul %529, %530, %cst_319 {dimension_numbers = #tpu.dot_dimension_numbers<[1], [0], [0], [1], [0, 0, 1, 1], [], []>} : vector<5x256xf32>, vector<256x512xf32>, vector<5x512xf32> -> vector<5x512xf32>
    %532 = vector.extract_strided_slice %531 {offsets = [0, 0], sizes = [1, 384], strides = [1, 1]} : vector<5x512xf32> to vector<1x384xf32>
    %c0_320 = arith.constant 0 : index
    %c0_321 = arith.constant 0 : index
    %533 = vector.load %arg5[%c0_320, %c0_321] : memref<1x384xf32, #tpu.memory_space<vmem>>, vector<1x384xf32>
    %534 = arith.addf %532, %533 : vector<1x384xf32>
    %535 = vector.extract_strided_slice %531 {offsets = [1, 384], sizes = [4, 128], strides = [1, 1]} : vector<5x512xf32> to vector<4x128xf32>
    %c0_322 = arith.constant 0 : index
    %c0_323 = arith.constant 0 : index
    %536 = vector.load %arg6[%c0_322, %c0_323] : memref<1x128xf32, #tpu.memory_space<vmem>>, vector<1x128xf32>
    %537 = vector.broadcast %536 : vector<1x128xf32> to vector<4x128xf32>
    %538 = arith.addf %535, %537 : vector<4x128xf32>
    %539 = vector.extract_strided_slice %534 {offsets = [0, 0], sizes = [1, 128], strides = [1, 1]} : vector<1x384xf32> to vector<1x128xf32>
    %540 = arith.negf %539 : vector<1x128xf32>
    %541 = math.exp %540 : vector<1x128xf32>
    %cst_324 = arith.constant 1.000000e+00 : f32
    %542 = vector.broadcast %cst_324 : f32 to vector<1x128xf32>
    %543 = arith.addf %542, %541 : vector<1x128xf32>
    %544 = arith.divf %542, %543 : vector<1x128xf32>
    %545 = vector.extract_strided_slice %534 {offsets = [0, 128], sizes = [1, 128], strides = [1, 1]} : vector<1x384xf32> to vector<1x128xf32>
    %546 = arith.negf %545 : vector<1x128xf32>
    %547 = math.exp %546 : vector<1x128xf32>
    %cst_325 = arith.constant 1.000000e+00 : f32
    %548 = vector.broadcast %cst_325 : f32 to vector<1x128xf32>
    %549 = arith.addf %548, %547 : vector<1x128xf32>
    %550 = arith.divf %548, %549 : vector<1x128xf32>
    %551 = vector.extract_strided_slice %534 {offsets = [0, 256], sizes = [1, 128], strides = [1, 1]} : vector<1x384xf32> to vector<1x128xf32>
    %552 = math.tanh %551 : vector<1x128xf32>
    %553 = arith.negf %538 : vector<4x128xf32>
    %554 = math.exp %553 : vector<4x128xf32>
    %cst_326 = arith.constant 1.000000e+00 : f32
    %555 = vector.broadcast %cst_326 : f32 to vector<4x128xf32>
    %556 = arith.addf %555, %554 : vector<4x128xf32>
    %557 = arith.divf %555, %556 : vector<4x128xf32>
    %558 = arith.mulf %544, %552 : vector<1x128xf32>
    %c0_327 = arith.constant 0 : index
    %c0_328 = arith.constant 0 : index
    %559 = vector.load %arg10[%c0_327, %c0_328] : memref<4x128xf32, #tpu.memory_space<vmem>>, vector<4x128xf32>
    %560 = arith.mulf %557, %559 : vector<4x128xf32>
    %cst_329 = arith.constant dense<0.000000e+00> : vector<128xf32>
    %561 = vector.multi_reduction <add>, %560, %cst_329 [0] : vector<4x128xf32> to vector<128xf32>
    %562 = vector.shape_cast %561 : vector<128xf32> to vector<1x128xf32>
    %563 = arith.addf %558, %562 : vector<1x128xf32>
    %564 = math.tanh %563 : vector<1x128xf32>
    %565 = arith.mulf %550, %564 : vector<1x128xf32>
    %566 = arith.index_cast %477 : i32 to index
    %c0_330 = arith.constant 0 : index
    %567 = vector.load %arg7[%566, %c0_330] : memref<9x128xf32, #tpu.memory_space<vmem>>, vector<1x128xf32>
    tpu.vector_store %arg7[%566, %c0_330], %563 {strides = array<i32>} : memref<9x128xf32, #tpu.memory_space<vmem>>, vector<1x128xf32>,
    %568 = arith.index_cast %477 : i32 to index
    %c0_331 = arith.constant 0 : index
    %569 = vector.load %arg8[%568, %c0_331] : memref<9x128xf32, #tpu.memory_space<vmem>>, vector<1x128xf32>
    tpu.vector_store %arg8[%568, %c0_331], %565 {strides = array<i32>} : memref<9x128xf32, #tpu.memory_space<vmem>>, vector<1x128xf32>,
    %c6_i32 = arith.constant 6 : i32
    %570 = arith.index_cast %c6_i32 : i32 to index
    %571 = memref.load %arg1[%570] : memref<8xi32, #tpu.memory_space<smem>>
    %572 = arith.index_cast %571 : i32 to index
    %c0_332 = arith.constant 0 : index
    %573 = vector.load %arg3[%572, %c0_332] : memref<8x128xf32, #tpu.memory_space<vmem>>, vector<1x128xf32>
    %574 = vector.shape_cast %573 : vector<1x128xf32> to vector<1x128xf32>
    %575 = vector.broadcast %574 : vector<1x128xf32> to vector<5x128xf32>
    %c0_333 = arith.constant 0 : index
    %c0_334 = arith.constant 0 : index
    %576 = vector.load %arg9[%c0_333, %c0_334] : memref<5x256xf32, #tpu.memory_space<vmem>>, vector<5x128xf32>
    tpu.vector_store %arg9[%c0_333, %c0_334], %575 {strides = array<i32>} : memref<5x256xf32, #tpu.memory_space<vmem>>, vector<5x128xf32>,
    %cst_335 = arith.constant 0.000000e+00 : f32
    %577 = vector.broadcast %cst_335 : f32 to vector<1x128xf32>
    %c4_i32_336 = arith.constant 4 : i32
    %578 = arith.muli %c6_i32, %c4_i32_336 : i32
    %c0_i32_337 = arith.constant 0 : i32
    %579 = arith.addi %578, %c0_i32_337 : i32
    %580 = arith.index_cast %579 : i32 to index
    %581 = memref.load %arg2[%580] : memref<32xi32, #tpu.memory_space<smem>>
    %582 = arith.index_cast %581 : i32 to index
    %c0_338 = arith.constant 0 : index
    %583 = vector.load %arg8[%582, %c0_338] : memref<9x128xf32, #tpu.memory_space<vmem>>, vector<1x128xf32>
    %c1_339 = arith.constant 1 : index
    %c128_340 = arith.constant 128 : index
    %584 = vector.load %arg9[%c1_339, %c128_340] : memref<5x256xf32, #tpu.memory_space<vmem>>, vector<1x128xf32>
    tpu.vector_store %arg9[%c1_339, %c128_340], %583 {strides = array<i32>} : memref<5x256xf32, #tpu.memory_space<vmem>>, vector<1x128xf32>,
    %585 = arith.index_cast %581 : i32 to index
    %c0_341 = arith.constant 0 : index
    %586 = vector.load %arg7[%585, %c0_341] : memref<9x128xf32, #tpu.memory_space<vmem>>, vector<1x128xf32>
    %c0_342 = arith.constant 0 : index
    %c0_343 = arith.constant 0 : index
    %587 = vector.load %arg10[%c0_342, %c0_343] : memref<4x128xf32, #tpu.memory_space<vmem>>, vector<1x128xf32>
    tpu.vector_store %arg10[%c0_342, %c0_343], %586 {strides = array<i32>} : memref<4x128xf32, #tpu.memory_space<vmem>>, vector<1x128xf32>,
    %588 = arith.addf %577, %583 : vector<1x128xf32>
    %c4_i32_344 = arith.constant 4 : i32
    %589 = arith.muli %c6_i32, %c4_i32_344 : i32
    %c1_i32_345 = arith.constant 1 : i32
    %590 = arith.addi %589, %c1_i32_345 : i32
    %591 = arith.index_cast %590 : i32 to index
    %592 = memref.load %arg2[%591] : memref<32xi32, #tpu.memory_space<smem>>
    %593 = arith.index_cast %592 : i32 to index
    %c0_346 = arith.constant 0 : index
    %594 = vector.load %arg8[%593, %c0_346] : memref<9x128xf32, #tpu.memory_space<vmem>>, vector<1x128xf32>
    %c2_347 = arith.constant 2 : index
    %c128_348 = arith.constant 128 : index
    %595 = vector.load %arg9[%c2_347, %c128_348] : memref<5x256xf32, #tpu.memory_space<vmem>>, vector<1x128xf32>
    tpu.vector_store %arg9[%c2_347, %c128_348], %594 {strides = array<i32>} : memref<5x256xf32, #tpu.memory_space<vmem>>, vector<1x128xf32>,
    %596 = arith.index_cast %592 : i32 to index
    %c0_349 = arith.constant 0 : index
    %597 = vector.load %arg7[%596, %c0_349] : memref<9x128xf32, #tpu.memory_space<vmem>>, vector<1x128xf32>
    %c1_350 = arith.constant 1 : index
    %c0_351 = arith.constant 0 : index
    %598 = vector.load %arg10[%c1_350, %c0_351] : memref<4x128xf32, #tpu.memory_space<vmem>>, vector<1x128xf32>
    tpu.vector_store %arg10[%c1_350, %c0_351], %597 {strides = array<i32>} : memref<4x128xf32, #tpu.memory_space<vmem>>, vector<1x128xf32>,
    %599 = arith.addf %588, %594 : vector<1x128xf32>
    %c4_i32_352 = arith.constant 4 : i32
    %600 = arith.muli %c6_i32, %c4_i32_352 : i32
    %c2_i32_353 = arith.constant 2 : i32
    %601 = arith.addi %600, %c2_i32_353 : i32
    %602 = arith.index_cast %601 : i32 to index
    %603 = memref.load %arg2[%602] : memref<32xi32, #tpu.memory_space<smem>>
    %604 = arith.index_cast %603 : i32 to index
    %c0_354 = arith.constant 0 : index
    %605 = vector.load %arg8[%604, %c0_354] : memref<9x128xf32, #tpu.memory_space<vmem>>, vector<1x128xf32>
    %c3_355 = arith.constant 3 : index
    %c128_356 = arith.constant 128 : index
    %606 = vector.load %arg9[%c3_355, %c128_356] : memref<5x256xf32, #tpu.memory_space<vmem>>, vector<1x128xf32>
    tpu.vector_store %arg9[%c3_355, %c128_356], %605 {strides = array<i32>} : memref<5x256xf32, #tpu.memory_space<vmem>>, vector<1x128xf32>,
    %607 = arith.index_cast %603 : i32 to index
    %c0_357 = arith.constant 0 : index
    %608 = vector.load %arg7[%607, %c0_357] : memref<9x128xf32, #tpu.memory_space<vmem>>, vector<1x128xf32>
    %c2_358 = arith.constant 2 : index
    %c0_359 = arith.constant 0 : index
    %609 = vector.load %arg10[%c2_358, %c0_359] : memref<4x128xf32, #tpu.memory_space<vmem>>, vector<1x128xf32>
    tpu.vector_store %arg10[%c2_358, %c0_359], %608 {strides = array<i32>} : memref<4x128xf32, #tpu.memory_space<vmem>>, vector<1x128xf32>,
    %610 = arith.addf %599, %605 : vector<1x128xf32>
    %c4_i32_360 = arith.constant 4 : i32
    %611 = arith.muli %c6_i32, %c4_i32_360 : i32
    %c3_i32_361 = arith.constant 3 : i32
    %612 = arith.addi %611, %c3_i32_361 : i32
    %613 = arith.index_cast %612 : i32 to index
    %614 = memref.load %arg2[%613] : memref<32xi32, #tpu.memory_space<smem>>
    %615 = arith.index_cast %614 : i32 to index
    %c0_362 = arith.constant 0 : index
    %616 = vector.load %arg8[%615, %c0_362] : memref<9x128xf32, #tpu.memory_space<vmem>>, vector<1x128xf32>
    %c4_363 = arith.constant 4 : index
    %c128_364 = arith.constant 128 : index
    %617 = vector.load %arg9[%c4_363, %c128_364] : memref<5x256xf32, #tpu.memory_space<vmem>>, vector<1x128xf32>
    tpu.vector_store %arg9[%c4_363, %c128_364], %616 {strides = array<i32>} : memref<5x256xf32, #tpu.memory_space<vmem>>, vector<1x128xf32>,
    %618 = arith.index_cast %614 : i32 to index
    %c0_365 = arith.constant 0 : index
    %619 = vector.load %arg7[%618, %c0_365] : memref<9x128xf32, #tpu.memory_space<vmem>>, vector<1x128xf32>
    %c3_366 = arith.constant 3 : index
    %c0_367 = arith.constant 0 : index
    %620 = vector.load %arg10[%c3_366, %c0_367] : memref<4x128xf32, #tpu.memory_space<vmem>>, vector<1x128xf32>
    tpu.vector_store %arg10[%c3_366, %c0_367], %619 {strides = array<i32>} : memref<4x128xf32, #tpu.memory_space<vmem>>, vector<1x128xf32>,
    %621 = arith.addf %610, %616 : vector<1x128xf32>
    %c0_368 = arith.constant 0 : index
    %c128_369 = arith.constant 128 : index
    %622 = vector.load %arg9[%c0_368, %c128_369] : memref<5x256xf32, #tpu.memory_space<vmem>>, vector<1x128xf32>
    tpu.vector_store %arg9[%c0_368, %c128_369], %621 {strides = array<i32>} : memref<5x256xf32, #tpu.memory_space<vmem>>, vector<1x128xf32>,
    %c0_370 = arith.constant 0 : index
    %c0_371 = arith.constant 0 : index
    %623 = vector.load %arg9[%c0_370, %c0_371] : memref<5x256xf32, #tpu.memory_space<vmem>>, vector<5x256xf32>
    %c0_372 = arith.constant 0 : index
    %c0_373 = arith.constant 0 : index
    %624 = vector.load %arg4[%c0_372, %c0_373] : memref<256x512xf32, #tpu.memory_space<vmem>>, vector<256x512xf32>
    %cst_374 = arith.constant dense<0.000000e+00> : vector<5x512xf32>
    %625 = tpu.matmul %623, %624, %cst_374 {dimension_numbers = #tpu.dot_dimension_numbers<[1], [0], [0], [1], [0, 0, 1, 1], [], []>} : vector<5x256xf32>, vector<256x512xf32>, vector<5x512xf32> -> vector<5x512xf32>
    %626 = vector.extract_strided_slice %625 {offsets = [0, 0], sizes = [1, 384], strides = [1, 1]} : vector<5x512xf32> to vector<1x384xf32>
    %c0_375 = arith.constant 0 : index
    %c0_376 = arith.constant 0 : index
    %627 = vector.load %arg5[%c0_375, %c0_376] : memref<1x384xf32, #tpu.memory_space<vmem>>, vector<1x384xf32>
    %628 = arith.addf %626, %627 : vector<1x384xf32>
    %629 = vector.extract_strided_slice %625 {offsets = [1, 384], sizes = [4, 128], strides = [1, 1]} : vector<5x512xf32> to vector<4x128xf32>
    %c0_377 = arith.constant 0 : index
    %c0_378 = arith.constant 0 : index
    %630 = vector.load %arg6[%c0_377, %c0_378] : memref<1x128xf32, #tpu.memory_space<vmem>>, vector<1x128xf32>
    %631 = vector.broadcast %630 : vector<1x128xf32> to vector<4x128xf32>
    %632 = arith.addf %629, %631 : vector<4x128xf32>
    %633 = vector.extract_strided_slice %628 {offsets = [0, 0], sizes = [1, 128], strides = [1, 1]} : vector<1x384xf32> to vector<1x128xf32>
    %634 = arith.negf %633 : vector<1x128xf32>
    %635 = math.exp %634 : vector<1x128xf32>
    %cst_379 = arith.constant 1.000000e+00 : f32
    %636 = vector.broadcast %cst_379 : f32 to vector<1x128xf32>
    %637 = arith.addf %636, %635 : vector<1x128xf32>
    %638 = arith.divf %636, %637 : vector<1x128xf32>
    %639 = vector.extract_strided_slice %628 {offsets = [0, 128], sizes = [1, 128], strides = [1, 1]} : vector<1x384xf32> to vector<1x128xf32>
    %640 = arith.negf %639 : vector<1x128xf32>
    %641 = math.exp %640 : vector<1x128xf32>
    %cst_380 = arith.constant 1.000000e+00 : f32
    %642 = vector.broadcast %cst_380 : f32 to vector<1x128xf32>
    %643 = arith.addf %642, %641 : vector<1x128xf32>
    %644 = arith.divf %642, %643 : vector<1x128xf32>
    %645 = vector.extract_strided_slice %628 {offsets = [0, 256], sizes = [1, 128], strides = [1, 1]} : vector<1x384xf32> to vector<1x128xf32>
    %646 = math.tanh %645 : vector<1x128xf32>
    %647 = arith.negf %632 : vector<4x128xf32>
    %648 = math.exp %647 : vector<4x128xf32>
    %cst_381 = arith.constant 1.000000e+00 : f32
    %649 = vector.broadcast %cst_381 : f32 to vector<4x128xf32>
    %650 = arith.addf %649, %648 : vector<4x128xf32>
    %651 = arith.divf %649, %650 : vector<4x128xf32>
    %652 = arith.mulf %638, %646 : vector<1x128xf32>
    %c0_382 = arith.constant 0 : index
    %c0_383 = arith.constant 0 : index
    %653 = vector.load %arg10[%c0_382, %c0_383] : memref<4x128xf32, #tpu.memory_space<vmem>>, vector<4x128xf32>
    %654 = arith.mulf %651, %653 : vector<4x128xf32>
    %cst_384 = arith.constant dense<0.000000e+00> : vector<128xf32>
    %655 = vector.multi_reduction <add>, %654, %cst_384 [0] : vector<4x128xf32> to vector<128xf32>
    %656 = vector.shape_cast %655 : vector<128xf32> to vector<1x128xf32>
    %657 = arith.addf %652, %656 : vector<1x128xf32>
    %658 = math.tanh %657 : vector<1x128xf32>
    %659 = arith.mulf %644, %658 : vector<1x128xf32>
    %660 = arith.index_cast %571 : i32 to index
    %c0_385 = arith.constant 0 : index
    %661 = vector.load %arg7[%660, %c0_385] : memref<9x128xf32, #tpu.memory_space<vmem>>, vector<1x128xf32>
    tpu.vector_store %arg7[%660, %c0_385], %657 {strides = array<i32>} : memref<9x128xf32, #tpu.memory_space<vmem>>, vector<1x128xf32>,
    %662 = arith.index_cast %571 : i32 to index
    %c0_386 = arith.constant 0 : index
    %663 = vector.load %arg8[%662, %c0_386] : memref<9x128xf32, #tpu.memory_space<vmem>>, vector<1x128xf32>
    tpu.vector_store %arg8[%662, %c0_386], %659 {strides = array<i32>} : memref<9x128xf32, #tpu.memory_space<vmem>>, vector<1x128xf32>,
    %c7_i32 = arith.constant 7 : i32
    %664 = arith.index_cast %c7_i32 : i32 to index
    %665 = memref.load %arg1[%664] : memref<8xi32, #tpu.memory_space<smem>>
    %666 = arith.index_cast %665 : i32 to index
    %c0_387 = arith.constant 0 : index
    %667 = vector.load %arg3[%666, %c0_387] : memref<8x128xf32, #tpu.memory_space<vmem>>, vector<1x128xf32>
    %668 = vector.shape_cast %667 : vector<1x128xf32> to vector<1x128xf32>
    %669 = vector.broadcast %668 : vector<1x128xf32> to vector<5x128xf32>
    %c0_388 = arith.constant 0 : index
    %c0_389 = arith.constant 0 : index
    %670 = vector.load %arg9[%c0_388, %c0_389] : memref<5x256xf32, #tpu.memory_space<vmem>>, vector<5x128xf32>
    tpu.vector_store %arg9[%c0_388, %c0_389], %669 {strides = array<i32>} : memref<5x256xf32, #tpu.memory_space<vmem>>, vector<5x128xf32>,
    %cst_390 = arith.constant 0.000000e+00 : f32
    %671 = vector.broadcast %cst_390 : f32 to vector<1x128xf32>
    %c4_i32_391 = arith.constant 4 : i32
    %672 = arith.muli %c7_i32, %c4_i32_391 : i32
    %c0_i32_392 = arith.constant 0 : i32
    %673 = arith.addi %672, %c0_i32_392 : i32
    %674 = arith.index_cast %673 : i32 to index
    %675 = memref.load %arg2[%674] : memref<32xi32, #tpu.memory_space<smem>>
    %676 = arith.index_cast %675 : i32 to index
    %c0_393 = arith.constant 0 : index
    %677 = vector.load %arg8[%676, %c0_393] : memref<9x128xf32, #tpu.memory_space<vmem>>, vector<1x128xf32>
    %c1_394 = arith.constant 1 : index
    %c128_395 = arith.constant 128 : index
    %678 = vector.load %arg9[%c1_394, %c128_395] : memref<5x256xf32, #tpu.memory_space<vmem>>, vector<1x128xf32>
    tpu.vector_store %arg9[%c1_394, %c128_395], %677 {strides = array<i32>} : memref<5x256xf32, #tpu.memory_space<vmem>>, vector<1x128xf32>,
    %679 = arith.index_cast %675 : i32 to index
    %c0_396 = arith.constant 0 : index
    %680 = vector.load %arg7[%679, %c0_396] : memref<9x128xf32, #tpu.memory_space<vmem>>, vector<1x128xf32>
    %c0_397 = arith.constant 0 : index
    %c0_398 = arith.constant 0 : index
    %681 = vector.load %arg10[%c0_397, %c0_398] : memref<4x128xf32, #tpu.memory_space<vmem>>, vector<1x128xf32>
    tpu.vector_store %arg10[%c0_397, %c0_398], %680 {strides = array<i32>} : memref<4x128xf32, #tpu.memory_space<vmem>>, vector<1x128xf32>,
    %682 = arith.addf %671, %677 : vector<1x128xf32>
    %c4_i32_399 = arith.constant 4 : i32
    %683 = arith.muli %c7_i32, %c4_i32_399 : i32
    %c1_i32_400 = arith.constant 1 : i32
    %684 = arith.addi %683, %c1_i32_400 : i32
    %685 = arith.index_cast %684 : i32 to index
    %686 = memref.load %arg2[%685] : memref<32xi32, #tpu.memory_space<smem>>
    %687 = arith.index_cast %686 : i32 to index
    %c0_401 = arith.constant 0 : index
    %688 = vector.load %arg8[%687, %c0_401] : memref<9x128xf32, #tpu.memory_space<vmem>>, vector<1x128xf32>
    %c2_402 = arith.constant 2 : index
    %c128_403 = arith.constant 128 : index
    %689 = vector.load %arg9[%c2_402, %c128_403] : memref<5x256xf32, #tpu.memory_space<vmem>>, vector<1x128xf32>
    tpu.vector_store %arg9[%c2_402, %c128_403], %688 {strides = array<i32>} : memref<5x256xf32, #tpu.memory_space<vmem>>, vector<1x128xf32>,
    %690 = arith.index_cast %686 : i32 to index
    %c0_404 = arith.constant 0 : index
    %691 = vector.load %arg7[%690, %c0_404] : memref<9x128xf32, #tpu.memory_space<vmem>>, vector<1x128xf32>
    %c1_405 = arith.constant 1 : index
    %c0_406 = arith.constant 0 : index
    %692 = vector.load %arg10[%c1_405, %c0_406] : memref<4x128xf32, #tpu.memory_space<vmem>>, vector<1x128xf32>
    tpu.vector_store %arg10[%c1_405, %c0_406], %691 {strides = array<i32>} : memref<4x128xf32, #tpu.memory_space<vmem>>, vector<1x128xf32>,
    %693 = arith.addf %682, %688 : vector<1x128xf32>
    %c4_i32_407 = arith.constant 4 : i32
    %694 = arith.muli %c7_i32, %c4_i32_407 : i32
    %c2_i32_408 = arith.constant 2 : i32
    %695 = arith.addi %694, %c2_i32_408 : i32
    %696 = arith.index_cast %695 : i32 to index
    %697 = memref.load %arg2[%696] : memref<32xi32, #tpu.memory_space<smem>>
    %698 = arith.index_cast %697 : i32 to index
    %c0_409 = arith.constant 0 : index
    %699 = vector.load %arg8[%698, %c0_409] : memref<9x128xf32, #tpu.memory_space<vmem>>, vector<1x128xf32>
    %c3_410 = arith.constant 3 : index
    %c128_411 = arith.constant 128 : index
    %700 = vector.load %arg9[%c3_410, %c128_411] : memref<5x256xf32, #tpu.memory_space<vmem>>, vector<1x128xf32>
    tpu.vector_store %arg9[%c3_410, %c128_411], %699 {strides = array<i32>} : memref<5x256xf32, #tpu.memory_space<vmem>>, vector<1x128xf32>,
    %701 = arith.index_cast %697 : i32 to index
    %c0_412 = arith.constant 0 : index
    %702 = vector.load %arg7[%701, %c0_412] : memref<9x128xf32, #tpu.memory_space<vmem>>, vector<1x128xf32>
    %c2_413 = arith.constant 2 : index
    %c0_414 = arith.constant 0 : index
    %703 = vector.load %arg10[%c2_413, %c0_414] : memref<4x128xf32, #tpu.memory_space<vmem>>, vector<1x128xf32>
    tpu.vector_store %arg10[%c2_413, %c0_414], %702 {strides = array<i32>} : memref<4x128xf32, #tpu.memory_space<vmem>>, vector<1x128xf32>,
    %704 = arith.addf %693, %699 : vector<1x128xf32>
    %c4_i32_415 = arith.constant 4 : i32
    %705 = arith.muli %c7_i32, %c4_i32_415 : i32
    %c3_i32_416 = arith.constant 3 : i32
    %706 = arith.addi %705, %c3_i32_416 : i32
    %707 = arith.index_cast %706 : i32 to index
    %708 = memref.load %arg2[%707] : memref<32xi32, #tpu.memory_space<smem>>
    %709 = arith.index_cast %708 : i32 to index
    %c0_417 = arith.constant 0 : index
    %710 = vector.load %arg8[%709, %c0_417] : memref<9x128xf32, #tpu.memory_space<vmem>>, vector<1x128xf32>
    %c4_418 = arith.constant 4 : index
    %c128_419 = arith.constant 128 : index
    %711 = vector.load %arg9[%c4_418, %c128_419] : memref<5x256xf32, #tpu.memory_space<vmem>>, vector<1x128xf32>
    tpu.vector_store %arg9[%c4_418, %c128_419], %710 {strides = array<i32>} : memref<5x256xf32, #tpu.memory_space<vmem>>, vector<1x128xf32>,
    %712 = arith.index_cast %708 : i32 to index
    %c0_420 = arith.constant 0 : index
    %713 = vector.load %arg7[%712, %c0_420] : memref<9x128xf32, #tpu.memory_space<vmem>>, vector<1x128xf32>
    %c3_421 = arith.constant 3 : index
    %c0_422 = arith.constant 0 : index
    %714 = vector.load %arg10[%c3_421, %c0_422] : memref<4x128xf32, #tpu.memory_space<vmem>>, vector<1x128xf32>
    tpu.vector_store %arg10[%c3_421, %c0_422], %713 {strides = array<i32>} : memref<4x128xf32, #tpu.memory_space<vmem>>, vector<1x128xf32>,
    %715 = arith.addf %704, %710 : vector<1x128xf32>
    %c0_423 = arith.constant 0 : index
    %c128_424 = arith.constant 128 : index
    %716 = vector.load %arg9[%c0_423, %c128_424] : memref<5x256xf32, #tpu.memory_space<vmem>>, vector<1x128xf32>
    tpu.vector_store %arg9[%c0_423, %c128_424], %715 {strides = array<i32>} : memref<5x256xf32, #tpu.memory_space<vmem>>, vector<1x128xf32>,
    %c0_425 = arith.constant 0 : index
    %c0_426 = arith.constant 0 : index
    %717 = vector.load %arg9[%c0_425, %c0_426] : memref<5x256xf32, #tpu.memory_space<vmem>>, vector<5x256xf32>
    %c0_427 = arith.constant 0 : index
    %c0_428 = arith.constant 0 : index
    %718 = vector.load %arg4[%c0_427, %c0_428] : memref<256x512xf32, #tpu.memory_space<vmem>>, vector<256x512xf32>
    %cst_429 = arith.constant dense<0.000000e+00> : vector<5x512xf32>
    %719 = tpu.matmul %717, %718, %cst_429 {dimension_numbers = #tpu.dot_dimension_numbers<[1], [0], [0], [1], [0, 0, 1, 1], [], []>} : vector<5x256xf32>, vector<256x512xf32>, vector<5x512xf32> -> vector<5x512xf32>
    %720 = vector.extract_strided_slice %719 {offsets = [0, 0], sizes = [1, 384], strides = [1, 1]} : vector<5x512xf32> to vector<1x384xf32>
    %c0_430 = arith.constant 0 : index
    %c0_431 = arith.constant 0 : index
    %721 = vector.load %arg5[%c0_430, %c0_431] : memref<1x384xf32, #tpu.memory_space<vmem>>, vector<1x384xf32>
    %722 = arith.addf %720, %721 : vector<1x384xf32>
    %723 = vector.extract_strided_slice %719 {offsets = [1, 384], sizes = [4, 128], strides = [1, 1]} : vector<5x512xf32> to vector<4x128xf32>
    %c0_432 = arith.constant 0 : index
    %c0_433 = arith.constant 0 : index
    %724 = vector.load %arg6[%c0_432, %c0_433] : memref<1x128xf32, #tpu.memory_space<vmem>>, vector<1x128xf32>
    %725 = vector.broadcast %724 : vector<1x128xf32> to vector<4x128xf32>
    %726 = arith.addf %723, %725 : vector<4x128xf32>
    %727 = vector.extract_strided_slice %722 {offsets = [0, 0], sizes = [1, 128], strides = [1, 1]} : vector<1x384xf32> to vector<1x128xf32>
    %728 = arith.negf %727 : vector<1x128xf32>
    %729 = math.exp %728 : vector<1x128xf32>
    %cst_434 = arith.constant 1.000000e+00 : f32
    %730 = vector.broadcast %cst_434 : f32 to vector<1x128xf32>
    %731 = arith.addf %730, %729 : vector<1x128xf32>
    %732 = arith.divf %730, %731 : vector<1x128xf32>
    %733 = vector.extract_strided_slice %722 {offsets = [0, 128], sizes = [1, 128], strides = [1, 1]} : vector<1x384xf32> to vector<1x128xf32>
    %734 = arith.negf %733 : vector<1x128xf32>
    %735 = math.exp %734 : vector<1x128xf32>
    %cst_435 = arith.constant 1.000000e+00 : f32
    %736 = vector.broadcast %cst_435 : f32 to vector<1x128xf32>
    %737 = arith.addf %736, %735 : vector<1x128xf32>
    %738 = arith.divf %736, %737 : vector<1x128xf32>
    %739 = vector.extract_strided_slice %722 {offsets = [0, 256], sizes = [1, 128], strides = [1, 1]} : vector<1x384xf32> to vector<1x128xf32>
    %740 = math.tanh %739 : vector<1x128xf32>
    %741 = arith.negf %726 : vector<4x128xf32>
    %742 = math.exp %741 : vector<4x128xf32>
    %cst_436 = arith.constant 1.000000e+00 : f32
    %743 = vector.broadcast %cst_436 : f32 to vector<4x128xf32>
    %744 = arith.addf %743, %742 : vector<4x128xf32>
    %745 = arith.divf %743, %744 : vector<4x128xf32>
    %746 = arith.mulf %732, %740 : vector<1x128xf32>
    %c0_437 = arith.constant 0 : index
    %c0_438 = arith.constant 0 : index
    %747 = vector.load %arg10[%c0_437, %c0_438] : memref<4x128xf32, #tpu.memory_space<vmem>>, vector<4x128xf32>
    %748 = arith.mulf %745, %747 : vector<4x128xf32>
    %cst_439 = arith.constant dense<0.000000e+00> : vector<128xf32>
    %749 = vector.multi_reduction <add>, %748, %cst_439 [0] : vector<4x128xf32> to vector<128xf32>
    %750 = vector.shape_cast %749 : vector<128xf32> to vector<1x128xf32>
    %751 = arith.addf %746, %750 : vector<1x128xf32>
    %752 = math.tanh %751 : vector<1x128xf32>
    %753 = arith.mulf %738, %752 : vector<1x128xf32>
    %754 = arith.index_cast %665 : i32 to index
    %c0_440 = arith.constant 0 : index
    %755 = vector.load %arg7[%754, %c0_440] : memref<9x128xf32, #tpu.memory_space<vmem>>, vector<1x128xf32>
    tpu.vector_store %arg7[%754, %c0_440], %751 {strides = array<i32>} : memref<9x128xf32, #tpu.memory_space<vmem>>, vector<1x128xf32>,
    %756 = arith.index_cast %665 : i32 to index
    %c0_441 = arith.constant 0 : index
    %757 = vector.load %arg8[%756, %c0_441] : memref<9x128xf32, #tpu.memory_space<vmem>>, vector<1x128xf32>
    tpu.vector_store %arg8[%756, %c0_441], %753 {strides = array<i32>} : memref<9x128xf32, #tpu.memory_space<vmem>>, vector<1x128xf32>,
    %c8_i32 = arith.constant 8 : i32
    return
  }
  func.func @transform_0(%arg0: i32, %arg1: memref<8xi32, #tpu.memory_space<smem>>, %arg2: memref<32xi32, #tpu.memory_space<smem>>) -> (i32, i32) {
    %c0_i32 = arith.constant 0 : i32
    %c0_i32_0 = arith.constant 0 : i32
    %c0_i32_1 = arith.constant 0 : i32
    return %c0_i32, %c0_i32_0 : i32, i32
  }
  func.func @transform_1(%arg0: i32, %arg1: memref<8xi32, #tpu.memory_space<smem>>, %arg2: memref<32xi32, #tpu.memory_space<smem>>) -> (i32, i32) {
    %c0_i32 = arith.constant 0 : i32
    %c0_i32_0 = arith.constant 0 : i32
    %c0_i32_1 = arith.constant 0 : i32
    return %c0_i32, %c0_i32_0 : i32, i32
  }
  func.func @transform_2(%arg0: i32, %arg1: memref<8xi32, #tpu.memory_space<smem>>, %arg2: memref<32xi32, #tpu.memory_space<smem>>) -> (i32, i32) {
    %c0_i32 = arith.constant 0 : i32
    %c0_i32_0 = arith.constant 0 : i32
    %c0_i32_1 = arith.constant 0 : i32
    return %c0_i32, %c0_i32_0 : i32, i32
  }
  func.func @transform_3(%arg0: i32, %arg1: memref<8xi32, #tpu.memory_space<smem>>, %arg2: memref<32xi32, #tpu.memory_space<smem>>) -> (i32, i32) {
    %c0_i32 = arith.constant 0 : i32
    %c0_i32_0 = arith.constant 0 : i32
    %c0_i32_1 = arith.constant 0 : i32
    return %c0_i32, %c0_i32_0 : i32, i32
  }
  func.func @transform_4(%arg0: i32, %arg1: memref<8xi32, #tpu.memory_space<smem>>, %arg2: memref<32xi32, #tpu.memory_space<smem>>) -> (i32, i32) {
    %c0_i32 = arith.constant 0 : i32
    %c0_i32_0 = arith.constant 0 : i32
    %c0_i32_1 = arith.constant 0 : i32
    return %c0_i32, %c0_i32_0 : i32, i32
  }
  func.func @transform_5(%arg0: i32, %arg1: memref<8xi32, #tpu.memory_space<smem>>, %arg2: memref<32xi32, #tpu.memory_space<smem>>) -> (i32, i32) {
    %c0_i32 = arith.constant 0 : i32
    %c0_i32_0 = arith.constant 0 : i32
    %c0_i32_1 = arith.constant 0 : i32
    return %c0_i32, %c0_i32_0 : i32, i32
  }
}

</mosaic_0001>

<llo_original>
// kernel: run.1
$region0: #{run.1}
  #allocation0 [shape = 'u32[]', space=smem, size = 0x4, offset = 0x4, fixed_abs, tag = 'smem constant byte address 0x4 - core index']
  #allocation1 [shape = 'u32[72,128]{1,0:T(1,128)}', space=vmem, size = 0x9000, scoped, tag = 'internal scratch']
  #allocation2 [shape = 'f32[5,256]{1,0:T(8,128)}', space=vmem, size = 0x2000, scoped, tag = 'scratch operand']
  #allocation3 [shape = 'f32[4,128]{1,0:T(4,128)}', space=vmem, size = 0x800, scoped, tag = 'scratch operand']
  #allocation4 [shape = 's32[1]{0}', space=sflag, size = 0x4, scoped, tag = 'scoped memory for run.1']
  #allocation5 [shape = 'u8[512]{0}', space=smem, size = 0x200, scoped, tag = 'prefetched SMEM operand 0']
  #allocation6 [shape = 'u8[512]{0}', space=smem, size = 0x200, scoped, tag = 'prefetched SMEM operand 1']
  %s0 = inlined_call_operand.vmem [shape: s32[8], index: 0, kind: input, shape index: {}]
  %s1 = inlined_call_operand.vmem [shape: s32[32], index: 1, kind: input, shape index: {}]
  %s2 = inlined_call_operand.vmem [shape: f32[8,128], index: 2, kind: input, shape index: {}]
  %s3 = inlined_call_operand.hbm [shape: f32[256,512], index: 3, kind: input, shape index: {}]
  %s4 = inlined_call_operand.vmem [shape: f32[1,384], index: 4, kind: input, shape index: {}]
  %s5 = inlined_call_operand.vmem [shape: f32[1,128], index: 5, kind: input, shape index: {}]
  %s6 = inlined_call_operand.vmem [shape: f32[9,128], index: 6, kind: output, shape index: {0}]
  %s7 = inlined_call_operand.vmem [shape: f32[9,128], index: 7, kind: output, shape index: {1}]
  %8 = xla_tuple %s6, %s7
  %s9 = sld [smem:[#allocation0]]
  $region38: #{run.1} parent=0
    _
  %s11 = ssub.s32 1, %s9
  %s12 = scalar_select 0, %s11, %s9
  %s14 = sshll.u32 %s0, 4
  %s15 = int_to_ptr.vmem [resolvable:$true] %s14
  %17 = dma.vmem_to_smem %s15, 16, [#allocation5], [#allocation4]
  %s19 = sshll.u32 %s1, 4
  %s20 = int_to_ptr.vmem [resolvable:$true] %s19
  %22 = dma.vmem_to_smem %s20, 16, [#allocation6], [#allocation4]
  %24 = dma.done [#allocation4], 32
  %25 = sfence
  $region1: #{run.1} parent=0
    #allocation7 [shape = 'u8[524288]{0}', space=vmem, size = 0x80000, scoped, tag = 'input window, operand 3, single buffered']
    #allocation8 [shape = 's32[1]{0}', space=sflag, size = 0x4, scoped, tag = 'scoped memory for run.1']
    %26 = vsyncpa [#allocation8], 0
    // Predicated region
    $region2: #{run.1} parent=1 // pred_check
      _
    $region3: #{run.1} parent=1 // pred_check_branch
      %28 = sbr.rel (0) target = $region5
    $region4: #{run.1} parent=1 // pred_region
      _
    $region5: #{run.1} parent=1 // pred_fallthru
      _
    // Predicated region
    $region6: #{run.1} parent=1 // pred_check
      _
    $region7: #{run.1} parent=1 // pred_check_branch
      %30 = sbr.rel (0) target = $region9
    $region8: #{run.1} parent=1 // pred_region
      %32 = vsyncadd [#allocation8], 0
      %s33 = sshll.u32 %s3, 4
      %s34 = int_to_ptr.hbm [resolvable:$true] %s33
      %s35 = sshll.u32 [#allocation7], 4
      %s36 = int_to_ptr.vmem [resolvable:$true] %s35
      %41 = dma.hbm_to_vmem [thread:$0]  %s34, 16384, %s36, [#allocation8], 512, 512, 32
    $region9: #{run.1} parent=1 // pred_fallthru
      _
    // Predicated region
    $region10: #{run.1} parent=1 // pred_check
      _
    $region11: #{run.1} parent=1 // pred_check_branch
      %43 = sbr.rel (0) target = $region13
    $region12: #{run.1} parent=1 // pred_region
      _
    $region13: #{run.1} parent=1 // pred_fallthru
      _
    // Predicated region
    $region14: #{run.1} parent=1 // pred_check
      _
    $region15: #{run.1} parent=1 // pred_check_branch
      %45 = sbr.rel (0) target = $region17
    $region16: #{run.1} parent=1 // pred_region
      _
    $region17: #{run.1} parent=1 // pred_fallthru
      _
    // Predicated region
    $region18: #{run.1} parent=1 // pred_check
      _
    $region19: #{run.1} parent=1 // pred_check_branch
      %47 = sbr.rel (0) target = $region21
    $region20: #{run.1} parent=1 // pred_region
      %49 = dma.done [#allocation8], 16384
    $region21: #{run.1} parent=1 // pred_fallthru
      _
    %50 = vst [vmem:[%s6] sm:$0xff] 0.0
    %51 = vst [vmem:[%s6 + $0x8] sm:$0x1] 0.0
    %52 = vst [vmem:[%s7] sm:$0xff] 0.0
    %53 = vst [vmem:[%s7 + $0x8] sm:$0x1] 0.0
    %54 = vst [vmem:[#allocation2] sm:$0x1f] 0.0
    %55 = vst [vmem:[#allocation2 + $0x8] sm:$0x1f] 0.0
    %s56 = sld [smem:[#allocation5]]
    %s57 = scalar_lea.vmem %s2, %s56
    %v58 = vld [vmem:[%s57] sm:$0x1]
    %v59 = vperm.slane %v58, 0
    %60 = vst [vmem:[#allocation2] sm:$0x1f] %v59
    %s61 = sld [smem:[#allocation6]]
    %s62 = scalar_lea.vmem %s7, %s61
    %v63 = vld [vmem:[%s62] sm:$0x1]
    %64 = vst [vmem:[#allocation2 + $0x9] sm:$0x1] %v63
    %s65 = scalar_lea.vmem %s6, %s61
    %v66 = vld [vmem:[%s65] sm:$0x1]
    %67 = vst [vmem:[#allocation3] sm:$0x1] %v66
    %v68 = vadd.f32 %v63, 0.0
    %s69 = sld [smem:[#allocation6 + $0x1]]
    %s70 = scalar_lea.vmem %s7, %s69
    %v71 = vld [vmem:[%s70] sm:$0x1]
    %72 = vst [vmem:[#allocation2 + $0xa] sm:$0x1] %v71
    %s73 = scalar_lea.vmem %s6, %s69
    %v74 = vld [vmem:[%s73] sm:$0x1]
    %75 = vst [vmem:[#allocation3 + $0x1] sm:$0x1] %v74
    %v76 = vadd.f32 %v68, %v71
    %s77 = sld [smem:[#allocation6 + $0x2]]
    %s78 = scalar_lea.vmem %s7, %s77
    %v79 = vld [vmem:[%s78] sm:$0x1]
    %80 = vst [vmem:[#allocation2 + $0xb] sm:$0x1] %v79
    %s81 = scalar_lea.vmem %s6, %s77
    %v82 = vld [vmem:[%s81] sm:$0x1]
    %83 = vst [vmem:[#allocation3 + $0x2] sm:$0x1] %v82
    %v84 = vadd.f32 %v76, %v79
    %s85 = sld [smem:[#allocation6 + $0x3]]
    %s86 = scalar_lea.vmem %s7, %s85
    %v87 = vld [vmem:[%s86] sm:$0x1]
    %88 = vst [vmem:[#allocation2 + $0xc] sm:$0x1] %v87
    %s89 = scalar_lea.vmem %s6, %s85
    %v90 = vld [vmem:[%s89] sm:$0x1]
    %91 = vst [vmem:[#allocation3 + $0x3] sm:$0x1] %v90
    %v92 = vadd.f32 %v84, %v87
    %93 = vst [vmem:[#allocation2 + $0x8] sm:$0x1] %v92
    %v94 = vld [vmem:[#allocation2] sm:$0x1f]
    %v95 = vld [vmem:[#allocation2 + $0x8] sm:$0x1f]
    %v96 = vld [vmem:[#allocation7] sm:$0xff]
    %v97 = vld [vmem:[#allocation7 + $0x8] sm:$0xff]
    %v98 = vld [vmem:[#allocation7 + $0x10] sm:$0xff]
    %v99 = vld [vmem:[#allocation7 + $0x18] sm:$0xff]
    %v100 = vld [vmem:[#allocation7 + $0x20] sm:$0xff]
    %v101 = vld [vmem:[#allocation7 + $0x28] sm:$0xff]
    %v102 = vld [vmem:[#allocation7 + $0x30] sm:$0xff]
    %v103 = vld [vmem:[#allocation7 + $0x38] sm:$0xff]
    %v104 = vld [vmem:[#allocation7 + $0x40] sm:$0xff]
    %v105 = vld [vmem:[#allocation7 + $0x48] sm:$0xff]
    %v106 = vld [vmem:[#allocation7 + $0x50] sm:$0xff]
    %v107 = vld [vmem:[#allocation7 + $0x58] sm:$0xff]
    %v108 = vld [vmem:[#allocation7 + $0x60] sm:$0xff]
    %v109 = vld [vmem:[#allocation7 + $0x68] sm:$0xff]
    %v110 = vld [vmem:[#allocation7 + $0x70] sm:$0xff]
    %v111 = vld [vmem:[#allocation7 + $0x78] sm:$0xff]
    %v112 = vld [vmem:[#allocation7 + $0x80] sm:$0xff]
    %v113 = vld [vmem:[#allocation7 + $0x88] sm:$0xff]
    %v114 = vld [vmem:[#allocation7 + $0x90] sm:$0xff]
    %v115 = vld [vmem:[#allocation7 + $0x98] sm:$0xff]
    %v116 = vld [vmem:[#allocation7 + $0xa0] sm:$0xff]
    %v117 = vld [vmem:[#allocation7 + $0xa8] sm:$0xff]
    %v118 = vld [vmem:[#allocation7 + $0xb0] sm:$0xff]
    %v119 = vld [vmem:[#allocation7 + $0xb8] sm:$0xff]
    %v120 = vld [vmem:[#allocation7 + $0xc0] sm:$0xff]
    %v121 = vld [vmem:[#allocation7 + $0xc8] sm:$0xff]
    %v122 = vld [vmem:[#allocation7 + $0xd0] sm:$0xff]
    %v123 = vld [vmem:[#allocation7 + $0xd8] sm:$0xff]
    %v124 = vld [vmem:[#allocation7 + $0xe0] sm:$0xff]
    %v125 = vld [vmem:[#allocation7 + $0xe8] sm:$0xff]
    %v126 = vld [vmem:[#allocation7 + $0xf0] sm:$0xff]
    %v127 = vld [vmem:[#allocation7 + $0xf8] sm:$0xff]
    %v128 = vld [vmem:[#allocation7 + $0x100] sm:$0xff]
    %v129 = vld [vmem:[#allocation7 + $0x108] sm:$0xff]
    %v130 = vld [vmem:[#allocation7 + $0x110] sm:$0xff]
    %v131 = vld [vmem:[#allocation7 + $0x118] sm:$0xff]
    %v132 = vld [vmem:[#allocation7 + $0x120] sm:$0xff]
    %v133 = vld [vmem:[#allocation7 + $0x128] sm:$0xff]
    %v134 = vld [vmem:[#allocation7 + $0x130] sm:$0xff]
    %v135 = vld [vmem:[#allocation7 + $0x138] sm:$0xff]
    %v136 = vld [vmem:[#allocation7 + $0x140] sm:$0xff]
    %v137 = vld [vmem:[#allocation7 + $0x148] sm:$0xff]
    %v138 = vld [vmem:[#allocation7 + $0x150] sm:$0xff]
    %v139 = vld [vmem:[#allocation7 + $0x158] sm:$0xff]
    %v140 = vld [vmem:[#allocation7 + $0x160] sm:$0xff]
    %v141 = vld [vmem:[#allocation7 + $0x168] sm:$0xff]
    %v142 = vld [vmem:[#allocation7 + $0x170] sm:$0xff]
    %v143 = vld [vmem:[#allocation7 + $0x178] sm:$0xff]
    %v144 = vld [vmem:[#allocation7 + $0x180] sm:$0xff]
    %v145 = vld [vmem:[#allocation7 + $0x188] sm:$0xff]
    %v146 = vld [vmem:[#allocation7 + $0x190] sm:$0xff]
    %v147 = vld [vmem:[#allocation7 + $0x198] sm:$0xff]
    %v148 = vld [vmem:[#allocation7 + $0x1a0] sm:$0xff]
    %v149 = vld [vmem:[#allocation7 + $0x1a8] sm:$0xff]
    %v150 = vld [vmem:[#allocation7 + $0x1b0] sm:$0xff]
    %v151 = vld [vmem:[#allocation7 + $0x1b8] sm:$0xff]
    %v152 = vld [vmem:[#allocation7 + $0x1c0] sm:$0xff]
    %v153 = vld [vmem:[#allocation7 + $0x1c8] sm:$0xff]
    %v154 = vld [vmem:[#allocation7 + $0x1d0] sm:$0xff]
    %v155 = vld [vmem:[#allocation7 + $0x1d8] sm:$0xff]
    %v156 = vld [vmem:[#allocation7 + $0x1e0] sm:$0xff]
    %v157 = vld [vmem:[#allocation7 + $0x1e8] sm:$0xff]
    %v158 = vld [vmem:[#allocation7 + $0x1f0] sm:$0xff]
    %v159 = vld [vmem:[#allocation7 + $0x1f8] sm:$0xff]
    %v160 = vld [vmem:[#allocation7 + $0x200] sm:$0xff]
    %v161 = vld [vmem:[#allocation7 + $0x208] sm:$0xff]
    %v162 = vld [vmem:[#allocation7 + $0x210] sm:$0xff]
    %v163 = vld [vmem:[#allocation7 + $0x218] sm:$0xff]
    %v164 = vld [vmem:[#allocation7 + $0x220] sm:$0xff]
    %v165 = vld [vmem:[#allocation7 + $0x228] sm:$0xff]
    %v166 = vld [vmem:[#allocation7 + $0x230] sm:$0xff]
    %v167 = vld [vmem:[#allocation7 + $0x238] sm:$0xff]
    %v168 = vld [vmem:[#allocation7 + $0x240] sm:$0xff]
    %v169 = vld [vmem:[#allocation7 + $0x248] sm:$0xff]
    %v170 = vld [vmem:[#allocation7 + $0x250] sm:$0xff]
    %v171 = vld [vmem:[#allocation7 + $0x258] sm:$0xff]
    %v172 = vld [vmem:[#allocation7 + $0x260] sm:$0xff]
    %v173 = vld [vmem:[#allocation7 + $0x268] sm:$0xff]
    %v174 = vld [vmem:[#allocation7 + $0x270] sm:$0xff]
    %v175 = vld [vmem:[#allocation7 + $0x278] sm:$0xff]
    %v176 = vld [vmem:[#allocation7 + $0x280] sm:$0xff]
    %v177 = vld [vmem:[#allocation7 + $0x288] sm:$0xff]
    %v178 = vld [vmem:[#allocation7 + $0x290] sm:$0xff]
    %v179 = vld [vmem:[#allocation7 + $0x298] sm:$0xff]
    %v180 = vld [vmem:[#allocation7 + $0x2a0] sm:$0xff]
    %v181 = vld [vmem:[#allocation7 + $0x2a8] sm:$0xff]
    %v182 = vld [vmem:[#allocation7 + $0x2b0] sm:$0xff]
    %v183 = vld [vmem:[#allocation7 + $0x2b8] sm:$0xff]
    %v184 = vld [vmem:[#allocation7 + $0x2c0] sm:$0xff]
    %v185 = vld [vmem:[#allocation7 + $0x2c8] sm:$0xff]
    %v186 = vld [vmem:[#allocation7 + $0x2d0] sm:$0xff]
    %v187 = vld [vmem:[#allocation7 + $0x2d8] sm:$0xff]
    %v188 = vld [vmem:[#allocation7 + $0x2e0] sm:$0xff]
    %v189 = vld [vmem:[#allocation7 + $0x2e8] sm:$0xff]
    %v190 = vld [vmem:[#allocation7 + $0x2f0] sm:$0xff]
    %v191 = vld [vmem:[#allocation7 + $0x2f8] sm:$0xff]
    %v192 = vld [vmem:[#allocation7 + $0x300] sm:$0xff]
    %v193 = vld [vmem:[#allocation7 + $0x308] sm:$0xff]
    %v194 = vld [vmem:[#allocation7 + $0x310] sm:$0xff]
    %v195 = vld [vmem:[#allocation7 + $0x318] sm:$0xff]
    %v196 = vld [vmem:[#allocation7 + $0x320] sm:$0xff]
    %v197 = vld [vmem:[#allocation7 + $0x328] sm:$0xff]
    %v198 = vld [vmem:[#allocation7 + $0x330] sm:$0xff]
    %v199 = vld [vmem:[#allocation7 + $0x338] sm:$0xff]
    %v200 = vld [vmem:[#allocation7 + $0x340] sm:$0xff]
    %v201 = vld [vmem:[#allocation7 + $0x348] sm:$0xff]
    %v202 = vld [vmem:[#allocation7 + $0x350] sm:$0xff]
    %v203 = vld [vmem:[#allocation7 + $0x358] sm:$0xff]
    %v204 = vld [vmem:[#allocation7 + $0x360] sm:$0xff]
    %v205 = vld [vmem:[#allocation7 + $0x368] sm:$0xff]
    %v206 = vld [vmem:[#allocation7 + $0x370] sm:$0xff]
    %v207 = vld [vmem:[#allocation7 + $0x378] sm:$0xff]
    %v208 = vld [vmem:[#allocation7 + $0x380] sm:$0xff]
    %v209 = vld [vmem:[#allocation7 + $0x388] sm:$0xff]
    %v210 = vld [vmem:[#allocation7 + $0x390] sm:$0xff]
    %v211 = vld [vmem:[#allocation7 + $0x398] sm:$0xff]
    %v212 = vld [vmem:[#allocation7 + $0x3a0] sm:$0xff]
    %v213 = vld [vmem:[#allocation7 + $0x3a8] sm:$0xff]
    %v214 = vld [vmem:[#allocation7 + $0x3b0] sm:$0xff]
    %v215 = vld [vmem:[#allocation7 + $0x3b8] sm:$0xff]
    %v216 = vld [vmem:[#allocation7 + $0x3c0] sm:$0xff]
    %v217 = vld [vmem:[#allocation7 + $0x3c8] sm:$0xff]
    %v218 = vld [vmem:[#allocation7 + $0x3d0] sm:$0xff]
    %v219 = vld [vmem:[#allocation7 + $0x3d8] sm:$0xff]
    %v220 = vld [vmem:[#allocation7 + $0x3e0] sm:$0xff]
    %v221 = vld [vmem:[#allocation7 + $0x3e8] sm:$0xff]
    %v222 = vld [vmem:[#allocation7 + $0x3f0] sm:$0xff]
    %v223 = vld [vmem:[#allocation7 + $0x3f8] sm:$0xff]
    %224 = vmatpush.msra.mxu0 %v156
    %225 = vmatpush.msra.mxu0 %v152
    %226 = vmatpush.msra.mxu0 %v148
    %227 = vmatpush.msra.mxu0 %v144
    %228 = vmatpush.msra.mxu0 %v140
    %229 = vmatpush.msra.mxu0 %v136
    %230 = vmatpush.msra.mxu0 %v132
    %231 = vmatpush.msra.mxu0 %v128
    %232 = vmatpush.msra.mxu0 %v124
    %233 = vmatpush.msra.mxu0 %v120
    %234 = vmatpush.msra.mxu0 %v116
    %235 = vmatpush.msra.mxu0 %v112
    %236 = vmatpush.msra.mxu0 %v108
    %237 = vmatpush.msra.mxu0 %v104
    %238 = vmatpush.msra.mxu0 %v100
    %239 = vmatpush.msra.mxu0 %v96
    %240 = vmatmul.f32.gmra.mxu0 %v94
    %v241 = vpop.f32.mrf.mxu0
    %v242 = vadd.f32 0.0, %v241
    %243 = vdwg.mxu0
    %244 = vmatpush.msra.mxu0 %v220
    %245 = vmatpush.msra.mxu0 %v216
    %246 = vmatpush.msra.mxu0 %v212
    %247 = vmatpush.msra.mxu0 %v208
    %248 = vmatpush.msra.mxu0 %v204
    %249 = vmatpush.msra.mxu0 %v200
    %250 = vmatpush.msra.mxu0 %v196
    %251 = vmatpush.msra.mxu0 %v192
    %252 = vmatpush.msra.mxu0 %v188
    %253 = vmatpush.msra.mxu0 %v184
    %254 = vmatpush.msra.mxu0 %v180
    %255 = vmatpush.msra.mxu0 %v176
    %256 = vmatpush.msra.mxu0 %v172
    %257 = vmatpush.msra.mxu0 %v168
    %258 = vmatpush.msra.mxu0 %v164
    %259 = vmatpush.msra.mxu0 %v160
    %260 = vmatmul.f32.gmra.mxu0 %v95
    %v261 = vpop.f32.mrf.mxu0
    %v262 = vadd.f32 %v242, %v261
    %263 = vdwg.mxu0
    %264 = vmatpush.msra.mxu0 %v157
    %265 = vmatpush.msra.mxu0 %v153
    %266 = vmatpush.msra.mxu0 %v149
    %267 = vmatpush.msra.mxu0 %v145
    %268 = vmatpush.msra.mxu0 %v141
    %269 = vmatpush.msra.mxu0 %v137
    %270 = vmatpush.msra.mxu0 %v133
    %271 = vmatpush.msra.mxu0 %v129
    %272 = vmatpush.msra.mxu0 %v125
    %273 = vmatpush.msra.mxu0 %v121
    %274 = vmatpush.msra.mxu0 %v117
    %275 = vmatpush.msra.mxu0 %v113
    %276 = vmatpush.msra.mxu0 %v109
    %277 = vmatpush.msra.mxu0 %v105
    %278 = vmatpush.msra.mxu0 %v101
    %279 = vmatpush.msra.mxu0 %v97
    %280 = vmatmul.f32.gmra.mxu0 %v94
    %v281 = vpop.f32.mrf.mxu0
    %v282 = vadd.f32 0.0, %v281
    %283 = vdwg.mxu0
    %284 = vmatpush.msra.mxu0 %v221
    %285 = vmatpush.msra.mxu0 %v217
    %286 = vmatpush.msra.mxu0 %v213
    %287 = vmatpush.msra.mxu0 %v209
    %288 = vmatpush.msra.mxu0 %v205
    %289 = vmatpush.msra.mxu0 %v201
    %290 = vmatpush.msra.mxu0 %v197
    %291 = vmatpush.msra.mxu0 %v193
    %292 = vmatpush.msra.mxu0 %v189
    %293 = vmatpush.msra.mxu0 %v185
    %294 = vmatpush.msra.mxu0 %v181
    %295 = vmatpush.msra.mxu0 %v177
    %296 = vmatpush.msra.mxu0 %v173
    %297 = vmatpush.msra.mxu0 %v169
    %298 = vmatpush.msra.mxu0 %v165
    %299 = vmatpush.msra.mxu0 %v161
    %300 = vmatmul.f32.gmra.mxu0 %v95
    %v301 = vpop.f32.mrf.mxu0
    %v302 = vadd.f32 %v282, %v301
    %303 = vdwg.mxu0
    %304 = vmatpush.msra.mxu0 %v158
    %305 = vmatpush.msra.mxu0 %v154
    %306 = vmatpush.msra.mxu0 %v150
    %307 = vmatpush.msra.mxu0 %v146
    %308 = vmatpush.msra.mxu0 %v142
    %309 = vmatpush.msra.mxu0 %v138
    %310 = vmatpush.msra.mxu0 %v134
    %311 = vmatpush.msra.mxu0 %v130
    %312 = vmatpush.msra.mxu0 %v126
    %313 = vmatpush.msra.mxu0 %v122
    %314 = vmatpush.msra.mxu0 %v118
    %315 = vmatpush.msra.mxu0 %v114
    %316 = vmatpush.msra.mxu0 %v110
    %317 = vmatpush.msra.mxu0 %v106
    %318 = vmatpush.msra.mxu0 %v102
    %319 = vmatpush.msra.mxu0 %v98
    %320 = vmatmul.f32.gmra.mxu0 %v94
    %v321 = vpop.f32.mrf.mxu0
    %v322 = vadd.f32 0.0, %v321
    %323 = vdwg.mxu0
    %324 = vmatpush.msra.mxu0 %v222
    %325 = vmatpush.msra.mxu0 %v218
    %326 = vmatpush.msra.mxu0 %v214
    %327 = vmatpush.msra.mxu0 %v210
    %328 = vmatpush.msra.mxu0 %v206
    %329 = vmatpush.msra.mxu0 %v202
    %330 = vmatpush.msra.mxu0 %v198
    %331 = vmatpush.msra.mxu0 %v194
    %332 = vmatpush.msra.mxu0 %v190
    %333 = vmatpush.msra.mxu0 %v186
    %334 = vmatpush.msra.mxu0 %v182
    %335 = vmatpush.msra.mxu0 %v178
    %336 = vmatpush.msra.mxu0 %v174
    %337 = vmatpush.msra.mxu0 %v170
    %338 = vmatpush.msra.mxu0 %v166
    %339 = vmatpush.msra.mxu0 %v162
    %340 = vmatmul.f32.gmra.mxu0 %v95
    %v341 = vpop.f32.mrf.mxu0
    %v342 = vadd.f32 %v322, %v341
    %343 = vdwg.mxu0
    %344 = vmatpush.msra.mxu0 %v159
    %345 = vmatpush.msra.mxu0 %v155
    %346 = vmatpush.msra.mxu0 %v151
    %347 = vmatpush.msra.mxu0 %v147
    %348 = vmatpush.msra.mxu0 %v143
    %349 = vmatpush.msra.mxu0 %v139
    %350 = vmatpush.msra.mxu0 %v135
    %351 = vmatpush.msra.mxu0 %v131
    %352 = vmatpush.msra.mxu0 %v127
    %353 = vmatpush.msra.mxu0 %v123
    %354 = vmatpush.msra.mxu0 %v119
    %355 = vmatpush.msra.mxu0 %v115
    %356 = vmatpush.msra.mxu0 %v111
    %357 = vmatpush.msra.mxu0 %v107
    %358 = vmatpush.msra.mxu0 %v103
    %359 = vmatpush.msra.mxu0 %v99
    %360 = vmatmul.f32.gmra.mxu0 %v94
    %v361 = vpop.f32.mrf.mxu0
    %v362 = vadd.f32 0.0, %v361
    %363 = vdwg.mxu0
    %364 = vmatpush.msra.mxu0 %v223
    %365 = vmatpush.msra.mxu0 %v219
    %366 = vmatpush.msra.mxu0 %v215
    %367 = vmatpush.msra.mxu0 %v211
    %368 = vmatpush.msra.mxu0 %v207
    %369 = vmatpush.msra.mxu0 %v203
    %370 = vmatpush.msra.mxu0 %v199
    %371 = vmatpush.msra.mxu0 %v195
    %372 = vmatpush.msra.mxu0 %v191
    %373 = vmatpush.msra.mxu0 %v187
    %374 = vmatpush.msra.mxu0 %v183
    %375 = vmatpush.msra.mxu0 %v179
    %376 = vmatpush.msra.mxu0 %v175
    %377 = vmatpush.msra.mxu0 %v171
    %378 = vmatpush.msra.mxu0 %v167
    %379 = vmatpush.msra.mxu0 %v163
    %380 = vmatmul.f32.gmra.mxu0 %v95
    %v381 = vpop.f32.mrf.mxu0
    %v382 = vadd.f32 %v362, %v381
    %383 = vdwg.mxu0
    %v384 = vld [vmem:[%s4] sm:$0x7]
    %v386 = vperm.slane %v384, 0
    %v387 = vperm.slane %v384, 1
    %v388 = vperm.slane %v384, 2
    %v392 = vadd.f32 %v262, %v386
    %v393 = vadd.f32 %v302, %v387
    %v394 = vadd.f32 %v342, %v388
    %v395 = vld [vmem:[%s5] sm:$0x1]
    %v397 = vperm.slane %v395, 0
    %v399 = vadd.f32 %v382, %v397
    %v400 = vxor.u32 %v392, 2147483648
    %v401 = vmul.f32 %v400, 1.442695
    %v402 = vpow.pop %v401
    %v403 = vadd.f32 %v402, 1.0
    %v404 = vrcp.pop %v403
    %v405 = vmul.f32 %v403, %v404
    %v406 = vsub.f32 1.0, %v405
    %v407 = vmul.f32 %v404, %v406
    %v408 = vadd.f32 %v404, %v407
    %vm409 = vweird.f32 %v403
    %vm410 = vweird.f32 %v404
    %vm411 = vmor %vm409, %vm410
    %v412 = vsel %vm411, %v404, %v408
    %v413 = vand.u32 2147483647, %v403
    %vm414 = vcmp.eq.f32.partialorder %v413, 8.507059e+37
    %v415 = vand.u32 %v403, 2147483648
    %v416 = vor.u32 1.1754944e-38, %v415
    %v417 = vsel %vm414, %v416, %v412
    %v418 = vmul.f32 1.0, %v417
    %v419 = vxor.u32 %v393, 2147483648
    %v420 = vmul.f32 %v419, 1.442695
    %v421 = vpow.pop %v420
    %v422 = vadd.f32 %v421, 1.0
    %v423 = vrcp.pop %v422
    %v424 = vmul.f32 %v422, %v423
    %v425 = vsub.f32 1.0, %v424
    %v426 = vmul.f32 %v423, %v425
    %v427 = vadd.f32 %v423, %v426
    %vm428 = vweird.f32 %v422
    %vm429 = vweird.f32 %v423
    %vm430 = vmor %vm428, %vm429
    %v431 = vsel %vm430, %v423, %v427
    %v432 = vand.u32 2147483647, %v422
    %vm433 = vcmp.eq.f32.partialorder %v432, 8.507059e+37
    %v434 = vand.u32 %v422, 2147483648
    %v435 = vor.u32 1.1754944e-38, %v434
    %v436 = vsel %vm433, %v435, %v431
    %v437 = vmul.f32 1.0, %v436
    %v438 = vtanh.pop %v394
    %v439 = vxor.u32 %v399, 2147483648
    %v440 = vmul.f32 %v439, 1.442695
    %v441 = vpow.pop %v440
    %v442 = vadd.f32 %v441, 1.0
    %v443 = vrcp.pop %v442
    %v444 = vmul.f32 %v442, %v443
    %v445 = vsub.f32 1.0, %v444
    %v446 = vmul.f32 %v443, %v445
    %v447 = vadd.f32 %v443, %v446
    %vm448 = vweird.f32 %v442
    %vm449 = vweird.f32 %v443
    %vm450 = vmor %vm448, %vm449
    %v451 = vsel %vm450, %v443, %v447
    %v452 = vand.u32 2147483647, %v442
    %vm453 = vcmp.eq.f32.partialorder %v452, 8.507059e+37
    %v454 = vand.u32 %v442, 2147483648
    %v455 = vor.u32 1.1754944e-38, %v454
    %v456 = vsel %vm453, %v455, %v451
    %v457 = vmul.f32 1.0, %v456
    %v458 = vmul.f32 %v418, %v438
    %v459 = vld [vmem:[#allocation3] sm:$0xf]
    %v461 = vrot.slane %v459, 7
    %v463 = vmul.f32 %v457, %v461
    %v465 = vrot.slane %v463, 1
    %vm467 = vcmask 1043456
    %v468 = vsel %vm467, %v465, 0.0
    %v469 = vrot.slane %v468, 4
    %v470 = vadd.f32 %v468, %v469
    %v471 = vrot.slane %v470, 2
    %v472 = vadd.f32 %v470, %v471
    %v473 = vrot.slane %v472, 1
    %v474 = vadd.f32 %v472, %v473
    %v475 = vadd.f32 %v458, %v474
    %v476 = vtanh.pop %v475
    %v477 = vmul.f32 %v437, %v476
    %s478 = scalar_lea.vmem %s6, %s56
    %479 = vst [vmem:[%s478] sm:$0x1] %v475
    %s480 = scalar_lea.vmem %s7, %s56
    %481 = vst [vmem:[%s480] sm:$0x1] %v477
    %s482 = sld [smem:[#allocation5 + $0x1]]
    %s483 = scalar_lea.vmem %s2, %s482
    %v484 = vld [vmem:[%s483] sm:$0x1]
    %v485 = vperm.slane %v484, 0
    %486 = vst [vmem:[#allocation2] sm:$0x1f] %v485
    %s487 = sld [smem:[#allocation6 + $0x4]]
    %s488 = scalar_lea.vmem %s7, %s487
    %v489 = vld [vmem:[%s488] sm:$0x1]
    %490 = vst [vmem:[#allocation2 + $0x9] sm:$0x1] %v489
    %s491 = scalar_lea.vmem %s6, %s487
    %v492 = vld [vmem:[%s491] sm:$0x1]
    %493 = vst [vmem:[#allocation3] sm:$0x1] %v492
    %v494 = vadd.f32 %v489, 0.0
    %s495 = sld [smem:[#allocation6 + $0x5]]
    %s496 = scalar_lea.vmem %s7, %s495
    %v497 = vld [vmem:[%s496] sm:$0x1]
    %498 = vst [vmem:[#allocation2 + $0xa] sm:$0x1] %v497
    %s499 = scalar_lea.vmem %s6, %s495
    %v500 = vld [vmem:[%s499] sm:$0x1]
    %501 = vst [vmem:[#allocation3 + $0x1] sm:$0x1] %v500
    %v502 = vadd.f32 %v494, %v497
    %s503 = sld [smem:[#allocation6 + $0x6]]
    %s504 = scalar_lea.vmem %s7, %s503
    %v505 = vld [vmem:[%s504] sm:$0x1]
    %506 = vst [vmem:[#allocation2 + $0xb] sm:$0x1] %v505
    %s507 = scalar_lea.vmem %s6, %s503
    %v508 = vld [vmem:[%s507] sm:$0x1]
    %509 = vst [vmem:[#allocation3 + $0x2] sm:$0x1] %v508
    %v510 = vadd.f32 %v502, %v505
    %s511 = sld [smem:[#allocation6 + $0x7]]
    %s512 = scalar_lea.vmem %s7, %s511
    %v513 = vld [vmem:[%s512] sm:$0x1]
    %514 = vst [vmem:[#allocation2 + $0xc] sm:$0x1] %v513
    %s515 = scalar_lea.vmem %s6, %s511
    %v516 = vld [vmem:[%s515] sm:$0x1]
    %517 = vst [vmem:[#allocation3 + $0x3] sm:$0x1] %v516
    %v518 = vadd.f32 %v510, %v513
    %519 = vst [vmem:[#allocation2 + $0x8] sm:$0x1] %v518
    %v520 = vld [vmem:[#allocation2] sm:$0x1f]
    %v521 = vld [vmem:[#allocation2 + $0x8] sm:$0x1f]
    %v522 = vld [vmem:[#allocation7] sm:$0xff]
    %v523 = vld [vmem:[#allocation7 + $0x8] sm:$0xff]
    %v524 = vld [vmem:[#allocation7 + $0x10] sm:$0xff]
    %v525 = vld [vmem:[#allocation7 + $0x18] sm:$0xff]
    %v526 = vld [vmem:[#allocation7 + $0x20] sm:$0xff]
    %v527 = vld [vmem:[#allocation7 + $0x28] sm:$0xff]
    %v528 = vld [vmem:[#allocation7 + $0x30] sm:$0xff]
    %v529 = vld [vmem:[#allocation7 + $0x38] sm:$0xff]
    %v530 = vld [vmem:[#allocation7 + $0x40] sm:$0xff]
    %v531 = vld [vmem:[#allocation7 + $0x48] sm:$0xff]
    %v532 = vld [vmem:[#allocation7 + $0x50] sm:$0xff]
    %v533 = vld [vmem:[#allocation7 + $0x58] sm:$0xff]
    %v534 = vld [vmem:[#allocation7 + $0x60] sm:$0xff]
    %v535 = vld [vmem:[#allocation7 + $0x68] sm:$0xff]
    %v536 = vld [vmem:[#allocation7 + $0x70] sm:$0xff]
    %v537 = vld [vmem:[#allocation7 + $0x78] sm:$0xff]
    %v538 = vld [vmem:[#allocation7 + $0x80] sm:$0xff]
    %v539 = vld [vmem:[#allocation7 + $0x88] sm:$0xff]
    %v540 = vld [vmem:[#allocation7 + $0x90] sm:$0xff]
    %v541 = vld [vmem:[#allocation7 + $0x98] sm:$0xff]
    %v542 = vld [vmem:[#allocation7 + $0xa0] sm:$0xff]
    %v543 = vld [vmem:[#allocation7 + $0xa8] sm:$0xff]
    %v544 = vld [vmem:[#allocation7 + $0xb0] sm:$0xff]
    %v545 = vld [vmem:[#allocation7 + $0xb8] sm:$0xff]
    %v546 = vld [vmem:[#allocation7 + $0xc0] sm:$0xff]
    %v547 = vld [vmem:[#allocation7 + $0xc8] sm:$0xff]
    %v548 = vld [vmem:[#allocation7 + $0xd0] sm:$0xff]
    %v549 = vld [vmem:[#allocation7 + $0xd8] sm:$0xff]
    %v550 = vld [vmem:[#allocation7 + $0xe0] sm:$0xff]
    %v551 = vld [vmem:[#allocation7 + $0xe8] sm:$0xff]
    %v552 = vld [vmem:[#allocation7 + $0xf0] sm:$0xff]
    %v553 = vld [vmem:[#allocation7 + $0xf8] sm:$0xff]
    %v554 = vld [vmem:[#allocation7 + $0x100] sm:$0xff]
    %v555 = vld [vmem:[#allocation7 + $0x108] sm:$0xff]
    %v556 = vld [vmem:[#allocation7 + $0x110] sm:$0xff]
    %v557 = vld [vmem:[#allocation7 + $0x118] sm:$0xff]
    %v558 = vld [vmem:[#allocation7 + $0x120] sm:$0xff]
    %v559 = vld [vmem:[#allocation7 + $0x128] sm:$0xff]
    %v560 = vld [vmem:[#allocation7 + $0x130] sm:$0xff]
    %v561 = vld [vmem:[#allocation7 + $0x138] sm:$0xff]
    %v562 = vld [vmem:[#allocation7 + $0x140] sm:$0xff]
    %v563 = vld [vmem:[#allocation7 + $0x148] sm:$0xff]
    %v564 = vld [vmem:[#allocation7 + $0x150] sm:$0xff]
    %v565 = vld [vmem:[#allocation7 + $0x158] sm:$0xff]
    %v566 = vld [vmem:[#allocation7 + $0x160] sm:$0xff]
    %v567 = vld [vmem:[#allocation7 + $0x168] sm:$0xff]
    %v568 = vld [vmem:[#allocation7 + $0x170] sm:$0xff]
    %v569 = vld [vmem:[#allocation7 + $0x178] sm:$0xff]
    %v570 = vld [vmem:[#allocation7 + $0x180] sm:$0xff]
    %v571 = vld [vmem:[#allocation7 + $0x188] sm:$0xff]
    %v572 = vld [vmem:[#allocation7 + $0x190] sm:$0xff]
    %v573 = vld [vmem:[#allocation7 + $0x198] sm:$0xff]
    %v574 = vld [vmem:[#allocation7 + $0x1a0] sm:$0xff]
    %v575 = vld [vmem:[#allocation7 + $0x1a8] sm:$0xff]
    %v576 = vld [vmem:[#allocation7 + $0x1b0] sm:$0xff]
    %v577 = vld [vmem:[#allocation7 + $0x1b8] sm:$0xff]
    %v578 = vld [vmem:[#allocation7 + $0x1c0] sm:$0xff]
    %v579 = vld [vmem:[#allocation7 + $0x1c8] sm:$0xff]
    %v580 = vld [vmem:[#allocation7 + $0x1d0] sm:$0xff]
    %v581 = vld [vmem:[#allocation7 + $0x1d8] sm:$0xff]
    %v582 = vld [vmem:[#allocation7 + $0x1e0] sm:$0xff]
    %v583 = vld [vmem:[#allocation7 + $0x1e8] sm:$0xff]
    %v584 = vld [vmem:[#allocation7 + $0x1f0] sm:$0xff]
    %v585 = vld [vmem:[#allocation7 + $0x1f8] sm:$0xff]
    %v586 = vld [vmem:[#allocation7 + $0x200] sm:$0xff]
    %v587 = vld [vmem:[#allocation7 + $0x208] sm:$0xff]
    %v588 = vld [vmem:[#allocation7 + $0x210] sm:$0xff]
    %v589 = vld [vmem:[#allocation7 + $0x218] sm:$0xff]
    %v590 = vld [vmem:[#allocation7 + $0x220] sm:$0xff]
    %v591 = vld [vmem:[#allocation7 + $0x228] sm:$0xff]
    %v592 = vld [vmem:[#allocation7 + $0x230] sm:$0xff]
    %v593 = vld [vmem:[#allocation7 + $0x238] sm:$0xff]
    %v594 = vld [vmem:[#allocation7 + $0x240] sm:$0xff]
    %v595 = vld [vmem:[#allocation7 + $0x248] sm:$0xff]
    %v596 = vld [vmem:[#allocation7 + $0x250] sm:$0xff]
    %v597 = vld [vmem:[#allocation7 + $0x258] sm:$0xff]
    %v598 = vld [vmem:[#allocation7 + $0x260] sm:$0xff]
    %v599 = vld [vmem:[#allocation7 + $0x268] sm:$0xff]
    %v600 = vld [vmem:[#allocation7 + $0x270] sm:$0xff]
    %v601 = vld [vmem:[#allocation7 + $0x278] sm:$0xff]
    %v602 = vld [vmem:[#allocation7 + $0x280] sm:$0xff]
    %v603 = vld [vmem:[#allocation7 + $0x288] sm:$0xff]
    %v604 = vld [vmem:[#allocation7 + $0x290] sm:$0xff]
    %v605 = vld [vmem:[#allocation7 + $0x298] sm:$0xff]
    %v606 = vld [vmem:[#allocation7 + $0x2a0] sm:$0xff]
    %v607 = vld [vmem:[#allocation7 + $0x2a8] sm:$0xff]
    %v608 = vld [vmem:[#allocation7 + $0x2b0] sm:$0xff]
    %v609 = vld [vmem:[#allocation7 + $0x2b8] sm:$0xff]
    %v610 = vld [vmem:[#allocation7 + $0x2c0] sm:$0xff]
    %v611 = vld [vmem:[#allocation7 + $0x2c8] sm:$0xff]
    %v612 = vld [vmem:[#allocation7 + $0x2d0] sm:$0xff]
    %v613 = vld [vmem:[#allocation7 + $0x2d8] sm:$0xff]
    %v614 = vld [vmem:[#allocation7 + $0x2e0] sm:$0xff]
    %v615 = vld [vmem:[#allocation7 + $0x2e8] sm:$0xff]
    %v616 = vld [vmem:[#allocation7 + $0x2f0] sm:$0xff]
    %v617 = vld [vmem:[#allocation7 + $0x2f8] sm:$0xff]
    %v618 = vld [vmem:[#allocation7 + $0x300] sm:$0xff]
    %v619 = vld [vmem:[#allocation7 + $0x308] sm:$0xff]
    %v620 = vld [vmem:[#allocation7 + $0x310] sm:$0xff]
    %v621 = vld [vmem:[#allocation7 + $0x318] sm:$0xff]
    %v622 = vld [vmem:[#allocation7 + $0x320] sm:$0xff]
    %v623 = vld [vmem:[#allocation7 + $0x328] sm:$0xff]
    %v624 = vld [vmem:[#allocation7 + $0x330] sm:$0xff]
    %v625 = vld [vmem:[#allocation7 + $0x338] sm:$0xff]
    %v626 = vld [vmem:[#allocation7 + $0x340] sm:$0xff]
    %v627 = vld [vmem:[#allocation7 + $0x348] sm:$0xff]
    %v628 = vld [vmem:[#allocation7 + $0x350] sm:$0xff]
    %v629 = vld [vmem:[#allocation7 + $0x358] sm:$0xff]
    %v630 = vld [vmem:[#allocation7 + $0x360] sm:$0xff]
    %v631 = vld [vmem:[#allocation7 + $0x368] sm:$0xff]
    %v632 = vld [vmem:[#allocation7 + $0x370] sm:$0xff]
    %v633 = vld [vmem:[#allocation7 + $0x378] sm:$0xff]
    %v634 = vld [vmem:[#allocation7 + $0x380] sm:$0xff]
    %v635 = vld [vmem:[#allocation7 + $0x388] sm:$0xff]
    %v636 = vld [vmem:[#allocation7 + $0x390] sm:$0xff]
    %v637 = vld [vmem:[#allocation7 + $0x398] sm:$0xff]
    %v638 = vld [vmem:[#allocation7 + $0x3a0] sm:$0xff]
    %v639 = vld [vmem:[#allocation7 + $0x3a8] sm:$0xff]
    %v640 = vld [vmem:[#allocation7 + $0x3b0] sm:$0xff]
    %v641 = vld [vmem:[#allocation7 + $0x3b8] sm:$0xff]
    %v642 = vld [vmem:[#allocation7 + $0x3c0] sm:$0xff]
    %v643 = vld [vmem:[#allocation7 + $0x3c8] sm:$0xff]
    %v644 = vld [vmem:[#allocation7 + $0x3d0] sm:$0xff]
    %v645 = vld [vmem:[#allocation7 + $0x3d8] sm:$0xff]
    %v646 = vld [vmem:[#allocation7 + $0x3e0] sm:$0xff]
    %v647 = vld [vmem:[#allocation7 + $0x3e8] sm:$0xff]
    %v648 = vld [vmem:[#allocation7 + $0x3f0] sm:$0xff]
    %v649 = vld [vmem:[#allocation7 + $0x3f8] sm:$0xff]
    %650 = vmatpush.msra.mxu0 %v582
    %651 = vmatpush.msra.mxu0 %v578
    %652 = vmatpush.msra.mxu0 %v574
    %653 = vmatpush.msra.mxu0 %v570
    %654 = vmatpush.msra.mxu0 %v566
    %655 = vmatpush.msra.mxu0 %v562
    %656 = vmatpush.msra.mxu0 %v558
    %657 = vmatpush.msra.mxu0 %v554
    %658 = vmatpush.msra.mxu0 %v550
    %659 = vmatpush.msra.mxu0 %v546
    %660 = vmatpush.msra.mxu0 %v542
    %661 = vmatpush.msra.mxu0 %v538
    %662 = vmatpush.msra.mxu0 %v534
    %663 = vmatpush.msra.mxu0 %v530
    %664 = vmatpush.msra.mxu0 %v526
    %665 = vmatpush.msra.mxu0 %v522
    %666 = vmatmul.f32.gmra.mxu0 %v520
    %v667 = vpop.f32.mrf.mxu0
    %v668 = vadd.f32 0.0, %v667
    %669 = vdwg.mxu0
    %670 = vmatpush.msra.mxu0 %v646
    %671 = vmatpush.msra.mxu0 %v642
    %672 = vmatpush.msra.mxu0 %v638
    %673 = vmatpush.msra.mxu0 %v634
    %674 = vmatpush.msra.mxu0 %v630
    %675 = vmatpush.msra.mxu0 %v626
    %676 = vmatpush.msra.mxu0 %v622
    %677 = vmatpush.msra.mxu0 %v618
    %678 = vmatpush.msra.mxu0 %v614
    %679 = vmatpush.msra.mxu0 %v610
    %680 = vmatpush.msra.mxu0 %v606
    %681 = vmatpush.msra.mxu0 %v602
    %682 = vmatpush.msra.mxu0 %v598
    %683 = vmatpush.msra.mxu0 %v594
    %684 = vmatpush.msra.mxu0 %v590
    %685 = vmatpush.msra.mxu0 %v586
    %686 = vmatmul.f32.gmra.mxu0 %v521
    %v687 = vpop.f32.mrf.mxu0
    %v688 = vadd.f32 %v668, %v687
    %689 = vdwg.mxu0
    %690 = vmatpush.msra.mxu0 %v583
    %691 = vmatpush.msra.mxu0 %v579
    %692 = vmatpush.msra.mxu0 %v575
    %693 = vmatpush.msra.mxu0 %v571
    %694 = vmatpush.msra.mxu0 %v567
    %695 = vmatpush.msra.mxu0 %v563
    %696 = vmatpush.msra.mxu0 %v559
    %697 = vmatpush.msra.mxu0 %v555
    %698 = vmatpush.msra.mxu0 %v551
    %699 = vmatpush.msra.mxu0 %v547
    %700 = vmatpush.msra.mxu0 %v543
    %701 = vmatpush.msra.mxu0 %v539
    %702 = vmatpush.msra.mxu0 %v535
    %703 = vmatpush.msra.mxu0 %v531
    %704 = vmatpush.msra.mxu0 %v527
    %705 = vmatpush.msra.mxu0 %v523
    %706 = vmatmul.f32.gmra.mxu0 %v520
    %v707 = vpop.f32.mrf.mxu0
    %v708 = vadd.f32 0.0, %v707
    %709 = vdwg.mxu0
    %710 = vmatpush.msra.mxu0 %v647
    %711 = vmatpush.msra.mxu0 %v643
    %712 = vmatpush.msra.mxu0 %v639
    %713 = vmatpush.msra.mxu0 %v635
    %714 = vmatpush.msra.mxu0 %v631
    %715 = vmatpush.msra.mxu0 %v627
    %716 = vmatpush.msra.mxu0 %v623
    %717 = vmatpush.msra.mxu0 %v619
    %718 = vmatpush.msra.mxu0 %v615
    %719 = vmatpush.msra.mxu0 %v611
    %720 = vmatpush.msra.mxu0 %v607
    %721 = vmatpush.msra.mxu0 %v603
    %722 = vmatpush.msra.mxu0 %v599
    %723 = vmatpush.msra.mxu0 %v595
    %724 = vmatpush.msra.mxu0 %v591
    %725 = vmatpush.msra.mxu0 %v587
    %726 = vmatmul.f32.gmra.mxu0 %v521
    %v727 = vpop.f32.mrf.mxu0
    %v728 = vadd.f32 %v708, %v727
    %729 = vdwg.mxu0
    %730 = vmatpush.msra.mxu0 %v584
    %731 = vmatpush.msra.mxu0 %v580
    %732 = vmatpush.msra.mxu0 %v576
    %733 = vmatpush.msra.mxu0 %v572
    %734 = vmatpush.msra.mxu0 %v568
    %735 = vmatpush.msra.mxu0 %v564
    %736 = vmatpush.msra.mxu0 %v560
    %737 = vmatpush.msra.mxu0 %v556
    %738 = vmatpush.msra.mxu0 %v552
    %739 = vmatpush.msra.mxu0 %v548
    %740 = vmatpush.msra.mxu0 %v544
    %741 = vmatpush.msra.mxu0 %v540
    %742 = vmatpush.msra.mxu0 %v536
    %743 = vmatpush.msra.mxu0 %v532
    %744 = vmatpush.msra.mxu0 %v528
    %745 = vmatpush.msra.mxu0 %v524
    %746 = vmatmul.f32.gmra.mxu0 %v520
    %v747 = vpop.f32.mrf.mxu0
    %v748 = vadd.f32 0.0, %v747
    %749 = vdwg.mxu0
    %750 = vmatpush.msra.mxu0 %v648
    %751 = vmatpush.msra.mxu0 %v644
    %752 = vmatpush.msra.mxu0 %v640
    %753 = vmatpush.msra.mxu0 %v636
    %754 = vmatpush.msra.mxu0 %v632
    %755 = vmatpush.msra.mxu0 %v628
    %756 = vmatpush.msra.mxu0 %v624
    %757 = vmatpush.msra.mxu0 %v620
    %758 = vmatpush.msra.mxu0 %v616
    %759 = vmatpush.msra.mxu0 %v612
    %760 = vmatpush.msra.mxu0 %v608
    %761 = vmatpush.msra.mxu0 %v604
    %762 = vmatpush.msra.mxu0 %v600
    %763 = vmatpush.msra.mxu0 %v596
    %764 = vmatpush.msra.mxu0 %v592
    %765 = vmatpush.msra.mxu0 %v588
    %766 = vmatmul.f32.gmra.mxu0 %v521
    %v767 = vpop.f32.mrf.mxu0
    %v768 = vadd.f32 %v748, %v767
    %769 = vdwg.mxu0
    %770 = vmatpush.msra.mxu0 %v585
    %771 = vmatpush.msra.mxu0 %v581
    %772 = vmatpush.msra.mxu0 %v577
    %773 = vmatpush.msra.mxu0 %v573
    %774 = vmatpush.msra.mxu0 %v569
    %775 = vmatpush.msra.mxu0 %v565
    %776 = vmatpush.msra.mxu0 %v561
    %777 = vmatpush.msra.mxu0 %v557
    %778 = vmatpush.msra.mxu0 %v553
    %779 = vmatpush.msra.mxu0 %v549
    %780 = vmatpush.msra.mxu0 %v545
    %781 = vmatpush.msra.mxu0 %v541
    %782 = vmatpush.msra.mxu0 %v537
    %783 = vmatpush.msra.mxu0 %v533
    %784 = vmatpush.msra.mxu0 %v529
    %785 = vmatpush.msra.mxu0 %v525
    %786 = vmatmul.f32.gmra.mxu0 %v520
    %v787 = vpop.f32.mrf.mxu0
    %v788 = vadd.f32 0.0, %v787
    %789 = vdwg.mxu0
    %790 = vmatpush.msra.mxu0 %v649
    %791 = vmatpush.msra.mxu0 %v645
    %792 = vmatpush.msra.mxu0 %v641
    %793 = vmatpush.msra.mxu0 %v637
    %794 = vmatpush.msra.mxu0 %v633
    %795 = vmatpush.msra.mxu0 %v629
    %796 = vmatpush.msra.mxu0 %v625
    %797 = vmatpush.msra.mxu0 %v621
    %798 = vmatpush.msra.mxu0 %v617
    %799 = vmatpush.msra.mxu0 %v613
    %800 = vmatpush.msra.mxu0 %v609
    %801 = vmatpush.msra.mxu0 %v605
    %802 = vmatpush.msra.mxu0 %v601
    %803 = vmatpush.msra.mxu0 %v597
    %804 = vmatpush.msra.mxu0 %v593
    %805 = vmatpush.msra.mxu0 %v589
    %806 = vmatmul.f32.gmra.mxu0 %v521
    %v807 = vpop.f32.mrf.mxu0
    %v808 = vadd.f32 %v788, %v807
    %809 = vdwg.mxu0
    %v810 = vld [vmem:[%s4] sm:$0x7]
    %v812 = vperm.slane %v810, 0
    %v813 = vperm.slane %v810, 1
    %v814 = vperm.slane %v810, 2
    %v818 = vadd.f32 %v688, %v812
    %v819 = vadd.f32 %v728, %v813
    %v820 = vadd.f32 %v768, %v814
    %v821 = vld [vmem:[%s5] sm:$0x1]
    %v823 = vperm.slane %v821, 0
    %v825 = vadd.f32 %v808, %v823
    %v826 = vxor.u32 %v818, 2147483648
    %v827 = vmul.f32 %v826, 1.442695
    %v828 = vpow.pop %v827
    %v829 = vadd.f32 %v828, 1.0
    %v830 = vrcp.pop %v829
    %v831 = vmul.f32 %v829, %v830
    %v832 = vsub.f32 1.0, %v831
    %v833 = vmul.f32 %v830, %v832
    %v834 = vadd.f32 %v830, %v833
    %vm835 = vweird.f32 %v829
    %vm836 = vweird.f32 %v830
    %vm837 = vmor %vm835, %vm836
    %v838 = vsel %vm837, %v830, %v834
    %v839 = vand.u32 2147483647, %v829
    %vm840 = vcmp.eq.f32.partialorder %v839, 8.507059e+37
    %v841 = vand.u32 %v829, 2147483648
    %v842 = vor.u32 1.1754944e-38, %v841
    %v843 = vsel %vm840, %v842, %v838
    %v844 = vmul.f32 1.0, %v843
    %v845 = vxor.u32 %v819, 2147483648
    %v846 = vmul.f32 %v845, 1.442695
    %v847 = vpow.pop %v846
    %v848 = vadd.f32 %v847, 1.0
    %v849 = vrcp.pop %v848
    %v850 = vmul.f32 %v848, %v849
    %v851 = vsub.f32 1.0, %v850
    %v852 = vmul.f32 %v849, %v851
    %v853 = vadd.f32 %v849, %v852
    %vm854 = vweird.f32 %v848
    %vm855 = vweird.f32 %v849
    %vm856 = vmor %vm854, %vm855
    %v857 = vsel %vm856, %v849, %v853
    %v858 = vand.u32 2147483647, %v848
    %vm859 = vcmp.eq.f32.partialorder %v858, 8.507059e+37
    %v860 = vand.u32 %v848, 2147483648
    %v861 = vor.u32 1.1754944e-38, %v860
    %v862 = vsel %vm859, %v861, %v857
    %v863 = vmul.f32 1.0, %v862
    %v864 = vtanh.pop %v820
    %v865 = vxor.u32 %v825, 2147483648
    %v866 = vmul.f32 %v865, 1.442695
    %v867 = vpow.pop %v866
    %v868 = vadd.f32 %v867, 1.0
    %v869 = vrcp.pop %v868
    %v870 = vmul.f32 %v868, %v869
    %v871 = vsub.f32 1.0, %v870
    %v872 = vmul.f32 %v869, %v871
    %v873 = vadd.f32 %v869, %v872
    %vm874 = vweird.f32 %v868
    %vm875 = vweird.f32 %v869
    %vm876 = vmor %vm874, %vm875
    %v877 = vsel %vm876, %v869, %v873
    %v878 = vand.u32 2147483647, %v868
    %vm879 = vcmp.eq.f32.partialorder %v878, 8.507059e+37
    %v880 = vand.u32 %v868, 2147483648
    %v881 = vor.u32 1.1754944e-38, %v880
    %v882 = vsel %vm879, %v881, %v877
    %v883 = vmul.f32 1.0, %v882
    %v884 = vmul.f32 %v844, %v864
    %v885 = vld [vmem:[#allocation3] sm:$0xf]
    %v887 = vrot.slane %v885, 7
    %v889 = vmul.f32 %v883, %v887
    %v891 = vrot.slane %v889, 1
    %v893 = vsel %vm467, %v891, 0.0
    %v894 = vrot.slane %v893, 4
    %v895 = vadd.f32 %v893, %v894
    %v896 = vrot.slane %v895, 2
    %v897 = vadd.f32 %v895, %v896
    %v898 = vrot.slane %v897, 1
    %v899 = vadd.f32 %v897, %v898
    %v900 = vadd.f32 %v884, %v899
    %v901 = vtanh.pop %v900
    %v902 = vmul.f32 %v863, %v901
    %s903 = scalar_lea.vmem %s6, %s482
    %904 = vst [vmem:[%s903] sm:$0x1] %v900
    %s905 = scalar_lea.vmem %s7, %s482
    %906 = vst [vmem:[%s905] sm:$0x1] %v902
    %s907 = sld [smem:[#allocation5 + $0x2]]
    %s908 = scalar_lea.vmem %s2, %s907
    %v909 = vld [vmem:[%s908] sm:$0x1]
    %v910 = vperm.slane %v909, 0
    %911 = vst [vmem:[#allocation2] sm:$0x1f] %v910
    %s912 = sld [smem:[#allocation6 + $0x8]]
    %s913 = scalar_lea.vmem %s7, %s912
    %v914 = vld [vmem:[%s913] sm:$0x1]
    %915 = vst [vmem:[#allocation2 + $0x9] sm:$0x1] %v914
    %s916 = scalar_lea.vmem %s6, %s912
    %v917 = vld [vmem:[%s916] sm:$0x1]
    %918 = vst [vmem:[#allocation3] sm:$0x1] %v917
    %v919 = vadd.f32 %v914, 0.0
    %s920 = sld [smem:[#allocation6 + $0x9]]
    %s921 = scalar_lea.vmem %s7, %s920
    %v922 = vld [vmem:[%s921] sm:$0x1]
    %923 = vst [vmem:[#allocation2 + $0xa] sm:$0x1] %v922
    %s924 = scalar_lea.vmem %s6, %s920
    %v925 = vld [vmem:[%s924] sm:$0x1]
    %926 = vst [vmem:[#allocation3 + $0x1] sm:$0x1] %v925
    %v927 = vadd.f32 %v919, %v922
    %s928 = sld [smem:[#allocation6 + $0xa]]
    %s929 = scalar_lea.vmem %s7, %s928
    %v930 = vld [vmem:[%s929] sm:$0x1]
    %931 = vst [vmem:[#allocation2 + $0xb] sm:$0x1] %v930
    %s932 = scalar_lea.vmem %s6, %s928
    %v933 = vld [vmem:[%s932] sm:$0x1]
    %934 = vst [vmem:[#allocation3 + $0x2] sm:$0x1] %v933
    %v935 = vadd.f32 %v927, %v930
    %s936 = sld [smem:[#allocation6 + $0xb]]
    %s937 = scalar_lea.vmem %s7, %s936
    %v938 = vld [vmem:[%s937] sm:$0x1]
    %939 = vst [vmem:[#allocation2 + $0xc] sm:$0x1] %v938
    %s940 = scalar_lea.vmem %s6, %s936
    %v941 = vld [vmem:[%s940] sm:$0x1]
    %942 = vst [vmem:[#allocation3 + $0x3] sm:$0x1] %v941
    %v943 = vadd.f32 %v935, %v938
    %944 = vst [vmem:[#allocation2 + $0x8] sm:$0x1] %v943
    %v945 = vld [vmem:[#allocation2] sm:$0x1f]
    %v946 = vld [vmem:[#allocation2 + $0x8] sm:$0x1f]
    %v947 = vld [vmem:[#allocation7] sm:$0xff]
    %v948 = vld [vmem:[#allocation7 + $0x8] sm:$0xff]
    %v949 = vld [vmem:[#allocation7 + $0x10] sm:$0xff]
    %v950 = vld [vmem:[#allocation7 + $0x18] sm:$0xff]
    %v951 = vld [vmem:[#allocation7 + $0x20] sm:$0xff]
    %v952 = vld [vmem:[#allocation7 + $0x28] sm:$0xff]
    %v953 = vld [vmem:[#allocation7 + $0x30] sm:$0xff]
    %v954 = vld [vmem:[#allocation7 + $0x38] sm:$0xff]
    %v955 = vld [vmem:[#allocation7 + $0x40] sm:$0xff]
    %v956 = vld [vmem:[#allocation7 + $0x48] sm:$0xff]
    %v957 = vld [vmem:[#allocation7 + $0x50] sm:$0xff]
    %v958 = vld [vmem:[#allocation7 + $0x58] sm:$0xff]
    %v959 = vld [vmem:[#allocation7 + $0x60] sm:$0xff]
    %v960 = vld [vmem:[#allocation7 + $0x68] sm:$0xff]
    %v961 = vld [vmem:[#allocation7 + $0x70] sm:$0xff]
    %v962 = vld [vmem:[#allocation7 + $0x78] sm:$0xff]
    %v963 = vld [vmem:[#allocation7 + $0x80] sm:$0xff]
    %v964 = vld [vmem:[#allocation7 + $0x88] sm:$0xff]
    %v965 = vld [vmem:[#allocation7 + $0x90] sm:$0xff]
    %v966 = vld [vmem:[#allocation7 + $0x98] sm:$0xff]
    %v967 = vld [vmem:[#allocation7 + $0xa0] sm:$0xff]
    %v968 = vld [vmem:[#allocation7 + $0xa8] sm:$0xff]
    %v969 = vld [vmem:[#allocation7 + $0xb0] sm:$0xff]
    %v970 = vld [vmem:[#allocation7 + $0xb8] sm:$0xff]
    %v971 = vld [vmem:[#allocation7 + $0xc0] sm:$0xff]
    %v972 = vld [vmem:[#allocation7 + $0xc8] sm:$0xff]
    %v973 = vld [vmem:[#allocation7 + $0xd0] sm:$0xff]
    %v974 = vld [vmem:[#allocation7 + $0xd8] sm:$0xff]
    %v975 = vld [vmem:[#allocation7 + $0xe0] sm:$0xff]
    %v976 = vld [vmem:[#allocation7 + $0xe8] sm:$0xff]
    %v977 = vld [vmem:[#allocation7 + $0xf0] sm:$0xff]
    %v978 = vld [vmem:[#allocation7 + $0xf8] sm:$0xff]
    %v979 = vld [vmem:[#allocation7 + $0x100] sm:$0xff]
    %v980 = vld [vmem:[#allocation7 + $0x108] sm:$0xff]
    %v981 = vld [vmem:[#allocation7 + $0x110] sm:$0xff]
    %v982 = vld [vmem:[#allocation7 + $0x118] sm:$0xff]
    %v983 = vld [vmem:[#allocation7 + $0x120] sm:$0xff]
    %v984 = vld [vmem:[#allocation7 + $0x128] sm:$0xff]
    %v985 = vld [vmem:[#allocation7 + $0x130] sm:$0xff]
    %v986 = vld [vmem:[#allocation7 + $0x138] sm:$0xff]
    %v987 = vld [vmem:[#allocation7 + $0x140] sm:$0xff]
    %v988 = vld [vmem:[#allocation7 + $0x148] sm:$0xff]
    %v989 = vld [vmem:[#allocation7 + $0x150] sm:$0xff]
    %v990 = vld [vmem:[#allocation7 + $0x158] sm:$0xff]
    %v991 = vld [vmem:[#allocation7 + $0x160] sm:$0xff]
    %v992 = vld [vmem:[#allocation7 + $0x168] sm:$0xff]
    %v993 = vld [vmem:[#allocation7 + $0x170] sm:$0xff]
    %v994 = vld [vmem:[#allocation7 + $0x178] sm:$0xff]
    %v995 = vld [vmem:[#allocation7 + $0x180] sm:$0xff]
    %v996 = vld [vmem:[#allocation7 + $0x188] sm:$0xff]
    %v997 = vld [vmem:[#allocation7 + $0x190] sm:$0xff]
    %v998 = vld [vmem:[#allocation7 + $0x198] sm:$0xff]
    %v999 = vld [vmem:[#allocation7 + $0x1a0] sm:$0xff]
    %v1000 = vld [vmem:[#allocation7 + $0x1a8] sm:$0xff]
    %v1001 = vld [vmem:[#allocation7 + $0x1b0] sm:$0xff]
    %v1002 = vld [vmem:[#allocation7 + $0x1b8] sm:$0xff]
    %v1003 = vld [vmem:[#allocation7 + $0x1c0] sm:$0xff]
    %v1004 = vld [vmem:[#allocation7 + $0x1c8] sm:$0xff]
    %v1005 = vld [vmem:[#allocation7 + $0x1d0] sm:$0xff]
    %v1006 = vld [vmem:[#allocation7 + $0x1d8] sm:$0xff]
    %v1007 = vld [vmem:[#allocation7 + $0x1e0] sm:$0xff]
    %v1008 = vld [vmem:[#allocation7 + $0x1e8] sm:$0xff]
    %v1009 = vld [vmem:[#allocation7 + $0x1f0] sm:$0xff]
    %v1010 = vld [vmem:[#allocation7 + $0x1f8] sm:$0xff]
    %v1011 = vld [vmem:[#allocation7 + $0x200] sm:$0xff]
    %v1012 = vld [vmem:[#allocation7 + $0x208] sm:$0xff]
    %v1013 = vld [vmem:[#allocation7 + $0x210] sm:$0xff]
    %v1014 = vld [vmem:[#allocation7 + $0x218] sm:$0xff]
    %v1015 = vld [vmem:[#allocation7 + $0x220] sm:$0xff]
    %v1016 = vld [vmem:[#allocation7 + $0x228] sm:$0xff]
    %v1017 = vld [vmem:[#allocation7 + $0x230] sm:$0xff]
    %v1018 = vld [vmem:[#allocation7 + $0x238] sm:$0xff]
    %v1019 = vld [vmem:[#allocation7 + $0x240] sm:$0xff]
    %v1020 = vld [vmem:[#allocation7 + $0x248] sm:$0xff]
    %v1021 = vld [vmem:[#allocation7 + $0x250] sm:$0xff]
    %v1022 = vld [vmem:[#allocation7 + $0x258] sm:$0xff]
    %v1023 = vld [vmem:[#allocation7 + $0x260] sm:$0xff]
    %v1024 = vld [vmem:[#allocation7 + $0x268] sm:$0xff]
    %v1025 = vld [vmem:[#allocation7 + $0x270] sm:$0xff]
    %v1026 = vld [vmem:[#allocation7 + $0x278] sm:$0xff]
    %v1027 = vld [vmem:[#allocation7 + $0x280] sm:$0xff]
    %v1028 = vld [vmem:[#allocation7 + $0x288] sm:$0xff]
    %v1029 = vld [vmem:[#allocation7 + $0x290] sm:$0xff]
    %v1030 = vld [vmem:[#allocation7 + $0x298] sm:$0xff]
    %v1031 = vld [vmem:[#allocation7 + $0x2a0] sm:$0xff]
    %v1032 = vld [vmem:[#allocation7 + $0x2a8] sm:$0xff]
    %v1033 = vld [vmem:[#allocation7 + $0x2b0] sm:$0xff]
    %v1034 = vld [vmem:[#allocation7 + $0x2b8] sm:$0xff]
    %v1035 = vld [vmem:[#allocation7 + $0x2c0] sm:$0xff]
    %v1036 = vld [vmem:[#allocation7 + $0x2c8] sm:$0xff]
    %v1037 = vld [vmem:[#allocation7 + $0x2d0] sm:$0xff]
    %v1038 = vld [vmem:[#allocation7 + $0x2d8] sm:$0xff]
    %v1039 = vld [vmem:[#allocation7 + $0x2e0] sm:$0xff]
    %v1040 = vld [vmem:[#allocation7 + $0x2e8] sm:$0xff]
    %v1041 = vld [vmem:[#allocation7 + $0x2f0] sm:$0xff]
    %v1042 = vld [vmem:[#allocation7 + $0x2f8] sm:$0xff]
    %v1043 = vld [vmem:[#allocation7 + $0x300] sm:$0xff]
    %v1044 = vld [vmem:[#allocation7 + $0x308] sm:$0xff]
    %v1045 = vld [vmem:[#allocation7 + $0x310] sm:$0xff]
    %v1046 = vld [vmem:[#allocation7 + $0x318] sm:$0xff]
    %v1047 = vld [vmem:[#allocation7 + $0x320] sm:$0xff]
    %v1048 = vld [vmem:[#allocation7 + $0x328] sm:$0xff]
    %v1049 = vld [vmem:[#allocation7 + $0x330] sm:$0xff]
    %v1050 = vld [vmem:[#allocation7 + $0x338] sm:$0xff]
    %v1051 = vld [vmem:[#allocation7 + $0x340] sm:$0xff]
    %v1052 = vld [vmem:[#allocation7 + $0x348] sm:$0xff]
    %v1053 = vld [vmem:[#allocation7 + $0x350] sm:$0xff]
    %v1054 = vld [vmem:[#allocation7 + $0x358] sm:$0xff]
    %v1055 = vld [vmem:[#allocation7 + $0x360] sm:$0xff]
    %v1056 = vld [vmem:[#allocation7 + $0x368] sm:$0xff]
    %v1057 = vld [vmem:[#allocation7 + $0x370] sm:$0xff]
    %v1058 = vld [vmem:[#allocation7 + $0x378] sm:$0xff]
    %v1059 = vld [vmem:[#allocation7 + $0x380] sm:$0xff]
    %v1060 = vld [vmem:[#allocation7 + $0x388] sm:$0xff]
    %v1061 = vld [vmem:[#allocation7 + $0x390] sm:$0xff]
    %v1062 = vld [vmem:[#allocation7 + $0x398] sm:$0xff]
    %v1063 = vld [vmem:[#allocation7 + $0x3a0] sm:$0xff]
    %v1064 = vld [vmem:[#allocation7 + $0x3a8] sm:$0xff]
    %v1065 = vld [vmem:[#allocation7 + $0x3b0] sm:$0xff]
    %v1066 = vld [vmem:[#allocation7 + $0x3b8] sm:$0xff]
    %v1067 = vld [vmem:[#allocation7 + $0x3c0] sm:$0xff]
    %v1068 = vld [vmem:[#allocation7 + $0x3c8] sm:$0xff]
    %v1069 = vld [vmem:[#allocation7 + $0x3d0] sm:$0xff]
    %v1070 = vld [vmem:[#allocation7 + $0x3d8] sm:$0xff]
    %v1071 = vld [vmem:[#allocation7 + $0x3e0] sm:$0xff]
    %v1072 = vld [vmem:[#allocation7 + $0x3e8] sm:$0xff]
    %v1073 = vld [vmem:[#allocation7 + $0x3f0] sm:$0xff]
    %v1074 = vld [vmem:[#allocation7 + $0x3f8] sm:$0xff]
    %1075 = vmatpush.msra.mxu0 %v1007
    %1076 = vmatpush.msra.mxu0 %v1003
    %1077 = vmatpush.msra.mxu0 %v999
    %1078 = vmatpush.msra.mxu0 %v995
    %1079 = vmatpush.msra.mxu0 %v991
    %1080 = vmatpush.msra.mxu0 %v987
    %1081 = vmatpush.msra.mxu0 %v983
    %1082 = vmatpush.msra.mxu0 %v979
    %1083 = vmatpush.msra.mxu0 %v975
    %1084 = vmatpush.msra.mxu0 %v971
    %1085 = vmatpush.msra.mxu0 %v967
    %1086 = vmatpush.msra.mxu0 %v963
    %1087 = vmatpush.msra.mxu0 %v959
    %1088 = vmatpush.msra.mxu0 %v955
    %1089 = vmatpush.msra.mxu0 %v951
    %1090 = vmatpush.msra.mxu0 %v947
    %1091 = vmatmul.f32.gmra.mxu0 %v945
    %v1092 = vpop.f32.mrf.mxu0
    %v1093 = vadd.f32 0.0, %v1092
    %1094 = vdwg.mxu0
    %1095 = vmatpush.msra.mxu0 %v1071
    %1096 = vmatpush.msra.mxu0 %v1067
    %1097 = vmatpush.msra.mxu0 %v1063
    %1098 = vmatpush.msra.mxu0 %v1059
    %1099 = vmatpush.msra.mxu0 %v1055
    %1100 = vmatpush.msra.mxu0 %v1051
    %1101 = vmatpush.msra.mxu0 %v1047
    %1102 = vmatpush.msra.mxu0 %v1043
    %1103 = vmatpush.msra.mxu0 %v1039
    %1104 = vmatpush.msra.mxu0 %v1035
    %1105 = vmatpush.msra.mxu0 %v1031
    %1106 = vmatpush.msra.mxu0 %v1027
    %1107 = vmatpush.msra.mxu0 %v1023
    %1108 = vmatpush.msra.mxu0 %v1019
    %1109 = vmatpush.msra.mxu0 %v1015
    %1110 = vmatpush.msra.mxu0 %v1011
    %1111 = vmatmul.f32.gmra.mxu0 %v946
    %v1112 = vpop.f32.mrf.mxu0
    %v1113 = vadd.f32 %v1093, %v1112
    %1114 = vdwg.mxu0
    %1115 = vmatpush.msra.mxu0 %v1008
    %1116 = vmatpush.msra.mxu0 %v1004
    %1117 = vmatpush.msra.mxu0 %v1000
    %1118 = vmatpush.msra.mxu0 %v996
    %1119 = vmatpush.msra.mxu0 %v992
    %1120 = vmatpush.msra.mxu0 %v988
    %1121 = vmatpush.msra.mxu0 %v984
    %1122 = vmatpush.msra.mxu0 %v980
    %1123 = vmatpush.msra.mxu0 %v976
    %1124 = vmatpush.msra.mxu0 %v972
    %1125 = vmatpush.msra.mxu0 %v968
    %1126 = vmatpush.msra.mxu0 %v964
    %1127 = vmatpush.msra.mxu0 %v960
    %1128 = vmatpush.msra.mxu0 %v956
    %1129 = vmatpush.msra.mxu0 %v952
    %1130 = vmatpush.msra.mxu0 %v948
    %1131 = vmatmul.f32.gmra.mxu0 %v945
    %v1132 = vpop.f32.mrf.mxu0
    %v1133 = vadd.f32 0.0, %v1132
    %1134 = vdwg.mxu0
    %1135 = vmatpush.msra.mxu0 %v1072
    %1136 = vmatpush.msra.mxu0 %v1068
    %1137 = vmatpush.msra.mxu0 %v1064
    %1138 = vmatpush.msra.mxu0 %v1060
    %1139 = vmatpush.msra.mxu0 %v1056
    %1140 = vmatpush.msra.mxu0 %v1052
    %1141 = vmatpush.msra.mxu0 %v1048
    %1142 = vmatpush.msra.mxu0 %v1044
    %1143 = vmatpush.msra.mxu0 %v1040
    %1144 = vmatpush.msra.mxu0 %v1036
    %1145 = vmatpush.msra.mxu0 %v1032
    %1146 = vmatpush.msra.mxu0 %v1028
    %1147 = vmatpush.msra.mxu0 %v1024
    %1148 = vmatpush.msra.mxu0 %v1020
    %1149 = vmatpush.msra.mxu0 %v1016
    %1150 = vmatpush.msra.mxu0 %v1012
    %1151 = vmatmul.f32.gmra.mxu0 %v946
    %v1152 = vpop.f32.mrf.mxu0
    %v1153 = vadd.f32 %v1133, %v1152
    %1154 = vdwg.mxu0
    %1155 = vmatpush.msra.mxu0 %v1009
    %1156 = vmatpush.msra.mxu0 %v1005
    %1157 = vmatpush.msra.mxu0 %v1001
    %1158 = vmatpush.msra.mxu0 %v997
    %1159 = vmatpush.msra.mxu0 %v993
    %1160 = vmatpush.msra.mxu0 %v989
    %1161 = vmatpush.msra.mxu0 %v985
    %1162 = vmatpush.msra.mxu0 %v981
    %1163 = vmatpush.msra.mxu0 %v977
    %1164 = vmatpush.msra.mxu0 %v973
    %1165 = vmatpush.msra.mxu0 %v969
    %1166 = vmatpush.msra.mxu0 %v965
    %1167 = vmatpush.msra.mxu0 %v961
    %1168 = vmatpush.msra.mxu0 %v957
    %1169 = vmatpush.msra.mxu0 %v953
    %1170 = vmatpush.msra.mxu0 %v949
    %1171 = vmatmul.f32.gmra.mxu0 %v945
    %v1172 = vpop.f32.mrf.mxu0
    %v1173 = vadd.f32 0.0, %v1172
    %1174 = vdwg.mxu0
    %1175 = vmatpush.msra.mxu0 %v1073
    %1176 = vmatpush.msra.mxu0 %v1069
    %1177 = vmatpush.msra.mxu0 %v1065
    %1178 = vmatpush.msra.mxu0 %v1061
    %1179 = vmatpush.msra.mxu0 %v1057
    %1180 = vmatpush.msra.mxu0 %v1053
    %1181 = vmatpush.msra.mxu0 %v1049
    %1182 = vmatpush.msra.mxu0 %v1045
    %1183 = vmatpush.msra.mxu0 %v1041
    %1184 = vmatpush.msra.mxu0 %v1037
    %1185 = vmatpush.msra.mxu0 %v1033
    %1186 = vmatpush.msra.mxu0 %v1029
    %1187 = vmatpush.msra.mxu0 %v1025
    %1188 = vmatpush.msra.mxu0 %v1021
    %1189 = vmatpush.msra.mxu0 %v1017
    %1190 = vmatpush.msra.mxu0 %v1013
    %1191 = vmatmul.f32.gmra.mxu0 %v946
    %v1192 = vpop.f32.mrf.mxu0
    %v1193 = vadd.f32 %v1173, %v1192
    %1194 = vdwg.mxu0
    %1195 = vmatpush.msra.mxu0 %v1010
    %1196 = vmatpush.msra.mxu0 %v1006
    %1197 = vmatpush.msra.mxu0 %v1002
    %1198 = vmatpush.msra.mxu0 %v998
    %1199 = vmatpush.msra.mxu0 %v994
    %1200 = vmatpush.msra.mxu0 %v990
    %1201 = vmatpush.msra.mxu0 %v986
    %1202 = vmatpush.msra.mxu0 %v982
    %1203 = vmatpush.msra.mxu0 %v978
    %1204 = vmatpush.msra.mxu0 %v974
    %1205 = vmatpush.msra.mxu0 %v970
    %1206 = vmatpush.msra.mxu0 %v966
    %1207 = vmatpush.msra.mxu0 %v962
    %1208 = vmatpush.msra.mxu0 %v958
    %1209 = vmatpush.msra.mxu0 %v954
    %1210 = vmatpush.msra.mxu0 %v950
    %1211 = vmatmul.f32.gmra.mxu0 %v945
    %v1212 = vpop.f32.mrf.mxu0
    %v1213 = vadd.f32 0.0, %v1212
    %1214 = vdwg.mxu0
    %1215 = vmatpush.msra.mxu0 %v1074
    %1216 = vmatpush.msra.mxu0 %v1070
    %1217 = vmatpush.msra.mxu0 %v1066
    %1218 = vmatpush.msra.mxu0 %v1062
    %1219 = vmatpush.msra.mxu0 %v1058
    %1220 = vmatpush.msra.mxu0 %v1054
    %1221 = vmatpush.msra.mxu0 %v1050
    %1222 = vmatpush.msra.mxu0 %v1046
    %1223 = vmatpush.msra.mxu0 %v1042
    %1224 = vmatpush.msra.mxu0 %v1038
    %1225 = vmatpush.msra.mxu0 %v1034
    %1226 = vmatpush.msra.mxu0 %v1030
    %1227 = vmatpush.msra.mxu0 %v1026
    %1228 = vmatpush.msra.mxu0 %v1022
    %1229 = vmatpush.msra.mxu0 %v1018
    %1230 = vmatpush.msra.mxu0 %v1014
    %1231 = vmatmul.f32.gmra.mxu0 %v946
    %v1232 = vpop.f32.mrf.mxu0
    %v1233 = vadd.f32 %v1213, %v1232
    %1234 = vdwg.mxu0
    %v1235 = vld [vmem:[%s4] sm:$0x7]
    %v1237 = vperm.slane %v1235, 0
    %v1238 = vperm.slane %v1235, 1
    %v1239 = vperm.slane %v1235, 2
    %v1243 = vadd.f32 %v1113, %v1237
    %v1244 = vadd.f32 %v1153, %v1238
    %v1245 = vadd.f32 %v1193, %v1239
    %v1246 = vld [vmem:[%s5] sm:$0x1]
    %v1248 = vperm.slane %v1246, 0
    %v1250 = vadd.f32 %v1233, %v1248
    %v1251 = vxor.u32 %v1243, 2147483648
    %v1252 = vmul.f32 %v1251, 1.442695
    %v1253 = vpow.pop %v1252
    %v1254 = vadd.f32 %v1253, 1.0
    %v1255 = vrcp.pop %v1254
    %v1256 = vmul.f32 %v1254, %v1255
    %v1257 = vsub.f32 1.0, %v1256
    %v1258 = vmul.f32 %v1255, %v1257
    %v1259 = vadd.f32 %v1255, %v1258
    %vm1260 = vweird.f32 %v1254
    %vm1261 = vweird.f32 %v1255
    %vm1262 = vmor %vm1260, %vm1261
    %v1263 = vsel %vm1262, %v1255, %v1259
    %v1264 = vand.u32 2147483647, %v1254
    %vm1265 = vcmp.eq.f32.partialorder %v1264, 8.507059e+37
    %v1266 = vand.u32 %v1254, 2147483648
    %v1267 = vor.u32 1.1754944e-38, %v1266
    %v1268 = vsel %vm1265, %v1267, %v1263
    %v1269 = vmul.f32 1.0, %v1268
    %v1270 = vxor.u32 %v1244, 2147483648
    %v1271 = vmul.f32 %v1270, 1.442695
    %v1272 = vpow.pop %v1271
    %v1273 = vadd.f32 %v1272, 1.0
    %v1274 = vrcp.pop %v1273
    %v1275 = vmul.f32 %v1273, %v1274
    %v1276 = vsub.f32 1.0, %v1275
    %v1277 = vmul.f32 %v1274, %v1276
    %v1278 = vadd.f32 %v1274, %v1277
    %vm1279 = vweird.f32 %v1273
    %vm1280 = vweird.f32 %v1274
    %vm1281 = vmor %vm1279, %vm1280
    %v1282 = vsel %vm1281, %v1274, %v1278
    %v1283 = vand.u32 2147483647, %v1273
    %vm1284 = vcmp.eq.f32.partialorder %v1283, 8.507059e+37
    %v1285 = vand.u32 %v1273, 2147483648
    %v1286 = vor.u32 1.1754944e-38, %v1285
    %v1287 = vsel %vm1284, %v1286, %v1282
    %v1288 = vmul.f32 1.0, %v1287
    %v1289 = vtanh.pop %v1245
    %v1290 = vxor.u32 %v1250, 2147483648
    %v1291 = vmul.f32 %v1290, 1.442695
    %v1292 = vpow.pop %v1291
    %v1293 = vadd.f32 %v1292, 1.0
    %v1294 = vrcp.pop %v1293
    %v1295 = vmul.f32 %v1293, %v1294
    %v1296 = vsub.f32 1.0, %v1295
    %v1297 = vmul.f32 %v1294, %v1296
    %v1298 = vadd.f32 %v1294, %v1297
    %vm1299 = vweird.f32 %v1293
    %vm1300 = vweird.f32 %v1294
    %vm1301 = vmor %vm1299, %vm1300
    %v1302 = vsel %vm1301, %v1294, %v1298
    %v1303 = vand.u32 2147483647, %v1293
    %vm1304 = vcmp.eq.f32.partialorder %v1303, 8.507059e+37
    %v1305 = vand.u32 %v1293, 2147483648
    %v1306 = vor.u32 1.1754944e-38, %v1305
    %v1307 = vsel %vm1304, %v1306, %v1302
    %v1308 = vmul.f32 1.0, %v1307
    %v1309 = vmul.f32 %v1269, %v1289
    %v1310 = vld [vmem:[#allocation3] sm:$0xf]
    %v1312 = vrot.slane %v1310, 7
    %v1314 = vmul.f32 %v1308, %v1312
    %v1316 = vrot.slane %v1314, 1
    %v1318 = vsel %vm467, %v1316, 0.0
    %v1319 = vrot.slane %v1318, 4
    %v1320 = vadd.f32 %v1318, %v1319
    %v1321 = vrot.slane %v1320, 2
    %v1322 = vadd.f32 %v1320, %v1321
    %v1323 = vrot.slane %v1322, 1
    %v1324 = vadd.f32 %v1322, %v1323
    %v1325 = vadd.f32 %v1309, %v1324
    %v1326 = vtanh.pop %v1325
    %v1327 = vmul.f32 %v1288, %v1326
    %s1328 = scalar_lea.vmem %s6, %s907
    %1329 = vst [vmem:[%s1328] sm:$0x1] %v1325
    %s1330 = scalar_lea.vmem %s7, %s907
    %1331 = vst [vmem:[%s1330] sm:$0x1] %v1327
    %s1332 = sld [smem:[#allocation5 + $0x3]]
    %s1333 = scalar_lea.vmem %s2, %s1332
    %v1334 = vld [vmem:[%s1333] sm:$0x1]
    %v1335 = vperm.slane %v1334, 0
    %1336 = vst [vmem:[#allocation2] sm:$0x1f] %v1335
    %s1337 = sld [smem:[#allocation6 + $0xc]]
    %s1338 = scalar_lea.vmem %s7, %s1337
    %v1339 = vld [vmem:[%s1338] sm:$0x1]
    %1340 = vst [vmem:[#allocation2 + $0x9] sm:$0x1] %v1339
    %s1341 = scalar_lea.vmem %s6, %s1337
    %v1342 = vld [vmem:[%s1341] sm:$0x1]
    %1343 = vst [vmem:[#allocation3] sm:$0x1] %v1342
    %v1344 = vadd.f32 %v1339, 0.0
    %s1345 = sld [smem:[#allocation6 + $0xd]]
    %s1346 = scalar_lea.vmem %s7, %s1345
    %v1347 = vld [vmem:[%s1346] sm:$0x1]
    %1348 = vst [vmem:[#allocation2 + $0xa] sm:$0x1] %v1347
    %s1349 = scalar_lea.vmem %s6, %s1345
    %v1350 = vld [vmem:[%s1349] sm:$0x1]
    %1351 = vst [vmem:[#allocation3 + $0x1] sm:$0x1] %v1350
    %v1352 = vadd.f32 %v1344, %v1347
    %s1353 = sld [smem:[#allocation6 + $0xe]]
    %s1354 = scalar_lea.vmem %s7, %s1353
    %v1355 = vld [vmem:[%s1354] sm:$0x1]
    %1356 = vst [vmem:[#allocation2 + $0xb] sm:$0x1] %v1355
    %s1357 = scalar_lea.vmem %s6, %s1353
    %v1358 = vld [vmem:[%s1357] sm:$0x1]
    %1359 = vst [vmem:[#allocation3 + $0x2] sm:$0x1] %v1358
    %v1360 = vadd.f32 %v1352, %v1355
    %s1361 = sld [smem:[#allocation6 + $0xf]]
    %s1362 = scalar_lea.vmem %s7, %s1361
    %v1363 = vld [vmem:[%s1362] sm:$0x1]
    %1364 = vst [vmem:[#allocation2 + $0xc] sm:$0x1] %v1363
    %s1365 = scalar_lea.vmem %s6, %s1361
    %v1366 = vld [vmem:[%s1365] sm:$0x1]
    %1367 = vst [vmem:[#allocation3 + $0x3] sm:$0x1] %v1366
    %v1368 = vadd.f32 %v1360, %v1363
    %1369 = vst [vmem:[#allocation2 + $0x8] sm:$0x1] %v1368
    %v1370 = vld [vmem:[#allocation2] sm:$0x1f]
    %v1371 = vld [vmem:[#allocation2 + $0x8] sm:$0x1f]
    %v1372 = vld [vmem:[#allocation7] sm:$0xff]
    %v1373 = vld [vmem:[#allocation7 + $0x8] sm:$0xff]
    %v1374 = vld [vmem:[#allocation7 + $0x10] sm:$0xff]
    %v1375 = vld [vmem:[#allocation7 + $0x18] sm:$0xff]
    %v1376 = vld [vmem:[#allocation7 + $0x20] sm:$0xff]
    %v1377 = vld [vmem:[#allocation7 + $0x28] sm:$0xff]
    %v1378 = vld [vmem:[#allocation7 + $0x30] sm:$0xff]
    %v1379 = vld [vmem:[#allocation7 + $0x38] sm:$0xff]
    %v1380 = vld [vmem:[#allocation7 + $0x40] sm:$0xff]
    %v1381 = vld [vmem:[#allocation7 + $0x48] sm:$0xff]
    %v1382 = vld [vmem:[#allocation7 + $0x50] sm:$0xff]
    %v1383 = vld [vmem:[#allocation7 + $0x58] sm:$0xff]
    %v1384 = vld [vmem:[#allocation7 + $0x60] sm:$0xff]
    %v1385 = vld [vmem:[#allocation7 + $0x68] sm:$0xff]
    %v1386 = vld [vmem:[#allocation7 + $0x70] sm:$0xff]
    %v1387 = vld [vmem:[#allocation7 + $0x78] sm:$0xff]
    %v1388 = vld [vmem:[#allocation7 + $0x80] sm:$0xff]
    %v1389 = vld [vmem:[#allocation7 + $0x88] sm:$0xff]
    %v1390 = vld [vmem:[#allocation7 + $0x90] sm:$0xff]
    %v1391 = vld [vmem:[#allocation7 + $0x98] sm:$0xff]
    %v1392 = vld [vmem:[#allocation7 + $0xa0] sm:$0xff]
    %v1393 = vld [vmem:[#allocation7 + $0xa8] sm:$0xff]
    %v1394 = vld [vmem:[#allocation7 + $0xb0] sm:$0xff]
    %v1395 = vld [vmem:[#allocation7 + $0xb8] sm:$0xff]
    %v1396 = vld [vmem:[#allocation7 + $0xc0] sm:$0xff]
    %v1397 = vld [vmem:[#allocation7 + $0xc8] sm:$0xff]
    %v1398 = vld [vmem:[#allocation7 + $0xd0] sm:$0xff]
    %v1399 = vld [vmem:[#allocation7 + $0xd8] sm:$0xff]
    %v1400 = vld [vmem:[#allocation7 + $0xe0] sm:$0xff]
    %v1401 = vld [vmem:[#allocation7 + $0xe8] sm:$0xff]
    %v1402 = vld [vmem:[#allocation7 + $0xf0] sm:$0xff]
    %v1403 = vld [vmem:[#allocation7 + $0xf8] sm:$0xff]
    %v1404 = vld [vmem:[#allocation7 + $0x100] sm:$0xff]
    %v1405 = vld [vmem:[#allocation7 + $0x108] sm:$0xff]
    %v1406 = vld [vmem:[#allocation7 + $0x110] sm:$0xff]
    %v1407 = vld [vmem:[#allocation7 + $0x118] sm:$0xff]
    %v1408 = vld [vmem:[#allocation7 + $0x120] sm:$0xff]
    %v1409 = vld [vmem:[#allocation7 + $0x128] sm:$0xff]
    %v1410 = vld [vmem:[#allocation7 + $0x130] sm:$0xff]
    %v1411 = vld [vmem:[#allocation7 + $0x138] sm:$0xff]
    %v1412 = vld [vmem:[#allocation7 + $0x140] sm:$0xff]
    %v1413 = vld [vmem:[#allocation7 + $0x148] sm:$0xff]
    %v1414 = vld [vmem:[#allocation7 + $0x150] sm:$0xff]
    %v1415 = vld [vmem:[#allocation7 + $0x158] sm:$0xff]
    %v1416 = vld [vmem:[#allocation7 + $0x160] sm:$0xff]
    %v1417 = vld [vmem:[#allocation7 + $0x168] sm:$0xff]
    %v1418 = vld [vmem:[#allocation7 + $0x170] sm:$0xff]
    %v1419 = vld [vmem:[#allocation7 + $0x178] sm:$0xff]
    %v1420 = vld [vmem:[#allocation7 + $0x180] sm:$0xff]
    %v1421 = vld [vmem:[#allocation7 + $0x188] sm:$0xff]
    %v1422 = vld [vmem:[#allocation7 + $0x190] sm:$0xff]
    %v1423 = vld [vmem:[#allocation7 + $0x198] sm:$0xff]
    %v1424 = vld [vmem:[#allocation7 + $0x1a0] sm:$0xff]
    %v1425 = vld [vmem:[#allocation7 + $0x1a8] sm:$0xff]
    %v1426 = vld [vmem:[#allocation7 + $0x1b0] sm:$0xff]
    %v1427 = vld [vmem:[#allocation7 + $0x1b8] sm:$0xff]
    %v1428 = vld [vmem:[#allocation7 + $0x1c0] sm:$0xff]
    %v1429 = vld [vmem:[#allocation7 + $0x1c8] sm:$0xff]
    %v1430 = vld [vmem:[#allocation7 + $0x1d0] sm:$0xff]
    %v1431 = vld [vmem:[#allocation7 + $0x1d8] sm:$0xff]
    %v1432 = vld [vmem:[#allocation7 + $0x1e0] sm:$0xff]
    %v1433 = vld [vmem:[#allocation7 + $0x1e8] sm:$0xff]
    %v1434 = vld [vmem:[#allocation7 + $0x1f0] sm:$0xff]
    %v1435 = vld [vmem:[#allocation7 + $0x1f8] sm:$0xff]
    %v1436 = vld [vmem:[#allocation7 + $0x200] sm:$0xff]
    %v1437 = vld [vmem:[#allocation7 + $0x208] sm:$0xff]
    %v1438 = vld [vmem:[#allocation7 + $0x210] sm:$0xff]
    %v1439 = vld [vmem:[#allocation7 + $0x218] sm:$0xff]
    %v1440 = vld [vmem:[#allocation7 + $0x220] sm:$0xff]
    %v1441 = vld [vmem:[#allocation7 + $0x228] sm:$0xff]
    %v1442 = vld [vmem:[#allocation7 + $0x230] sm:$0xff]
    %v1443 = vld [vmem:[#allocation7 + $0x238] sm:$0xff]
    %v1444 = vld [vmem:[#allocation7 + $0x240] sm:$0xff]
    %v1445 = vld [vmem:[#allocation7 + $0x248] sm:$0xff]
    %v1446 = vld [vmem:[#allocation7 + $0x250] sm:$0xff]
    %v1447 = vld [vmem:[#allocation7 + $0x258] sm:$0xff]
    %v1448 = vld [vmem:[#allocation7 + $0x260] sm:$0xff]
    %v1449 = vld [vmem:[#allocation7 + $0x268] sm:$0xff]
    %v1450 = vld [vmem:[#allocation7 + $0x270] sm:$0xff]
    %v1451 = vld [vmem:[#allocation7 + $0x278] sm:$0xff]
    %v1452 = vld [vmem:[#allocation7 + $0x280] sm:$0xff]
    %v1453 = vld [vmem:[#allocation7 + $0x288] sm:$0xff]
    %v1454 = vld [vmem:[#allocation7 + $0x290] sm:$0xff]
    %v1455 = vld [vmem:[#allocation7 + $0x298] sm:$0xff]
    %v1456 = vld [vmem:[#allocation7 + $0x2a0] sm:$0xff]
    %v1457 = vld [vmem:[#allocation7 + $0x2a8] sm:$0xff]
    %v1458 = vld [vmem:[#allocation7 + $0x2b0] sm:$0xff]
    %v1459 = vld [vmem:[#allocation7 + $0x2b8] sm:$0xff]
    %v1460 = vld [vmem:[#allocation7 + $0x2c0] sm:$0xff]
    %v1461 = vld [vmem:[#allocation7 + $0x2c8] sm:$0xff]
    %v1462 = vld [vmem:[#allocation7 + $0x2d0] sm:$0xff]
    %v1463 = vld [vmem:[#allocation7 + $0x2d8] sm:$0xff]
    %v1464 = vld [vmem:[#allocation7 + $0x2e0] sm:$0xff]
    %v1465 = vld [vmem:[#allocation7 + $0x2e8] sm:$0xff]
    %v1466 = vld [vmem:[#allocation7 + $0x2f0] sm:$0xff]
    %v1467 = vld [vmem:[#allocation7 + $0x2f8] sm:$0xff]
    %v1468 = vld [vmem:[#allocation7 + $0x300] sm:$0xff]
    %v1469 = vld [vmem:[#allocation7 + $0x308] sm:$0xff]
    %v1470 = vld [vmem:[#allocation7 + $0x310] sm:$0xff]
    %v1471 = vld [vmem:[#allocation7 + $0x318] sm:$0xff]
    %v1472 = vld [vmem:[#allocation7 + $0x320] sm:$0xff]
    %v1473 = vld [vmem:[#allocation7 + $0x328] sm:$0xff]
    %v1474 = vld [vmem:[#allocation7 + $0x330] sm:$0xff]
    %v1475 = vld [vmem:[#allocation7 + $0x338] sm:$0xff]
    %v1476 = vld [vmem:[#allocation7 + $0x340] sm:$0xff]
    %v1477 = vld [vmem:[#allocation7 + $0x348] sm:$0xff]
    %v1478 = vld [vmem:[#allocation7 + $0x350] sm:$0xff]
    %v1479 = vld [vmem:[#allocation7 + $0x358] sm:$0xff]
    %v1480 = vld [vmem:[#allocation7 + $0x360] sm:$0xff]
    %v1481 = vld [vmem:[#allocation7 + $0x368] sm:$0xff]
    %v1482 = vld [vmem:[#allocation7 + $0x370] sm:$0xff]
    %v1483 = vld [vmem:[#allocation7 + $0x378] sm:$0xff]
    %v1484 = vld [vmem:[#allocation7 + $0x380] sm:$0xff]
    %v1485 = vld [vmem:[#allocation7 + $0x388] sm:$0xff]
    %v1486 = vld [vmem:[#allocation7 + $0x390] sm:$0xff]
    %v1487 = vld [vmem:[#allocation7 + $0x398] sm:$0xff]
    %v1488 = vld [vmem:[#allocation7 + $0x3a0] sm:$0xff]
    %v1489 = vld [vmem:[#allocation7 + $0x3a8] sm:$0xff]
    %v1490 = vld [vmem:[#allocation7 + $0x3b0] sm:$0xff]
    %v1491 = vld [vmem:[#allocation7 + $0x3b8] sm:$0xff]
    %v1492 = vld [vmem:[#allocation7 + $0x3c0] sm:$0xff]
    %v1493 = vld [vmem:[#allocation7 + $0x3c8] sm:$0xff]
    %v1494 = vld [vmem:[#allocation7 + $0x3d0] sm:$0xff]
    %v1495 = vld [vmem:[#allocation7 + $0x3d8] sm:$0xff]
    %v1496 = vld [vmem:[#allocation7 + $0x3e0] sm:$0xff]
    %v1497 = vld [vmem:[#allocation7 + $0x3e8] sm:$0xff]
    %v1498 = vld [vmem:[#allocation7 + $0x3f0] sm:$0xff]
    %v1499 = vld [vmem:[#allocation7 + $0x3f8] sm:$0xff]
    %1500 = vmatpush.msra.mxu0 %v1432
    %1501 = vmatpush.msra.mxu0 %v1428
    %1502 = vmatpush.msra.mxu0 %v1424
    %1503 = vmatpush.msra.mxu0 %v1420
    %1504 = vmatpush.msra.mxu0 %v1416
    %1505 = vmatpush.msra.mxu0 %v1412
    %1506 = vmatpush.msra.mxu0 %v1408
    %1507 = vmatpush.msra.mxu0 %v1404
    %1508 = vmatpush.msra.mxu0 %v1400
    %1509 = vmatpush.msra.mxu0 %v1396
    %1510 = vmatpush.msra.mxu0 %v1392
    %1511 = vmatpush.msra.mxu0 %v1388
    %1512 = vmatpush.msra.mxu0 %v1384
    %1513 = vmatpush.msra.mxu0 %v1380
    %1514 = vmatpush.msra.mxu0 %v1376
    %1515 = vmatpush.msra.mxu0 %v1372
    %1516 = vmatmul.f32.gmra.mxu0 %v1370
    %v1517 = vpop.f32.mrf.mxu0
    %v1518 = vadd.f32 0.0, %v1517
    %1519 = vdwg.mxu0
    %1520 = vmatpush.msra.mxu0 %v1496
    %1521 = vmatpush.msra.mxu0 %v1492
    %1522 = vmatpush.msra.mxu0 %v1488
    %1523 = vmatpush.msra.mxu0 %v1484
    %1524 = vmatpush.msra.mxu0 %v1480
    %1525 = vmatpush.msra.mxu0 %v1476
    %1526 = vmatpush.msra.mxu0 %v1472
    %1527 = vmatpush.msra.mxu0 %v1468
    %1528 = vmatpush.msra.mxu0 %v1464
    %1529 = vmatpush.msra.mxu0 %v1460
    %1530 = vmatpush.msra.mxu0 %v1456
    %1531 = vmatpush.msra.mxu0 %v1452
    %1532 = vmatpush.msra.mxu0 %v1448
    %1533 = vmatpush.msra.mxu0 %v1444
    %1534 = vmatpush.msra.mxu0 %v1440
    %1535 = vmatpush.msra.mxu0 %v1436
    %1536 = vmatmul.f32.gmra.mxu0 %v1371
    %v1537 = vpop.f32.mrf.mxu0
    %v1538 = vadd.f32 %v1518, %v1537
    %1539 = vdwg.mxu0
    %1540 = vmatpush.msra.mxu0 %v1433
    %1541 = vmatpush.msra.mxu0 %v1429
    %1542 = vmatpush.msra.mxu0 %v1425
    %1543 = vmatpush.msra.mxu0 %v1421
    %1544 = vmatpush.msra.mxu0 %v1417
    %1545 = vmatpush.msra.mxu0 %v1413
    %1546 = vmatpush.msra.mxu0 %v1409
    %1547 = vmatpush.msra.mxu0 %v1405
    %1548 = vmatpush.msra.mxu0 %v1401
    %1549 = vmatpush.msra.mxu0 %v1397
    %1550 = vmatpush.msra.mxu0 %v1393
    %1551 = vmatpush.msra.mxu0 %v1389
    %1552 = vmatpush.msra.mxu0 %v1385
    %1553 = vmatpush.msra.mxu0 %v1381
    %1554 = vmatpush.msra.mxu0 %v1377
    %1555 = vmatpush.msra.mxu0 %v1373
    %1556 = vmatmul.f32.gmra.mxu0 %v1370
    %v1557 = vpop.f32.mrf.mxu0
    %v1558 = vadd.f32 0.0, %v1557
    %1559 = vdwg.mxu0
    %1560 = vmatpush.msra.mxu0 %v1497
    %1561 = vmatpush.msra.mxu0 %v1493
    %1562 = vmatpush.msra.mxu0 %v1489
    %1563 = vmatpush.msra.mxu0 %v1485
    %1564 = vmatpush.msra.mxu0 %v1481
    %1565 = vmatpush.msra.mxu0 %v1477
    %1566 = vmatpush.msra.mxu0 %v1473
    %1567 = vmatpush.msra.mxu0 %v1469
    %1568 = vmatpush.msra.mxu0 %v1465
    %1569 = vmatpush.msra.mxu0 %v1461
    %1570 = vmatpush.msra.mxu0 %v1457
    %1571 = vmatpush.msra.mxu0 %v1453
    %1572 = vmatpush.msra.mxu0 %v1449
    %1573 = vmatpush.msra.mxu0 %v1445
    %1574 = vmatpush.msra.mxu0 %v1441
    %1575 = vmatpush.msra.mxu0 %v1437
    %1576 = vmatmul.f32.gmra.mxu0 %v1371
    %v1577 = vpop.f32.mrf.mxu0
    %v1578 = vadd.f32 %v1558, %v1577
    %1579 = vdwg.mxu0
    %1580 = vmatpush.msra.mxu0 %v1434
    %1581 = vmatpush.msra.mxu0 %v1430
    %1582 = vmatpush.msra.mxu0 %v1426
    %1583 = vmatpush.msra.mxu0 %v1422
    %1584 = vmatpush.msra.mxu0 %v1418
    %1585 = vmatpush.msra.mxu0 %v1414
    %1586 = vmatpush.msra.mxu0 %v1410
    %1587 = vmatpush.msra.mxu0 %v1406
    %1588 = vmatpush.msra.mxu0 %v1402
    %1589 = vmatpush.msra.mxu0 %v1398
    %1590 = vmatpush.msra.mxu0 %v1394
    %1591 = vmatpush.msra.mxu0 %v1390
    %1592 = vmatpush.msra.mxu0 %v1386
    %1593 = vmatpush.msra.mxu0 %v1382
    %1594 = vmatpush.msra.mxu0 %v1378
    %1595 = vmatpush.msra.mxu0 %v1374
    %1596 = vmatmul.f32.gmra.mxu0 %v1370
    %v1597 = vpop.f32.mrf.mxu0
    %v1598 = vadd.f32 0.0, %v1597
    %1599 = vdwg.mxu0
    %1600 = vmatpush.msra.mxu0 %v1498
    %1601 = vmatpush.msra.mxu0 %v1494
    %1602 = vmatpush.msra.mxu0 %v1490
    %1603 = vmatpush.msra.mxu0 %v1486
    %1604 = vmatpush.msra.mxu0 %v1482
    %1605 = vmatpush.msra.mxu0 %v1478
    %1606 = vmatpush.msra.mxu0 %v1474
    %1607 = vmatpush.msra.mxu0 %v1470
    %1608 = vmatpush.msra.mxu0 %v1466
    %1609 = vmatpush.msra.mxu0 %v1462
    %1610 = vmatpush.msra.mxu0 %v1458
    %1611 = vmatpush.msra.mxu0 %v1454
    %1612 = vmatpush.msra.mxu0 %v1450
    %1613 = vmatpush.msra.mxu0 %v1446
    %1614 = vmatpush.msra.mxu0 %v1442
    %1615 = vmatpush.msra.mxu0 %v1438
    %1616 = vmatmul.f32.gmra.mxu0 %v1371
    %v1617 = vpop.f32.mrf.mxu0
    %v1618 = vadd.f32 %v1598, %v1617
    %1619 = vdwg.mxu0
    %1620 = vmatpush.msra.mxu0 %v1435
    %1621 = vmatpush.msra.mxu0 %v1431
    %1622 = vmatpush.msra.mxu0 %v1427
    %1623 = vmatpush.msra.mxu0 %v1423
    %1624 = vmatpush.msra.mxu0 %v1419
    %1625 = vmatpush.msra.mxu0 %v1415
    %1626 = vmatpush.msra.mxu0 %v1411
    %1627 = vmatpush.msra.mxu0 %v1407
    %1628 = vmatpush.msra.mxu0 %v1403
    %1629 = vmatpush.msra.mxu0 %v1399
    %1630 = vmatpush.msra.mxu0 %v1395
    %1631 = vmatpush.msra.mxu0 %v1391
    %1632 = vmatpush.msra.mxu0 %v1387
    %1633 = vmatpush.msra.mxu0 %v1383
    %1634 = vmatpush.msra.mxu0 %v1379
    %1635 = vmatpush.msra.mxu0 %v1375
    %1636 = vmatmul.f32.gmra.mxu0 %v1370
    %v1637 = vpop.f32.mrf.mxu0
    %v1638 = vadd.f32 0.0, %v1637
    %1639 = vdwg.mxu0
    %1640 = vmatpush.msra.mxu0 %v1499
    %1641 = vmatpush.msra.mxu0 %v1495
    %1642 = vmatpush.msra.mxu0 %v1491
    %1643 = vmatpush.msra.mxu0 %v1487
    %1644 = vmatpush.msra.mxu0 %v1483
    %1645 = vmatpush.msra.mxu0 %v1479
    %1646 = vmatpush.msra.mxu0 %v1475
    %1647 = vmatpush.msra.mxu0 %v1471
    %1648 = vmatpush.msra.mxu0 %v1467
    %1649 = vmatpush.msra.mxu0 %v1463
    %1650 = vmatpush.msra.mxu0 %v1459
    %1651 = vmatpush.msra.mxu0 %v1455
    %1652 = vmatpush.msra.mxu0 %v1451
    %1653 = vmatpush.msra.mxu0 %v1447
    %1654 = vmatpush.msra.mxu0 %v1443
    %1655 = vmatpush.msra.mxu0 %v1439
    %1656 = vmatmul.f32.gmra.mxu0 %v1371
    %v1657 = vpop.f32.mrf.mxu0
    %v1658 = vadd.f32 %v1638, %v1657
    %1659 = vdwg.mxu0
    %v1660 = vld [vmem:[%s4] sm:$0x7]
    %v1662 = vperm.slane %v1660, 0
    %v1663 = vperm.slane %v1660, 1
    %v1664 = vperm.slane %v1660, 2
    %v1668 = vadd.f32 %v1538, %v1662
    %v1669 = vadd.f32 %v1578, %v1663
    %v1670 = vadd.f32 %v1618, %v1664
    %v1671 = vld [vmem:[%s5] sm:$0x1]
    %v1673 = vperm.slane %v1671, 0
    %v1675 = vadd.f32 %v1658, %v1673
    %v1676 = vxor.u32 %v1668, 2147483648
    %v1677 = vmul.f32 %v1676, 1.442695
    %v1678 = vpow.pop %v1677
    %v1679 = vadd.f32 %v1678, 1.0
    %v1680 = vrcp.pop %v1679
    %v1681 = vmul.f32 %v1679, %v1680
    %v1682 = vsub.f32 1.0, %v1681
    %v1683 = vmul.f32 %v1680, %v1682
    %v1684 = vadd.f32 %v1680, %v1683
    %vm1685 = vweird.f32 %v1679
    %vm1686 = vweird.f32 %v1680
    %vm1687 = vmor %vm1685, %vm1686
    %v1688 = vsel %vm1687, %v1680, %v1684
    %v1689 = vand.u32 2147483647, %v1679
    %vm1690 = vcmp.eq.f32.partialorder %v1689, 8.507059e+37
    %v1691 = vand.u32 %v1679, 2147483648
    %v1692 = vor.u32 1.1754944e-38, %v1691
    %v1693 = vsel %vm1690, %v1692, %v1688
    %v1694 = vmul.f32 1.0, %v1693
    %v1695 = vxor.u32 %v1669, 2147483648
    %v1696 = vmul.f32 %v1695, 1.442695
    %v1697 = vpow.pop %v1696
    %v1698 = vadd.f32 %v1697, 1.0
    %v1699 = vrcp.pop %v1698
    %v1700 = vmul.f32 %v1698, %v1699
    %v1701 = vsub.f32 1.0, %v1700
    %v1702 = vmul.f32 %v1699, %v1701
    %v1703 = vadd.f32 %v1699, %v1702
    %vm1704 = vweird.f32 %v1698
    %vm1705 = vweird.f32 %v1699
    %vm1706 = vmor %vm1704, %vm1705
    %v1707 = vsel %vm1706, %v1699, %v1703
    %v1708 = vand.u32 2147483647, %v1698
    %vm1709 = vcmp.eq.f32.partialorder %v1708, 8.507059e+37
    %v1710 = vand.u32 %v1698, 2147483648
    %v1711 = vor.u32 1.1754944e-38, %v1710
    %v1712 = vsel %vm1709, %v1711, %v1707
    %v1713 = vmul.f32 1.0, %v1712
    %v1714 = vtanh.pop %v1670
    %v1715 = vxor.u32 %v1675, 2147483648
    %v1716 = vmul.f32 %v1715, 1.442695
    %v1717 = vpow.pop %v1716
    %v1718 = vadd.f32 %v1717, 1.0
    %v1719 = vrcp.pop %v1718
    %v1720 = vmul.f32 %v1718, %v1719
    %v1721 = vsub.f32 1.0, %v1720
    %v1722 = vmul.f32 %v1719, %v1721
    %v1723 = vadd.f32 %v1719, %v1722
    %vm1724 = vweird.f32 %v1718
    %vm1725 = vweird.f32 %v1719
    %vm1726 = vmor %vm1724, %vm1725
    %v1727 = vsel %vm1726, %v1719, %v1723
    %v1728 = vand.u32 2147483647, %v1718
    %vm1729 = vcmp.eq.f32.partialorder %v1728, 8.507059e+37
    %v1730 = vand.u32 %v1718, 2147483648
    %v1731 = vor.u32 1.1754944e-38, %v1730
    %v1732 = vsel %vm1729, %v1731, %v1727
    %v1733 = vmul.f32 1.0, %v1732
    %v1734 = vmul.f32 %v1694, %v1714
    %v1735 = vld [vmem:[#allocation3] sm:$0xf]
    %v1737 = vrot.slane %v1735, 7
    %v1739 = vmul.f32 %v1733, %v1737
    %v1741 = vrot.slane %v1739, 1
    %v1743 = vsel %vm467, %v1741, 0.0
    %v1744 = vrot.slane %v1743, 4
    %v1745 = vadd.f32 %v1743, %v1744
    %v1746 = vrot.slane %v1745, 2
    %v1747 = vadd.f32 %v1745, %v1746
    %v1748 = vrot.slane %v1747, 1
    %v1749 = vadd.f32 %v1747, %v1748
    %v1750 = vadd.f32 %v1734, %v1749
    %v1751 = vtanh.pop %v1750
    %v1752 = vmul.f32 %v1713, %v1751
    %s1753 = scalar_lea.vmem %s6, %s1332
    %1754 = vst [vmem:[%s1753] sm:$0x1] %v1750
    %s1755 = scalar_lea.vmem %s7, %s1332
    %1756 = vst [vmem:[%s1755] sm:$0x1] %v1752
    %s1757 = sld [smem:[#allocation5 + $0x4]]
    %s1758 = scalar_lea.vmem %s2, %s1757
    %v1759 = vld [vmem:[%s1758] sm:$0x1]
    %v1760 = vperm.slane %v1759, 0
    %1761 = vst [vmem:[#allocation2] sm:$0x1f] %v1760
    %s1762 = sld [smem:[#allocation6 + $0x10]]
    %s1763 = scalar_lea.vmem %s7, %s1762
    %v1764 = vld [vmem:[%s1763] sm:$0x1]
    %1765 = vst [vmem:[#allocation2 + $0x9] sm:$0x1] %v1764
    %s1766 = scalar_lea.vmem %s6, %s1762
    %v1767 = vld [vmem:[%s1766] sm:$0x1]
    %1768 = vst [vmem:[#allocation3] sm:$0x1] %v1767
    %v1769 = vadd.f32 %v1764, 0.0
    %s1770 = sld [smem:[#allocation6 + $0x11]]
    %s1771 = scalar_lea.vmem %s7, %s1770
    %v1772 = vld [vmem:[%s1771] sm:$0x1]
    %1773 = vst [vmem:[#allocation2 + $0xa] sm:$0x1] %v1772
    %s1774 = scalar_lea.vmem %s6, %s1770
    %v1775 = vld [vmem:[%s1774] sm:$0x1]
    %1776 = vst [vmem:[#allocation3 + $0x1] sm:$0x1] %v1775
    %v1777 = vadd.f32 %v1769, %v1772
    %s1778 = sld [smem:[#allocation6 + $0x12]]
    %s1779 = scalar_lea.vmem %s7, %s1778
    %v1780 = vld [vmem:[%s1779] sm:$0x1]
    %1781 = vst [vmem:[#allocation2 + $0xb] sm:$0x1] %v1780
    %s1782 = scalar_lea.vmem %s6, %s1778
    %v1783 = vld [vmem:[%s1782] sm:$0x1]
    %1784 = vst [vmem:[#allocation3 + $0x2] sm:$0x1] %v1783
    %v1785 = vadd.f32 %v1777, %v1780
    %s1786 = sld [smem:[#allocation6 + $0x13]]
    %s1787 = scalar_lea.vmem %s7, %s1786
    %v1788 = vld [vmem:[%s1787] sm:$0x1]
    %1789 = vst [vmem:[#allocation2 + $0xc] sm:$0x1] %v1788
    %s1790 = scalar_lea.vmem %s6, %s1786
    %v1791 = vld [vmem:[%s1790] sm:$0x1]
    %1792 = vst [vmem:[#allocation3 + $0x3] sm:$0x1] %v1791
    %v1793 = vadd.f32 %v1785, %v1788
    %1794 = vst [vmem:[#allocation2 + $0x8] sm:$0x1] %v1793
    %v1795 = vld [vmem:[#allocation2] sm:$0x1f]
    %v1796 = vld [vmem:[#allocation2 + $0x8] sm:$0x1f]
    %v1797 = vld [vmem:[#allocation7] sm:$0xff]
    %v1798 = vld [vmem:[#allocation7 + $0x8] sm:$0xff]
    %v1799 = vld [vmem:[#allocation7 + $0x10] sm:$0xff]
    %v1800 = vld [vmem:[#allocation7 + $0x18] sm:$0xff]
    %v1801 = vld [vmem:[#allocation7 + $0x20] sm:$0xff]
    %v1802 = vld [vmem:[#allocation7 + $0x28] sm:$0xff]
    %v1803 = vld [vmem:[#allocation7 + $0x30] sm:$0xff]
    %v1804 = vld [vmem:[#allocation7 + $0x38] sm:$0xff]
    %v1805 = vld [vmem:[#allocation7 + $0x40] sm:$0xff]
    %v1806 = vld [vmem:[#allocation7 + $0x48] sm:$0xff]
    %v1807 = vld [vmem:[#allocation7 + $0x50] sm:$0xff]
    %v1808 = vld [vmem:[#allocation7 + $0x58] sm:$0xff]
    %v1809 = vld [vmem:[#allocation7 + $0x60] sm:$0xff]
    %v1810 = vld [vmem:[#allocation7 + $0x68] sm:$0xff]
    %v1811 = vld [vmem:[#allocation7 + $0x70] sm:$0xff]
    %v1812 = vld [vmem:[#allocation7 + $0x78] sm:$0xff]
    %v1813 = vld [vmem:[#allocation7 + $0x80] sm:$0xff]
    %v1814 = vld [vmem:[#allocation7 + $0x88] sm:$0xff]
    %v1815 = vld [vmem:[#allocation7 + $0x90] sm:$0xff]
    %v1816 = vld [vmem:[#allocation7 + $0x98] sm:$0xff]
    %v1817 = vld [vmem:[#allocation7 + $0xa0] sm:$0xff]
    %v1818 = vld [vmem:[#allocation7 + $0xa8] sm:$0xff]
    %v1819 = vld [vmem:[#allocation7 + $0xb0] sm:$0xff]
    %v1820 = vld [vmem:[#allocation7 + $0xb8] sm:$0xff]
    %v1821 = vld [vmem:[#allocation7 + $0xc0] sm:$0xff]
    %v1822 = vld [vmem:[#allocation7 + $0xc8] sm:$0xff]
    %v1823 = vld [vmem:[#allocation7 + $0xd0] sm:$0xff]
    %v1824 = vld [vmem:[#allocation7 + $0xd8] sm:$0xff]
    %v1825 = vld [vmem:[#allocation7 + $0xe0] sm:$0xff]
    %v1826 = vld [vmem:[#allocation7 + $0xe8] sm:$0xff]
    %v1827 = vld [vmem:[#allocation7 + $0xf0] sm:$0xff]
    %v1828 = vld [vmem:[#allocation7 + $0xf8] sm:$0xff]
    %v1829 = vld [vmem:[#allocation7 + $0x100] sm:$0xff]
    %v1830 = vld [vmem:[#allocation7 + $0x108] sm:$0xff]
    %v1831 = vld [vmem:[#allocation7 + $0x110] sm:$0xff]
    %v1832 = vld [vmem:[#allocation7 + $0x118] sm:$0xff]
    %v1833 = vld [vmem:[#allocation7 + $0x120] sm:$0xff]
    %v1834 = vld [vmem:[#allocation7 + $0x128] sm:$0xff]
    %v1835 = vld [vmem:[#allocation7 + $0x130] sm:$0xff]
    %v1836 = vld [vmem:[#allocation7 + $0x138] sm:$0xff]
    %v1837 = vld [vmem:[#allocation7 + $0x140] sm:$0xff]
    %v1838 = vld [vmem:[#allocation7 + $0x148] sm:$0xff]
    %v1839 = vld [vmem:[#allocation7 + $0x150] sm:$0xff]
    %v1840 = vld [vmem:[#allocation7 + $0x158] sm:$0xff]
    %v1841 = vld [vmem:[#allocation7 + $0x160] sm:$0xff]
    %v1842 = vld [vmem:[#allocation7 + $0x168] sm:$0xff]
    %v1843 = vld [vmem:[#allocation7 + $0x170] sm:$0xff]
    %v1844 = vld [vmem:[#allocation7 + $0x178] sm:$0xff]
    %v1845 = vld [vmem:[#allocation7 + $0x180] sm:$0xff]
    %v1846 = vld [vmem:[#allocation7 + $0x188] sm:$0xff]
    %v1847 = vld [vmem:[#allocation7 + $0x190] sm:$0xff]
    %v1848 = vld [vmem:[#allocation7 + $0x198] sm:$0xff]
    %v1849 = vld [vmem:[#allocation7 + $0x1a0] sm:$0xff]
    %v1850 = vld [vmem:[#allocation7 + $0x1a8] sm:$0xff]
    %v1851 = vld [vmem:[#allocation7 + $0x1b0] sm:$0xff]
    %v1852 = vld [vmem:[#allocation7 + $0x1b8] sm:$0xff]
    %v1853 = vld [vmem:[#allocation7 + $0x1c0] sm:$0xff]
    %v1854 = vld [vmem:[#allocation7 + $0x1c8] sm:$0xff]
    %v1855 = vld [vmem:[#allocation7 + $0x1d0] sm:$0xff]
    %v1856 = vld [vmem:[#allocation7 + $0x1d8] sm:$0xff]
    %v1857 = vld [vmem:[#allocation7 + $0x1e0] sm:$0xff]
    %v1858 = vld [vmem:[#allocation7 + $0x1e8] sm:$0xff]
    %v1859 = vld [vmem:[#allocation7 + $0x1f0] sm:$0xff]
    %v1860 = vld [vmem:[#allocation7 + $0x1f8] sm:$0xff]
    %v1861 = vld [vmem:[#allocation7 + $0x200] sm:$0xff]
    %v1862 = vld [vmem:[#allocation7 + $0x208] sm:$0xff]
    %v1863 = vld [vmem:[#allocation7 + $0x210] sm:$0xff]
    %v1864 = vld [vmem:[#allocation7 + $0x218] sm:$0xff]
    %v1865 = vld [vmem:[#allocation7 + $0x220] sm:$0xff]
    %v1866 = vld [vmem:[#allocation7 + $0x228] sm:$0xff]
    %v1867 = vld [vmem:[#allocation7 + $0x230] sm:$0xff]
    %v1868 = vld [vmem:[#allocation7 + $0x238] sm:$0xff]
    %v1869 = vld [vmem:[#allocation7 + $0x240] sm:$0xff]
    %v1870 = vld [vmem:[#allocation7 + $0x248] sm:$0xff]
    %v1871 = vld [vmem:[#allocation7 + $0x250] sm:$0xff]
    %v1872 = vld [vmem:[#allocation7 + $0x258] sm:$0xff]
    %v1873 = vld [vmem:[#allocation7 + $0x260] sm:$0xff]
    %v1874 = vld [vmem:[#allocation7 + $0x268] sm:$0xff]
    %v1875 = vld [vmem:[#allocation7 + $0x270] sm:$0xff]
    %v1876 = vld [vmem:[#allocation7 + $0x278] sm:$0xff]
    %v1877 = vld [vmem:[#allocation7 + $0x280] sm:$0xff]
    %v1878 = vld [vmem:[#allocation7 + $0x288] sm:$0xff]
    %v1879 = vld [vmem:[#allocation7 + $0x290] sm:$0xff]
    %v1880 = vld [vmem:[#allocation7 + $0x298] sm:$0xff]
    %v1881 = vld [vmem:[#allocation7 + $0x2a0] sm:$0xff]
    %v1882 = vld [vmem:[#allocation7 + $0x2a8] sm:$0xff]
    %v1883 = vld [vmem:[#allocation7 + $0x2b0] sm:$0xff]
    %v1884 = vld [vmem:[#allocation7 + $0x2b8] sm:$0xff]
    %v1885 = vld [vmem:[#allocation7 + $0x2c0] sm:$0xff]
    %v1886 = vld [vmem:[#allocation7 + $0x2c8] sm:$0xff]
    %v1887 = vld [vmem:[#allocation7 + $0x2d0] sm:$0xff]
    %v1888 = vld [vmem:[#allocation7 + $0x2d8] sm:$0xff]
    %v1889 = vld [vmem:[#allocation7 + $0x2e0] sm:$0xff]
    %v1890 = vld [vmem:[#allocation7 + $0x2e8] sm:$0xff]
    %v1891 = vld [vmem:[#allocation7 + $0x2f0] sm:$0xff]
    %v1892 = vld [vmem:[#allocation7 + $0x2f8] sm:$0xff]
    %v1893 = vld [vmem:[#allocation7 + $0x300] sm:$0xff]
    %v1894 = vld [vmem:[#allocation7 + $0x308] sm:$0xff]
    %v1895 = vld [vmem:[#allocation7 + $0x310] sm:$0xff]
    %v1896 = vld [vmem:[#allocation7 + $0x318] sm:$0xff]
    %v1897 = vld [vmem:[#allocation7 + $0x320] sm:$0xff]
    %v1898 = vld [vmem:[#allocation7 + $0x328] sm:$0xff]
    %v1899 = vld [vmem:[#allocation7 + $0x330] sm:$0xff]
    %v1900 = vld [vmem:[#allocation7 + $0x338] sm:$0xff]
    %v1901 = vld [vmem:[#allocation7 + $0x340] sm:$0xff]
    %v1902 = vld [vmem:[#allocation7 + $0x348] sm:$0xff]
    %v1903 = vld [vmem:[#allocation7 + $0x350] sm:$0xff]
    %v1904 = vld [vmem:[#allocation7 + $0x358] sm:$0xff]
    %v1905 = vld [vmem:[#allocation7 + $0x360] sm:$0xff]
    %v1906 = vld [vmem:[#allocation7 + $0x368] sm:$0xff]
    %v1907 = vld [vmem:[#allocation7 + $0x370] sm:$0xff]
    %v1908 = vld [vmem:[#allocation7 + $0x378] sm:$0xff]
    %v1909 = vld [vmem:[#allocation7 + $0x380] sm:$0xff]
    %v1910 = vld [vmem:[#allocation7 + $0x388] sm:$0xff]
    %v1911 = vld [vmem:[#allocation7 + $0x390] sm:$0xff]
    %v1912 = vld [vmem:[#allocation7 + $0x398] sm:$0xff]
    %v1913 = vld [vmem:[#allocation7 + $0x3a0] sm:$0xff]
    %v1914 = vld [vmem:[#allocation7 + $0x3a8] sm:$0xff]
    %v1915 = vld [vmem:[#allocation7 + $0x3b0] sm:$0xff]
    %v1916 = vld [vmem:[#allocation7 + $0x3b8] sm:$0xff]
    %v1917 = vld [vmem:[#allocation7 + $0x3c0] sm:$0xff]
    %v1918 = vld [vmem:[#allocation7 + $0x3c8] sm:$0xff]
    %v1919 = vld [vmem:[#allocation7 + $0x3d0] sm:$0xff]
    %v1920 = vld [vmem:[#allocation7 + $0x3d8] sm:$0xff]
    %v1921 = vld [vmem:[#allocation7 + $0x3e0] sm:$0xff]
    %v1922 = vld [vmem:[#allocation7 + $0x3e8] sm:$0xff]
    %v1923 = vld [vmem:[#allocation7 + $0x3f0] sm:$0xff]
    %v1924 = vld [vmem:[#allocation7 + $0x3f8] sm:$0xff]
    %1925 = vmatpush.msra.mxu0 %v1857
    %1926 = vmatpush.msra.mxu0 %v1853
    %1927 = vmatpush.msra.mxu0 %v1849
    %1928 = vmatpush.msra.mxu0 %v1845
    %1929 = vmatpush.msra.mxu0 %v1841
    %1930 = vmatpush.msra.mxu0 %v1837
    %1931 = vmatpush.msra.mxu0 %v1833
    %1932 = vmatpush.msra.mxu0 %v1829
    %1933 = vmatpush.msra.mxu0 %v1825
    %1934 = vmatpush.msra.mxu0 %v1821
    %1935 = vmatpush.msra.mxu0 %v1817
    %1936 = vmatpush.msra.mxu0 %v1813
    %1937 = vmatpush.msra.mxu0 %v1809
    %1938 = vmatpush.msra.mxu0 %v1805
    %1939 = vmatpush.msra.mxu0 %v1801
    %1940 = vmatpush.msra.mxu0 %v1797
    %1941 = vmatmul.f32.gmra.mxu0 %v1795
    %v1942 = vpop.f32.mrf.mxu0
    %v1943 = vadd.f32 0.0, %v1942
    %1944 = vdwg.mxu0
    %1945 = vmatpush.msra.mxu0 %v1921
    %1946 = vmatpush.msra.mxu0 %v1917
    %1947 = vmatpush.msra.mxu0 %v1913
    %1948 = vmatpush.msra.mxu0 %v1909
    %1949 = vmatpush.msra.mxu0 %v1905
    %1950 = vmatpush.msra.mxu0 %v1901
    %1951 = vmatpush.msra.mxu0 %v1897
    %1952 = vmatpush.msra.mxu0 %v1893
    %1953 = vmatpush.msra.mxu0 %v1889
    %1954 = vmatpush.msra.mxu0 %v1885
    %1955 = vmatpush.msra.mxu0 %v1881
    %1956 = vmatpush.msra.mxu0 %v1877
    %1957 = vmatpush.msra.mxu0 %v1873
    %1958 = vmatpush.msra.mxu0 %v1869
    %1959 = vmatpush.msra.mxu0 %v1865
    %1960 = vmatpush.msra.mxu0 %v1861
    %1961 = vmatmul.f32.gmra.mxu0 %v1796
    %v1962 = vpop.f32.mrf.mxu0
    %v1963 = vadd.f32 %v1943, %v1962
    %1964 = vdwg.mxu0
    %1965 = vmatpush.msra.mxu0 %v1858
    %1966 = vmatpush.msra.mxu0 %v1854
    %1967 = vmatpush.msra.mxu0 %v1850
    %1968 = vmatpush.msra.mxu0 %v1846
    %1969 = vmatpush.msra.mxu0 %v1842
    %1970 = vmatpush.msra.mxu0 %v1838
    %1971 = vmatpush.msra.mxu0 %v1834
    %1972 = vmatpush.msra.mxu0 %v1830
    %1973 = vmatpush.msra.mxu0 %v1826
    %1974 = vmatpush.msra.mxu0 %v1822
    %1975 = vmatpush.msra.mxu0 %v1818
    %1976 = vmatpush.msra.mxu0 %v1814
    %1977 = vmatpush.msra.mxu0 %v1810
    %1978 = vmatpush.msra.mxu0 %v1806
    %1979 = vmatpush.msra.mxu0 %v1802
    %1980 = vmatpush.msra.mxu0 %v1798
    %1981 = vmatmul.f32.gmra.mxu0 %v1795
    %v1982 = vpop.f32.mrf.mxu0
    %v1983 = vadd.f32 0.0, %v1982
    %1984 = vdwg.mxu0
    %1985 = vmatpush.msra.mxu0 %v1922
    %1986 = vmatpush.msra.mxu0 %v1918
    %1987 = vmatpush.msra.mxu0 %v1914
    %1988 = vmatpush.msra.mxu0 %v1910
    %1989 = vmatpush.msra.mxu0 %v1906
    %1990 = vmatpush.msra.mxu0 %v1902
    %1991 = vmatpush.msra.mxu0 %v1898
    %1992 = vmatpush.msra.mxu0 %v1894
    %1993 = vmatpush.msra.mxu0 %v1890
    %1994 = vmatpush.msra.mxu0 %v1886
    %1995 = vmatpush.msra.mxu0 %v1882
    %1996 = vmatpush.msra.mxu0 %v1878
    %1997 = vmatpush.msra.mxu0 %v1874
    %1998 = vmatpush.msra.mxu0 %v1870
    %1999 = vmatpush.msra.mxu0 %v1866
    %2000 = vmatpush.msra.mxu0 %v1862
    %2001 = vmatmul.f32.gmra.mxu0 %v1796
    %v2002 = vpop.f32.mrf.mxu0
    %v2003 = vadd.f32 %v1983, %v2002
    %2004 = vdwg.mxu0
    %2005 = vmatpush.msra.mxu0 %v1859
    %2006 = vmatpush.msra.mxu0 %v1855
    %2007 = vmatpush.msra.mxu0 %v1851
    %2008 = vmatpush.msra.mxu0 %v1847
    %2009 = vmatpush.msra.mxu0 %v1843
    %2010 = vmatpush.msra.mxu0 %v1839
    %2011 = vmatpush.msra.mxu0 %v1835
    %2012 = vmatpush.msra.mxu0 %v1831
    %2013 = vmatpush.msra.mxu0 %v1827
    %2014 = vmatpush.msra.mxu0 %v1823
    %2015 = vmatpush.msra.mxu0 %v1819
    %2016 = vmatpush.msra.mxu0 %v1815
    %2017 = vmatpush.msra.mxu0 %v1811
    %2018 = vmatpush.msra.mxu0 %v1807
    %2019 = vmatpush.msra.mxu0 %v1803
    %2020 = vmatpush.msra.mxu0 %v1799
    %2021 = vmatmul.f32.gmra.mxu0 %v1795
    %v2022 = vpop.f32.mrf.mxu0
    %v2023 = vadd.f32 0.0, %v2022
    %2024 = vdwg.mxu0
    %2025 = vmatpush.msra.mxu0 %v1923
    %2026 = vmatpush.msra.mxu0 %v1919
    %2027 = vmatpush.msra.mxu0 %v1915
    %2028 = vmatpush.msra.mxu0 %v1911
    %2029 = vmatpush.msra.mxu0 %v1907
    %2030 = vmatpush.msra.mxu0 %v1903
    %2031 = vmatpush.msra.mxu0 %v1899
    %2032 = vmatpush.msra.mxu0 %v1895
    %2033 = vmatpush.msra.mxu0 %v1891
    %2034 = vmatpush.msra.mxu0 %v1887
    %2035 = vmatpush.msra.mxu0 %v1883
    %2036 = vmatpush.msra.mxu0 %v1879
    %2037 = vmatpush.msra.mxu0 %v1875
    %2038 = vmatpush.msra.mxu0 %v1871
    %2039 = vmatpush.msra.mxu0 %v1867
    %2040 = vmatpush.msra.mxu0 %v1863
    %2041 = vmatmul.f32.gmra.mxu0 %v1796
    %v2042 = vpop.f32.mrf.mxu0
    %v2043 = vadd.f32 %v2023, %v2042
    %2044 = vdwg.mxu0
    %2045 = vmatpush.msra.mxu0 %v1860
    %2046 = vmatpush.msra.mxu0 %v1856
    %2047 = vmatpush.msra.mxu0 %v1852
    %2048 = vmatpush.msra.mxu0 %v1848
    %2049 = vmatpush.msra.mxu0 %v1844
    %2050 = vmatpush.msra.mxu0 %v1840
    %2051 = vmatpush.msra.mxu0 %v1836
    %2052 = vmatpush.msra.mxu0 %v1832
    %2053 = vmatpush.msra.mxu0 %v1828
    %2054 = vmatpush.msra.mxu0 %v1824
    %2055 = vmatpush.msra.mxu0 %v1820
    %2056 = vmatpush.msra.mxu0 %v1816
    %2057 = vmatpush.msra.mxu0 %v1812
    %2058 = vmatpush.msra.mxu0 %v1808
    %2059 = vmatpush.msra.mxu0 %v1804
    %2060 = vmatpush.msra.mxu0 %v1800
    %2061 = vmatmul.f32.gmra.mxu0 %v1795
    %v2062 = vpop.f32.mrf.mxu0
    %v2063 = vadd.f32 0.0, %v2062
    %2064 = vdwg.mxu0
    %2065 = vmatpush.msra.mxu0 %v1924
    %2066 = vmatpush.msra.mxu0 %v1920
    %2067 = vmatpush.msra.mxu0 %v1916
    %2068 = vmatpush.msra.mxu0 %v1912
    %2069 = vmatpush.msra.mxu0 %v1908
    %2070 = vmatpush.msra.mxu0 %v1904
    %2071 = vmatpush.msra.mxu0 %v1900
    %2072 = vmatpush.msra.mxu0 %v1896
    %2073 = vmatpush.msra.mxu0 %v1892
    %2074 = vmatpush.msra.mxu0 %v1888
    %2075 = vmatpush.msra.mxu0 %v1884
    %2076 = vmatpush.msra.mxu0 %v1880
    %2077 = vmatpush.msra.mxu0 %v1876
    %2078 = vmatpush.msra.mxu0 %v1872
    %2079 = vmatpush.msra.mxu0 %v1868
    %2080 = vmatpush.msra.mxu0 %v1864
    %2081 = vmatmul.f32.gmra.mxu0 %v1796
    %v2082 = vpop.f32.mrf.mxu0
    %v2083 = vadd.f32 %v2063, %v2082
    %2084 = vdwg.mxu0
    %v2085 = vld [vmem:[%s4] sm:$0x7]
    %v2087 = vperm.slane %v2085, 0
    %v2088 = vperm.slane %v2085, 1
    %v2089 = vperm.slane %v2085, 2
    %v2093 = vadd.f32 %v1963, %v2087
    %v2094 = vadd.f32 %v2003, %v2088
    %v2095 = vadd.f32 %v2043, %v2089
    %v2096 = vld [vmem:[%s5] sm:$0x1]
    %v2098 = vperm.slane %v2096, 0
    %v2100 = vadd.f32 %v2083, %v2098
    %v2101 = vxor.u32 %v2093, 2147483648
    %v2102 = vmul.f32 %v2101, 1.442695
    %v2103 = vpow.pop %v2102
    %v2104 = vadd.f32 %v2103, 1.0
    %v2105 = vrcp.pop %v2104
    %v2106 = vmul.f32 %v2104, %v2105
    %v2107 = vsub.f32 1.0, %v2106
    %v2108 = vmul.f32 %v2105, %v2107
    %v2109 = vadd.f32 %v2105, %v2108
    %vm2110 = vweird.f32 %v2104
    %vm2111 = vweird.f32 %v2105
    %vm2112 = vmor %vm2110, %vm2111
    %v2113 = vsel %vm2112, %v2105, %v2109
    %v2114 = vand.u32 2147483647, %v2104
    %vm2115 = vcmp.eq.f32.partialorder %v2114, 8.507059e+37
    %v2116 = vand.u32 %v2104, 2147483648
    %v2117 = vor.u32 1.1754944e-38, %v2116
    %v2118 = vsel %vm2115, %v2117, %v2113
    %v2119 = vmul.f32 1.0, %v2118
    %v2120 = vxor.u32 %v2094, 2147483648
    %v2121 = vmul.f32 %v2120, 1.442695
    %v2122 = vpow.pop %v2121
    %v2123 = vadd.f32 %v2122, 1.0
    %v2124 = vrcp.pop %v2123
    %v2125 = vmul.f32 %v2123, %v2124
    %v2126 = vsub.f32 1.0, %v2125
    %v2127 = vmul.f32 %v2124, %v2126
    %v2128 = vadd.f32 %v2124, %v2127
    %vm2129 = vweird.f32 %v2123
    %vm2130 = vweird.f32 %v2124
    %vm2131 = vmor %vm2129, %vm2130
    %v2132 = vsel %vm2131, %v2124, %v2128
    %v2133 = vand.u32 2147483647, %v2123
    %vm2134 = vcmp.eq.f32.partialorder %v2133, 8.507059e+37
    %v2135 = vand.u32 %v2123, 2147483648
    %v2136 = vor.u32 1.1754944e-38, %v2135
    %v2137 = vsel %vm2134, %v2136, %v2132
    %v2138 = vmul.f32 1.0, %v2137
    %v2139 = vtanh.pop %v2095
    %v2140 = vxor.u32 %v2100, 2147483648
    %v2141 = vmul.f32 %v2140, 1.442695
    %v2142 = vpow.pop %v2141
    %v2143 = vadd.f32 %v2142, 1.0
    %v2144 = vrcp.pop %v2143
    %v2145 = vmul.f32 %v2143, %v2144
    %v2146 = vsub.f32 1.0, %v2145
    %v2147 = vmul.f32 %v2144, %v2146
    %v2148 = vadd.f32 %v2144, %v2147
    %vm2149 = vweird.f32 %v2143
    %vm2150 = vweird.f32 %v2144
    %vm2151 = vmor %vm2149, %vm2150
    %v2152 = vsel %vm2151, %v2144, %v2148
    %v2153 = vand.u32 2147483647, %v2143
    %vm2154 = vcmp.eq.f32.partialorder %v2153, 8.507059e+37
    %v2155 = vand.u32 %v2143, 2147483648
    %v2156 = vor.u32 1.1754944e-38, %v2155
    %v2157 = vsel %vm2154, %v2156, %v2152
    %v2158 = vmul.f32 1.0, %v2157
    %v2159 = vmul.f32 %v2119, %v2139
    %v2160 = vld [vmem:[#allocation3] sm:$0xf]
    %v2162 = vrot.slane %v2160, 7
    %v2164 = vmul.f32 %v2158, %v2162
    %v2166 = vrot.slane %v2164, 1
    %v2168 = vsel %vm467, %v2166, 0.0
    %v2169 = vrot.slane %v2168, 4
    %v2170 = vadd.f32 %v2168, %v2169
    %v2171 = vrot.slane %v2170, 2
    %v2172 = vadd.f32 %v2170, %v2171
    %v2173 = vrot.slane %v2172, 1
    %v2174 = vadd.f32 %v2172, %v2173
    %v2175 = vadd.f32 %v2159, %v2174
    %v2176 = vtanh.pop %v2175
    %v2177 = vmul.f32 %v2138, %v2176
    %s2178 = scalar_lea.vmem %s6, %s1757
    %2179 = vst [vmem:[%s2178] sm:$0x1] %v2175
    %s2180 = scalar_lea.vmem %s7, %s1757
    %2181 = vst [vmem:[%s2180] sm:$0x1] %v2177
    %s2182 = sld [smem:[#allocation5 + $0x5]]
    %s2183 = scalar_lea.vmem %s2, %s2182
    %v2184 = vld [vmem:[%s2183] sm:$0x1]
    %v2185 = vperm.slane %v2184, 0
    %2186 = vst [vmem:[#allocation2] sm:$0x1f] %v2185
    %s2187 = sld [smem:[#allocation6 + $0x14]]
    %s2188 = scalar_lea.vmem %s7, %s2187
    %v2189 = vld [vmem:[%s2188] sm:$0x1]
    %2190 = vst [vmem:[#allocation2 + $0x9] sm:$0x1] %v2189
    %s2191 = scalar_lea.vmem %s6, %s2187
    %v2192 = vld [vmem:[%s2191] sm:$0x1]
    %2193 = vst [vmem:[#allocation3] sm:$0x1] %v2192
    %v2194 = vadd.f32 %v2189, 0.0
    %s2195 = sld [smem:[#allocation6 + $0x15]]
    %s2196 = scalar_lea.vmem %s7, %s2195
    %v2197 = vld [vmem:[%s2196] sm:$0x1]
    %2198 = vst [vmem:[#allocation2 + $0xa] sm:$0x1] %v2197
    %s2199 = scalar_lea.vmem %s6, %s2195
    %v2200 = vld [vmem:[%s2199] sm:$0x1]
    %2201 = vst [vmem:[#allocation3 + $0x1] sm:$0x1] %v2200
    %v2202 = vadd.f32 %v2194, %v2197
    %s2203 = sld [smem:[#allocation6 + $0x16]]
    %s2204 = scalar_lea.vmem %s7, %s2203
    %v2205 = vld [vmem:[%s2204] sm:$0x1]
    %2206 = vst [vmem:[#allocation2 + $0xb] sm:$0x1] %v2205
    %s2207 = scalar_lea.vmem %s6, %s2203
    %v2208 = vld [vmem:[%s2207] sm:$0x1]
    %2209 = vst [vmem:[#allocation3 + $0x2] sm:$0x1] %v2208
    %v2210 = vadd.f32 %v2202, %v2205
    %s2211 = sld [smem:[#allocation6 + $0x17]]
    %s2212 = scalar_lea.vmem %s7, %s2211
    %v2213 = vld [vmem:[%s2212] sm:$0x1]
    %2214 = vst [vmem:[#allocation2 + $0xc] sm:$0x1] %v2213
    %s2215 = scalar_lea.vmem %s6, %s2211
    %v2216 = vld [vmem:[%s2215] sm:$0x1]
    %2217 = vst [vmem:[#allocation3 + $0x3] sm:$0x1] %v2216
    %v2218 = vadd.f32 %v2210, %v2213
    %2219 = vst [vmem:[#allocation2 + $0x8] sm:$0x1] %v2218
    %v2220 = vld [vmem:[#allocation2] sm:$0x1f]
    %v2221 = vld [vmem:[#allocation2 + $0x8] sm:$0x1f]
    %v2222 = vld [vmem:[#allocation7] sm:$0xff]
    %v2223 = vld [vmem:[#allocation7 + $0x8] sm:$0xff]
    %v2224 = vld [vmem:[#allocation7 + $0x10] sm:$0xff]
    %v2225 = vld [vmem:[#allocation7 + $0x18] sm:$0xff]
    %v2226 = vld [vmem:[#allocation7 + $0x20] sm:$0xff]
    %v2227 = vld [vmem:[#allocation7 + $0x28] sm:$0xff]
    %v2228 = vld [vmem:[#allocation7 + $0x30] sm:$0xff]
    %v2229 = vld [vmem:[#allocation7 + $0x38] sm:$0xff]
    %v2230 = vld [vmem:[#allocation7 + $0x40] sm:$0xff]
    %v2231 = vld [vmem:[#allocation7 + $0x48] sm:$0xff]
    %v2232 = vld [vmem:[#allocation7 + $0x50] sm:$0xff]
    %v2233 = vld [vmem:[#allocation7 + $0x58] sm:$0xff]
    %v2234 = vld [vmem:[#allocation7 + $0x60] sm:$0xff]
    %v2235 = vld [vmem:[#allocation7 + $0x68] sm:$0xff]
    %v2236 = vld [vmem:[#allocation7 + $0x70] sm:$0xff]
    %v2237 = vld [vmem:[#allocation7 + $0x78] sm:$0xff]
    %v2238 = vld [vmem:[#allocation7 + $0x80] sm:$0xff]
    %v2239 = vld [vmem:[#allocation7 + $0x88] sm:$0xff]
    %v2240 = vld [vmem:[#allocation7 + $0x90] sm:$0xff]
    %v2241 = vld [vmem:[#allocation7 + $0x98] sm:$0xff]
    %v2242 = vld [vmem:[#allocation7 + $0xa0] sm:$0xff]
    %v2243 = vld [vmem:[#allocation7 + $0xa8] sm:$0xff]
    %v2244 = vld [vmem:[#allocation7 + $0xb0] sm:$0xff]
    %v2245 = vld [vmem:[#allocation7 + $0xb8] sm:$0xff]
    %v2246 = vld [vmem:[#allocation7 + $0xc0] sm:$0xff]
    %v2247 = vld [vmem:[#allocation7 + $0xc8] sm:$0xff]
    %v2248 = vld [vmem:[#allocation7 + $0xd0] sm:$0xff]
    %v2249 = vld [vmem:[#allocation7 + $0xd8] sm:$0xff]
    %v2250 = vld [vmem:[#allocation7 + $0xe0] sm:$0xff]
    %v2251 = vld [vmem:[#allocation7 + $0xe8] sm:$0xff]
    %v2252 = vld [vmem:[#allocation7 + $0xf0] sm:$0xff]
    %v2253 = vld [vmem:[#allocation7 + $0xf8] sm:$0xff]
    %v2254 = vld [vmem:[#allocation7 + $0x100] sm:$0xff]
    %v2255 = vld [vmem:[#allocation7 + $0x108] sm:$0xff]
    %v2256 = vld [vmem:[#allocation7 + $0x110] sm:$0xff]
    %v2257 = vld [vmem:[#allocation7 + $0x118] sm:$0xff]
    %v2258 = vld [vmem:[#allocation7 + $0x120] sm:$0xff]
    %v2259 = vld [vmem:[#allocation7 + $0x128] sm:$0xff]
    %v2260 = vld [vmem:[#allocation7 + $0x130] sm:$0xff]
    %v2261 = vld [vmem:[#allocation7 + $0x138] sm:$0xff]
    %v2262 = vld [vmem:[#allocation7 + $0x140] sm:$0xff]
    %v2263 = vld [vmem:[#allocation7 + $0x148] sm:$0xff]
    %v2264 = vld [vmem:[#allocation7 + $0x150] sm:$0xff]
    %v2265 = vld [vmem:[#allocation7 + $0x158] sm:$0xff]
    %v2266 = vld [vmem:[#allocation7 + $0x160] sm:$0xff]
    %v2267 = vld [vmem:[#allocation7 + $0x168] sm:$0xff]
    %v2268 = vld [vmem:[#allocation7 + $0x170] sm:$0xff]
    %v2269 = vld [vmem:[#allocation7 + $0x178] sm:$0xff]
    %v2270 = vld [vmem:[#allocation7 + $0x180] sm:$0xff]
    %v2271 = vld [vmem:[#allocation7 + $0x188] sm:$0xff]
    %v2272 = vld [vmem:[#allocation7 + $0x190] sm:$0xff]
    %v2273 = vld [vmem:[#allocation7 + $0x198] sm:$0xff]
    %v2274 = vld [vmem:[#allocation7 + $0x1a0] sm:$0xff]
    %v2275 = vld [vmem:[#allocation7 + $0x1a8] sm:$0xff]
    %v2276 = vld [vmem:[#allocation7 + $0x1b0] sm:$0xff]
    %v2277 = vld [vmem:[#allocation7 + $0x1b8] sm:$0xff]
    %v2278 = vld [vmem:[#allocation7 + $0x1c0] sm:$0xff]
    %v2279 = vld [vmem:[#allocation7 + $0x1c8] sm:$0xff]
    %v2280 = vld [vmem:[#allocation7 + $0x1d0] sm:$0xff]
    %v2281 = vld [vmem:[#allocation7 + $0x1d8] sm:$0xff]
    %v2282 = vld [vmem:[#allocation7 + $0x1e0] sm:$0xff]
    %v2283 = vld [vmem:[#allocation7 + $0x1e8] sm:$0xff]
    %v2284 = vld [vmem:[#allocation7 + $0x1f0] sm:$0xff]
    %v2285 = vld [vmem:[#allocation7 + $0x1f8] sm:$0xff]
    %v2286 = vld [vmem:[#allocation7 + $0x200] sm:$0xff]
    %v2287 = vld [vmem:[#allocation7 + $0x208] sm:$0xff]
    %v2288 = vld [vmem:[#allocation7 + $0x210] sm:$0xff]
    %v2289 = vld [vmem:[#allocation7 + $0x218] sm:$0xff]
    %v2290 = vld [vmem:[#allocation7 + $0x220] sm:$0xff]
    %v2291 = vld [vmem:[#allocation7 + $0x228] sm:$0xff]
    %v2292 = vld [vmem:[#allocation7 + $0x230] sm:$0xff]
    %v2293 = vld [vmem:[#allocation7 + $0x238] sm:$0xff]
    %v2294 = vld [vmem:[#allocation7 + $0x240] sm:$0xff]
    %v2295 = vld [vmem:[#allocation7 + $0x248] sm:$0xff]
    %v2296 = vld [vmem:[#allocation7 + $0x250] sm:$0xff]
    %v2297 = vld [vmem:[#allocation7 + $0x258] sm:$0xff]
    %v2298 = vld [vmem:[#allocation7 + $0x260] sm:$0xff]
    %v2299 = vld [vmem:[#allocation7 + $0x268] sm:$0xff]
    %v2300 = vld [vmem:[#allocation7 + $0x270] sm:$0xff]
    %v2301 = vld [vmem:[#allocation7 + $0x278] sm:$0xff]
    %v2302 = vld [vmem:[#allocation7 + $0x280] sm:$0xff]
    %v2303 = vld [vmem:[#allocation7 + $0x288] sm:$0xff]
    %v2304 = vld [vmem:[#allocation7 + $0x290] sm:$0xff]
    %v2305 = vld [vmem:[#allocation7 + $0x298] sm:$0xff]
    %v2306 = vld [vmem:[#allocation7 + $0x2a0] sm:$0xff]
    %v2307 = vld [vmem:[#allocation7 + $0x2a8] sm:$0xff]
    %v2308 = vld [vmem:[#allocation7 + $0x2b0] sm:$0xff]
    %v2309 = vld [vmem:[#allocation7 + $0x2b8] sm:$0xff]
    %v2310 = vld [vmem:[#allocation7 + $0x2c0] sm:$0xff]
    %v2311 = vld [vmem:[#allocation7 + $0x2c8] sm:$0xff]
    %v2312 = vld [vmem:[#allocation7 + $0x2d0] sm:$0xff]
    %v2313 = vld [vmem:[#allocation7 + $0x2d8] sm:$0xff]
    %v2314 = vld [vmem:[#allocation7 + $0x2e0] sm:$0xff]
    %v2315 = vld [vmem:[#allocation7 + $0x2e8] sm:$0xff]
    %v2316 = vld [vmem:[#allocation7 + $0x2f0] sm:$0xff]
    %v2317 = vld [vmem:[#allocation7 + $0x2f8] sm:$0xff]
    %v2318 = vld [vmem:[#allocation7 + $0x300] sm:$0xff]
    %v2319 = vld [vmem:[#allocation7 + $0x308] sm:$0xff]
    %v2320 = vld [vmem:[#allocation7 + $0x310] sm:$0xff]
    %v2321 = vld [vmem:[#allocation7 + $0x318] sm:$0xff]
    %v2322 = vld [vmem:[#allocation7 + $0x320] sm:$0xff]
    %v2323 = vld [vmem:[#allocation7 + $0x328] sm:$0xff]
    %v2324 = vld [vmem:[#allocation7 + $0x330] sm:$0xff]
    %v2325 = vld [vmem:[#allocation7 + $0x338] sm:$0xff]
    %v2326 = vld [vmem:[#allocation7 + $0x340] sm:$0xff]
    %v2327 = vld [vmem:[#allocation7 + $0x348] sm:$0xff]
    %v2328 = vld [vmem:[#allocation7 + $0x350] sm:$0xff]
    %v2329 = vld [vmem:[#allocation7 + $0x358] sm:$0xff]
    %v2330 = vld [vmem:[#allocation7 + $0x360] sm:$0xff]
    %v2331 = vld [vmem:[#allocation7 + $0x368] sm:$0xff]
    %v2332 = vld [vmem:[#allocation7 + $0x370] sm:$0xff]
    %v2333 = vld [vmem:[#allocation7 + $0x378] sm:$0xff]
    %v2334 = vld [vmem:[#allocation7 + $0x380] sm:$0xff]
    %v2335 = vld [vmem:[#allocation7 + $0x388] sm:$0xff]
    %v2336 = vld [vmem:[#allocation7 + $0x390] sm:$0xff]
    %v2337 = vld [vmem:[#allocation7 + $0x398] sm:$0xff]
    %v2338 = vld [vmem:[#allocation7 + $0x3a0] sm:$0xff]
    %v2339 = vld [vmem:[#allocation7 + $0x3a8] sm:$0xff]
    %v2340 = vld [vmem:[#allocation7 + $0x3b0] sm:$0xff]
    %v2341 = vld [vmem:[#allocation7 + $0x3b8] sm:$0xff]
    %v2342 = vld [vmem:[#allocation7 + $0x3c0] sm:$0xff]
    %v2343 = vld [vmem:[#allocation7 + $0x3c8] sm:$0xff]
    %v2344 = vld [vmem:[#allocation7 + $0x3d0] sm:$0xff]
    %v2345 = vld [vmem:[#allocation7 + $0x3d8] sm:$0xff]
    %v2346 = vld [vmem:[#allocation7 + $0x3e0] sm:$0xff]
    %v2347 = vld [vmem:[#allocation7 + $0x3e8] sm:$0xff]
    %v2348 = vld [vmem:[#allocation7 + $0x3f0] sm:$0xff]
    %v2349 = vld [vmem:[#allocation7 + $0x3f8] sm:$0xff]
    %2350 = vmatpush.msra.mxu0 %v2282
    %2351 = vmatpush.msra.mxu0 %v2278
    %2352 = vmatpush.msra.mxu0 %v2274
    %2353 = vmatpush.msra.mxu0 %v2270
    %2354 = vmatpush.msra.mxu0 %v2266
    %2355 = vmatpush.msra.mxu0 %v2262
    %2356 = vmatpush.msra.mxu0 %v2258
    %2357 = vmatpush.msra.mxu0 %v2254
    %2358 = vmatpush.msra.mxu0 %v2250
    %2359 = vmatpush.msra.mxu0 %v2246
    %2360 = vmatpush.msra.mxu0 %v2242
    %2361 = vmatpush.msra.mxu0 %v2238
    %2362 = vmatpush.msra.mxu0 %v2234
    %2363 = vmatpush.msra.mxu0 %v2230
    %2364 = vmatpush.msra.mxu0 %v2226
    %2365 = vmatpush.msra.mxu0 %v2222
    %2366 = vmatmul.f32.gmra.mxu0 %v2220
    %v2367 = vpop.f32.mrf.mxu0
    %v2368 = vadd.f32 0.0, %v2367
    %2369 = vdwg.mxu0
    %2370 = vmatpush.msra.mxu0 %v2346
    %2371 = vmatpush.msra.mxu0 %v2342
    %2372 = vmatpush.msra.mxu0 %v2338
    %2373 = vmatpush.msra.mxu0 %v2334
    %2374 = vmatpush.msra.mxu0 %v2330
    %2375 = vmatpush.msra.mxu0 %v2326
    %2376 = vmatpush.msra.mxu0 %v2322
    %2377 = vmatpush.msra.mxu0 %v2318
    %2378 = vmatpush.msra.mxu0 %v2314
    %2379 = vmatpush.msra.mxu0 %v2310
    %2380 = vmatpush.msra.mxu0 %v2306
    %2381 = vmatpush.msra.mxu0 %v2302
    %2382 = vmatpush.msra.mxu0 %v2298
    %2383 = vmatpush.msra.mxu0 %v2294
    %2384 = vmatpush.msra.mxu0 %v2290
    %2385 = vmatpush.msra.mxu0 %v2286
    %2386 = vmatmul.f32.gmra.mxu0 %v2221
    %v2387 = vpop.f32.mrf.mxu0
    %v2388 = vadd.f32 %v2368, %v2387
    %2389 = vdwg.mxu0
    %2390 = vmatpush.msra.mxu0 %v2283
    %2391 = vmatpush.msra.mxu0 %v2279
    %2392 = vmatpush.msra.mxu0 %v2275
    %2393 = vmatpush.msra.mxu0 %v2271
    %2394 = vmatpush.msra.mxu0 %v2267
    %2395 = vmatpush.msra.mxu0 %v2263
    %2396 = vmatpush.msra.mxu0 %v2259
    %2397 = vmatpush.msra.mxu0 %v2255
    %2398 = vmatpush.msra.mxu0 %v2251
    %2399 = vmatpush.msra.mxu0 %v2247
    %2400 = vmatpush.msra.mxu0 %v2243
    %2401 = vmatpush.msra.mxu0 %v2239
    %2402 = vmatpush.msra.mxu0 %v2235
    %2403 = vmatpush.msra.mxu0 %v2231
    %2404 = vmatpush.msra.mxu0 %v2227
    %2405 = vmatpush.msra.mxu0 %v2223
    %2406 = vmatmul.f32.gmra.mxu0 %v2220
    %v2407 = vpop.f32.mrf.mxu0
    %v2408 = vadd.f32 0.0, %v2407
    %2409 = vdwg.mxu0
    %2410 = vmatpush.msra.mxu0 %v2347
    %2411 = vmatpush.msra.mxu0 %v2343
    %2412 = vmatpush.msra.mxu0 %v2339
    %2413 = vmatpush.msra.mxu0 %v2335
    %2414 = vmatpush.msra.mxu0 %v2331
    %2415 = vmatpush.msra.mxu0 %v2327
    %2416 = vmatpush.msra.mxu0 %v2323
    %2417 = vmatpush.msra.mxu0 %v2319
    %2418 = vmatpush.msra.mxu0 %v2315
    %2419 = vmatpush.msra.mxu0 %v2311
    %2420 = vmatpush.msra.mxu0 %v2307
    %2421 = vmatpush.msra.mxu0 %v2303
    %2422 = vmatpush.msra.mxu0 %v2299
    %2423 = vmatpush.msra.mxu0 %v2295
    %2424 = vmatpush.msra.mxu0 %v2291
    %2425 = vmatpush.msra.mxu0 %v2287
    %2426 = vmatmul.f32.gmra.mxu0 %v2221
    %v2427 = vpop.f32.mrf.mxu0
    %v2428 = vadd.f32 %v2408, %v2427
    %2429 = vdwg.mxu0
    %2430 = vmatpush.msra.mxu0 %v2284
    %2431 = vmatpush.msra.mxu0 %v2280
    %2432 = vmatpush.msra.mxu0 %v2276
    %2433 = vmatpush.msra.mxu0 %v2272
    %2434 = vmatpush.msra.mxu0 %v2268
    %2435 = vmatpush.msra.mxu0 %v2264
    %2436 = vmatpush.msra.mxu0 %v2260
    %2437 = vmatpush.msra.mxu0 %v2256
    %2438 = vmatpush.msra.mxu0 %v2252
    %2439 = vmatpush.msra.mxu0 %v2248
    %2440 = vmatpush.msra.mxu0 %v2244
    %2441 = vmatpush.msra.mxu0 %v2240
    %2442 = vmatpush.msra.mxu0 %v2236
    %2443 = vmatpush.msra.mxu0 %v2232
    %2444 = vmatpush.msra.mxu0 %v2228
    %2445 = vmatpush.msra.mxu0 %v2224
    %2446 = vmatmul.f32.gmra.mxu0 %v2220
    %v2447 = vpop.f32.mrf.mxu0
    %v2448 = vadd.f32 0.0, %v2447
    %2449 = vdwg.mxu0
    %2450 = vmatpush.msra.mxu0 %v2348
    %2451 = vmatpush.msra.mxu0 %v2344
    %2452 = vmatpush.msra.mxu0 %v2340
    %2453 = vmatpush.msra.mxu0 %v2336
    %2454 = vmatpush.msra.mxu0 %v2332
    %2455 = vmatpush.msra.mxu0 %v2328
    %2456 = vmatpush.msra.mxu0 %v2324
    %2457 = vmatpush.msra.mxu0 %v2320
    %2458 = vmatpush.msra.mxu0 %v2316
    %2459 = vmatpush.msra.mxu0 %v2312
    %2460 = vmatpush.msra.mxu0 %v2308
    %2461 = vmatpush.msra.mxu0 %v2304
    %2462 = vmatpush.msra.mxu0 %v2300
    %2463 = vmatpush.msra.mxu0 %v2296
    %2464 = vmatpush.msra.mxu0 %v2292
    %2465 = vmatpush.msra.mxu0 %v2288
    %2466 = vmatmul.f32.gmra.mxu0 %v2221
    %v2467 = vpop.f32.mrf.mxu0
    %v2468 = vadd.f32 %v2448, %v2467
    %2469 = vdwg.mxu0
    %2470 = vmatpush.msra.mxu0 %v2285
    %2471 = vmatpush.msra.mxu0 %v2281
    %2472 = vmatpush.msra.mxu0 %v2277
    %2473 = vmatpush.msra.mxu0 %v2273
    %2474 = vmatpush.msra.mxu0 %v2269
    %2475 = vmatpush.msra.mxu0 %v2265
    %2476 = vmatpush.msra.mxu0 %v2261
    %2477 = vmatpush.msra.mxu0 %v2257
    %2478 = vmatpush.msra.mxu0 %v2253
    %2479 = vmatpush.msra.mxu0 %v2249
    %2480 = vmatpush.msra.mxu0 %v2245
    %2481 = vmatpush.msra.mxu0 %v2241
    %2482 = vmatpush.msra.mxu0 %v2237
    %2483 = vmatpush.msra.mxu0 %v2233
    %2484 = vmatpush.msra.mxu0 %v2229
    %2485 = vmatpush.msra.mxu0 %v2225
    %2486 = vmatmul.f32.gmra.mxu0 %v2220
    %v2487 = vpop.f32.mrf.mxu0
    %v2488 = vadd.f32 0.0, %v2487
    %2489 = vdwg.mxu0
    %2490 = vmatpush.msra.mxu0 %v2349
    %2491 = vmatpush.msra.mxu0 %v2345
    %2492 = vmatpush.msra.mxu0 %v2341
    %2493 = vmatpush.msra.mxu0 %v2337
    %2494 = vmatpush.msra.mxu0 %v2333
    %2495 = vmatpush.msra.mxu0 %v2329
    %2496 = vmatpush.msra.mxu0 %v2325
    %2497 = vmatpush.msra.mxu0 %v2321
    %2498 = vmatpush.msra.mxu0 %v2317
    %2499 = vmatpush.msra.mxu0 %v2313
    %2500 = vmatpush.msra.mxu0 %v2309
    %2501 = vmatpush.msra.mxu0 %v2305
    %2502 = vmatpush.msra.mxu0 %v2301
    %2503 = vmatpush.msra.mxu0 %v2297
    %2504 = vmatpush.msra.mxu0 %v2293
    %2505 = vmatpush.msra.mxu0 %v2289
    %2506 = vmatmul.f32.gmra.mxu0 %v2221
    %v2507 = vpop.f32.mrf.mxu0
    %v2508 = vadd.f32 %v2488, %v2507
    %2509 = vdwg.mxu0
    %v2510 = vld [vmem:[%s4] sm:$0x7]
    %v2512 = vperm.slane %v2510, 0
    %v2513 = vperm.slane %v2510, 1
    %v2514 = vperm.slane %v2510, 2
    %v2518 = vadd.f32 %v2388, %v2512
    %v2519 = vadd.f32 %v2428, %v2513
    %v2520 = vadd.f32 %v2468, %v2514
    %v2521 = vld [vmem:[%s5] sm:$0x1]
    %v2523 = vperm.slane %v2521, 0
    %v2525 = vadd.f32 %v2508, %v2523
    %v2526 = vxor.u32 %v2518, 2147483648
    %v2527 = vmul.f32 %v2526, 1.442695
    %v2528 = vpow.pop %v2527
    %v2529 = vadd.f32 %v2528, 1.0
    %v2530 = vrcp.pop %v2529
    %v2531 = vmul.f32 %v2529, %v2530
    %v2532 = vsub.f32 1.0, %v2531
    %v2533 = vmul.f32 %v2530, %v2532
    %v2534 = vadd.f32 %v2530, %v2533
    %vm2535 = vweird.f32 %v2529
    %vm2536 = vweird.f32 %v2530
    %vm2537 = vmor %vm2535, %vm2536
    %v2538 = vsel %vm2537, %v2530, %v2534
    %v2539 = vand.u32 2147483647, %v2529
    %vm2540 = vcmp.eq.f32.partialorder %v2539, 8.507059e+37
    %v2541 = vand.u32 %v2529, 2147483648
    %v2542 = vor.u32 1.1754944e-38, %v2541
    %v2543 = vsel %vm2540, %v2542, %v2538
    %v2544 = vmul.f32 1.0, %v2543
    %v2545 = vxor.u32 %v2519, 2147483648
    %v2546 = vmul.f32 %v2545, 1.442695
    %v2547 = vpow.pop %v2546
    %v2548 = vadd.f32 %v2547, 1.0
    %v2549 = vrcp.pop %v2548
    %v2550 = vmul.f32 %v2548, %v2549
    %v2551 = vsub.f32 1.0, %v2550
    %v2552 = vmul.f32 %v2549, %v2551
    %v2553 = vadd.f32 %v2549, %v2552
    %vm2554 = vweird.f32 %v2548
    %vm2555 = vweird.f32 %v2549
    %vm2556 = vmor %vm2554, %vm2555
    %v2557 = vsel %vm2556, %v2549, %v2553
    %v2558 = vand.u32 2147483647, %v2548
    %vm2559 = vcmp.eq.f32.partialorder %v2558, 8.507059e+37
    %v2560 = vand.u32 %v2548, 2147483648
    %v2561 = vor.u32 1.1754944e-38, %v2560
    %v2562 = vsel %vm2559, %v2561, %v2557
    %v2563 = vmul.f32 1.0, %v2562
    %v2564 = vtanh.pop %v2520
    %v2565 = vxor.u32 %v2525, 2147483648
    %v2566 = vmul.f32 %v2565, 1.442695
    %v2567 = vpow.pop %v2566
    %v2568 = vadd.f32 %v2567, 1.0
    %v2569 = vrcp.pop %v2568
    %v2570 = vmul.f32 %v2568, %v2569
    %v2571 = vsub.f32 1.0, %v2570
    %v2572 = vmul.f32 %v2569, %v2571
    %v2573 = vadd.f32 %v2569, %v2572
    %vm2574 = vweird.f32 %v2568
    %vm2575 = vweird.f32 %v2569
    %vm2576 = vmor %vm2574, %vm2575
    %v2577 = vsel %vm2576, %v2569, %v2573
    %v2578 = vand.u32 2147483647, %v2568
    %vm2579 = vcmp.eq.f32.partialorder %v2578, 8.507059e+37
    %v2580 = vand.u32 %v2568, 2147483648
    %v2581 = vor.u32 1.1754944e-38, %v2580
    %v2582 = vsel %vm2579, %v2581, %v2577
    %v2583 = vmul.f32 1.0, %v2582
    %v2584 = vmul.f32 %v2544, %v2564
    %v2585 = vld [vmem:[#allocation3] sm:$0xf]
    %v2587 = vrot.slane %v2585, 7
    %v2589 = vmul.f32 %v2583, %v2587
    %v2591 = vrot.slane %v2589, 1
    %v2593 = vsel %vm467, %v2591, 0.0
    %v2594 = vrot.slane %v2593, 4
    %v2595 = vadd.f32 %v2593, %v2594
    %v2596 = vrot.slane %v2595, 2
    %v2597 = vadd.f32 %v2595, %v2596
    %v2598 = vrot.slane %v2597, 1
    %v2599 = vadd.f32 %v2597, %v2598
    %v2600 = vadd.f32 %v2584, %v2599
    %v2601 = vtanh.pop %v2600
    %v2602 = vmul.f32 %v2563, %v2601
    %s2603 = scalar_lea.vmem %s6, %s2182
    %2604 = vst [vmem:[%s2603] sm:$0x1] %v2600
    %s2605 = scalar_lea.vmem %s7, %s2182
    %2606 = vst [vmem:[%s2605] sm:$0x1] %v2602
    %s2607 = sld [smem:[#allocation5 + $0x6]]
    %s2608 = scalar_lea.vmem %s2, %s2607
    %v2609 = vld [vmem:[%s2608] sm:$0x1]
    %v2610 = vperm.slane %v2609, 0
    %2611 = vst [vmem:[#allocation2] sm:$0x1f] %v2610
    %s2612 = sld [smem:[#allocation6 + $0x18]]
    %s2613 = scalar_lea.vmem %s7, %s2612
    %v2614 = vld [vmem:[%s2613] sm:$0x1]
    %2615 = vst [vmem:[#allocation2 + $0x9] sm:$0x1] %v2614
    %s2616 = scalar_lea.vmem %s6, %s2612
    %v2617 = vld [vmem:[%s2616] sm:$0x1]
    %2618 = vst [vmem:[#allocation3] sm:$0x1] %v2617
    %v2619 = vadd.f32 %v2614, 0.0
    %s2620 = sld [smem:[#allocation6 + $0x19]]
    %s2621 = scalar_lea.vmem %s7, %s2620
    %v2622 = vld [vmem:[%s2621] sm:$0x1]
    %2623 = vst [vmem:[#allocation2 + $0xa] sm:$0x1] %v2622
    %s2624 = scalar_lea.vmem %s6, %s2620
    %v2625 = vld [vmem:[%s2624] sm:$0x1]
    %2626 = vst [vmem:[#allocation3 + $0x1] sm:$0x1] %v2625
    %v2627 = vadd.f32 %v2619, %v2622
    %s2628 = sld [smem:[#allocation6 + $0x1a]]
    %s2629 = scalar_lea.vmem %s7, %s2628
    %v2630 = vld [vmem:[%s2629] sm:$0x1]
    %2631 = vst [vmem:[#allocation2 + $0xb] sm:$0x1] %v2630
    %s2632 = scalar_lea.vmem %s6, %s2628
    %v2633 = vld [vmem:[%s2632] sm:$0x1]
    %2634 = vst [vmem:[#allocation3 + $0x2] sm:$0x1] %v2633
    %v2635 = vadd.f32 %v2627, %v2630
    %s2636 = sld [smem:[#allocation6 + $0x1b]]
    %s2637 = scalar_lea.vmem %s7, %s2636
    %v2638 = vld [vmem:[%s2637] sm:$0x1]
    %2639 = vst [vmem:[#allocation2 + $0xc] sm:$0x1] %v2638
    %s2640 = scalar_lea.vmem %s6, %s2636
    %v2641 = vld [vmem:[%s2640] sm:$0x1]
    %2642 = vst [vmem:[#allocation3 + $0x3] sm:$0x1] %v2641
    %v2643 = vadd.f32 %v2635, %v2638
    %2644 = vst [vmem:[#allocation2 + $0x8] sm:$0x1] %v2643
    %v2645 = vld [vmem:[#allocation2] sm:$0x1f]
    %v2646 = vld [vmem:[#allocation2 + $0x8] sm:$0x1f]
    %v2647 = vld [vmem:[#allocation7] sm:$0xff]
    %v2648 = vld [vmem:[#allocation7 + $0x8] sm:$0xff]
    %v2649 = vld [vmem:[#allocation7 + $0x10] sm:$0xff]
    %v2650 = vld [vmem:[#allocation7 + $0x18] sm:$0xff]
    %v2651 = vld [vmem:[#allocation7 + $0x20] sm:$0xff]
    %v2652 = vld [vmem:[#allocation7 + $0x28] sm:$0xff]
    %v2653 = vld [vmem:[#allocation7 + $0x30] sm:$0xff]
    %v2654 = vld [vmem:[#allocation7 + $0x38] sm:$0xff]
    %v2655 = vld [vmem:[#allocation7 + $0x40] sm:$0xff]
    %v2656 = vld [vmem:[#allocation7 + $0x48] sm:$0xff]
    %v2657 = vld [vmem:[#allocation7 + $0x50] sm:$0xff]
    %v2658 = vld [vmem:[#allocation7 + $0x58] sm:$0xff]
    %v2659 = vld [vmem:[#allocation7 + $0x60] sm:$0xff]
    %v2660 = vld [vmem:[#allocation7 + $0x68] sm:$0xff]
    %v2661 = vld [vmem:[#allocation7 + $0x70] sm:$0xff]
    %v2662 = vld [vmem:[#allocation7 + $0x78] sm:$0xff]
    %v2663 = vld [vmem:[#allocation7 + $0x80] sm:$0xff]
    %v2664 = vld [vmem:[#allocation7 + $0x88] sm:$0xff]
    %v2665 = vld [vmem:[#allocation7 + $0x90] sm:$0xff]
    %v2666 = vld [vmem:[#allocation7 + $0x98] sm:$0xff]
    %v2667 = vld [vmem:[#allocation7 + $0xa0] sm:$0xff]
    %v2668 = vld [vmem:[#allocation7 + $0xa8] sm:$0xff]
    %v2669 = vld [vmem:[#allocation7 + $0xb0] sm:$0xff]
    %v2670 = vld [vmem:[#allocation7 + $0xb8] sm:$0xff]
    %v2671 = vld [vmem:[#allocation7 + $0xc0] sm:$0xff]
    %v2672 = vld [vmem:[#allocation7 + $0xc8] sm:$0xff]
    %v2673 = vld [vmem:[#allocation7 + $0xd0] sm:$0xff]
    %v2674 = vld [vmem:[#allocation7 + $0xd8] sm:$0xff]
    %v2675 = vld [vmem:[#allocation7 + $0xe0] sm:$0xff]
    %v2676 = vld [vmem:[#allocation7 + $0xe8] sm:$0xff]
    %v2677 = vld [vmem:[#allocation7 + $0xf0] sm:$0xff]
    %v2678 = vld [vmem:[#allocation7 + $0xf8] sm:$0xff]
    %v2679 = vld [vmem:[#allocation7 + $0x100] sm:$0xff]
    %v2680 = vld [vmem:[#allocation7 + $0x108] sm:$0xff]
    %v2681 = vld [vmem:[#allocation7 + $0x110] sm:$0xff]
    %v2682 = vld [vmem:[#allocation7 + $0x118] sm:$0xff]
    %v2683 = vld [vmem:[#allocation7 + $0x120] sm:$0xff]
    %v2684 = vld [vmem:[#allocation7 + $0x128] sm:$0xff]
    %v2685 = vld [vmem:[#allocation7 + $0x130] sm:$0xff]
    %v2686 = vld [vmem:[#allocation7 + $0x138] sm:$0xff]
    %v2687 = vld [vmem:[#allocation7 + $0x140] sm:$0xff]
    %v2688 = vld [vmem:[#allocation7 + $0x148] sm:$0xff]
    %v2689 = vld [vmem:[#allocation7 + $0x150] sm:$0xff]
    %v2690 = vld [vmem:[#allocation7 + $0x158] sm:$0xff]
    %v2691 = vld [vmem:[#allocation7 + $0x160] sm:$0xff]
    %v2692 = vld [vmem:[#allocation7 + $0x168] sm:$0xff]
    %v2693 = vld [vmem:[#allocation7 + $0x170] sm:$0xff]
    %v2694 = vld [vmem:[#allocation7 + $0x178] sm:$0xff]
    %v2695 = vld [vmem:[#allocation7 + $0x180] sm:$0xff]
    %v2696 = vld [vmem:[#allocation7 + $0x188] sm:$0xff]
    %v2697 = vld [vmem:[#allocation7 + $0x190] sm:$0xff]
    %v2698 = vld [vmem:[#allocation7 + $0x198] sm:$0xff]
    %v2699 = vld [vmem:[#allocation7 + $0x1a0] sm:$0xff]
    %v2700 = vld [vmem:[#allocation7 + $0x1a8] sm:$0xff]
    %v2701 = vld [vmem:[#allocation7 + $0x1b0] sm:$0xff]
    %v2702 = vld [vmem:[#allocation7 + $0x1b8] sm:$0xff]
    %v2703 = vld [vmem:[#allocation7 + $0x1c0] sm:$0xff]
    %v2704 = vld [vmem:[#allocation7 + $0x1c8] sm:$0xff]
    %v2705 = vld [vmem:[#allocation7 + $0x1d0] sm:$0xff]
    %v2706 = vld [vmem:[#allocation7 + $0x1d8] sm:$0xff]
    %v2707 = vld [vmem:[#allocation7 + $0x1e0] sm:$0xff]
    %v2708 = vld [vmem:[#allocation7 + $0x1e8] sm:$0xff]
    %v2709 = vld [vmem:[#allocation7 + $0x1f0] sm:$0xff]
    %v2710 = vld [vmem:[#allocation7 + $0x1f8] sm:$0xff]
    %v2711 = vld [vmem:[#allocation7 + $0x200] sm:$0xff]
    %v2712 = vld [vmem:[#allocation7 + $0x208] sm:$0xff]
    %v2713 = vld [vmem:[#allocation7 + $0x210] sm:$0xff]
    %v2714 = vld [vmem:[#allocation7 + $0x218] sm:$0xff]
    %v2715 = vld [vmem:[#allocation7 + $0x220] sm:$0xff]
    %v2716 = vld [vmem:[#allocation7 + $0x228] sm:$0xff]
    %v2717 = vld [vmem:[#allocation7 + $0x230] sm:$0xff]
    %v2718 = vld [vmem:[#allocation7 + $0x238] sm:$0xff]
    %v2719 = vld [vmem:[#allocation7 + $0x240] sm:$0xff]
    %v2720 = vld [vmem:[#allocation7 + $0x248] sm:$0xff]
    %v2721 = vld [vmem:[#allocation7 + $0x250] sm:$0xff]
    %v2722 = vld [vmem:[#allocation7 + $0x258] sm:$0xff]
    %v2723 = vld [vmem:[#allocation7 + $0x260] sm:$0xff]
    %v2724 = vld [vmem:[#allocation7 + $0x268] sm:$0xff]
    %v2725 = vld [vmem:[#allocation7 + $0x270] sm:$0xff]
    %v2726 = vld [vmem:[#allocation7 + $0x278] sm:$0xff]
    %v2727 = vld [vmem:[#allocation7 + $0x280] sm:$0xff]
    %v2728 = vld [vmem:[#allocation7 + $0x288] sm:$0xff]
    %v2729 = vld [vmem:[#allocation7 + $0x290] sm:$0xff]
    %v2730 = vld [vmem:[#allocation7 + $0x298] sm:$0xff]
    %v2731 = vld [vmem:[#allocation7 + $0x2a0] sm:$0xff]
    %v2732 = vld [vmem:[#allocation7 + $0x2a8] sm:$0xff]
    %v2733 = vld [vmem:[#allocation7 + $0x2b0] sm:$0xff]
    %v2734 = vld [vmem:[#allocation7 + $0x2b8] sm:$0xff]
    %v2735 = vld [vmem:[#allocation7 + $0x2c0] sm:$0xff]
    %v2736 = vld [vmem:[#allocation7 + $0x2c8] sm:$0xff]
    %v2737 = vld [vmem:[#allocation7 + $0x2d0] sm:$0xff]
    %v2738 = vld [vmem:[#allocation7 + $0x2d8] sm:$0xff]
    %v2739 = vld [vmem:[#allocation7 + $0x2e0] sm:$0xff]
    %v2740 = vld [vmem:[#allocation7 + $0x2e8] sm:$0xff]
    %v2741 = vld [vmem:[#allocation7 + $0x2f0] sm:$0xff]
    %v2742 = vld [vmem:[#allocation7 + $0x2f8] sm:$0xff]
    %v2743 = vld [vmem:[#allocation7 + $0x300] sm:$0xff]
    %v2744 = vld [vmem:[#allocation7 + $0x308] sm:$0xff]
    %v2745 = vld [vmem:[#allocation7 + $0x310] sm:$0xff]
    %v2746 = vld [vmem:[#allocation7 + $0x318] sm:$0xff]
    %v2747 = vld [vmem:[#allocation7 + $0x320] sm:$0xff]
    %v2748 = vld [vmem:[#allocation7 + $0x328] sm:$0xff]
    %v2749 = vld [vmem:[#allocation7 + $0x330] sm:$0xff]
    %v2750 = vld [vmem:[#allocation7 + $0x338] sm:$0xff]
    %v2751 = vld [vmem:[#allocation7 + $0x340] sm:$0xff]
    %v2752 = vld [vmem:[#allocation7 + $0x348] sm:$0xff]
    %v2753 = vld [vmem:[#allocation7 + $0x350] sm:$0xff]
    %v2754 = vld [vmem:[#allocation7 + $0x358] sm:$0xff]
    %v2755 = vld [vmem:[#allocation7 + $0x360] sm:$0xff]
    %v2756 = vld [vmem:[#allocation7 + $0x368] sm:$0xff]
    %v2757 = vld [vmem:[#allocation7 + $0x370] sm:$0xff]
    %v2758 = vld [vmem:[#allocation7 + $0x378] sm:$0xff]
    %v2759 = vld [vmem:[#allocation7 + $0x380] sm:$0xff]
    %v2760 = vld [vmem:[#allocation7 + $0x388] sm:$0xff]
    %v2761 = vld [vmem:[#allocation7 + $0x390] sm:$0xff]
    %v2762 = vld [vmem:[#allocation7 + $0x398] sm:$0xff]
    %v2763 = vld [vmem:[#allocation7 + $0x3a0] sm:$0xff]
    %v2764 = vld [vmem:[#allocation7 + $0x3a8] sm:$0xff]
    %v2765 = vld [vmem:[#allocation7 + $0x3b0] sm:$0xff]
    %v2766 = vld [vmem:[#allocation7 + $0x3b8] sm:$0xff]
    %v2767 = vld [vmem:[#allocation7 + $0x3c0] sm:$0xff]
    %v2768 = vld [vmem:[#allocation7 + $0x3c8] sm:$0xff]
    %v2769 = vld [vmem:[#allocation7 + $0x3d0] sm:$0xff]
    %v2770 = vld [vmem:[#allocation7 + $0x3d8] sm:$0xff]
    %v2771 = vld [vmem:[#allocation7 + $0x3e0] sm:$0xff]
    %v2772 = vld [vmem:[#allocation7 + $0x3e8] sm:$0xff]
    %v2773 = vld [vmem:[#allocation7 + $0x3f0] sm:$0xff]
    %v2774 = vld [vmem:[#allocation7 + $0x3f8] sm:$0xff]
    %2775 = vmatpush.msra.mxu0 %v2707
    %2776 = vmatpush.msra.mxu0 %v2703
    %2777 = vmatpush.msra.mxu0 %v2699
    %2778 = vmatpush.msra.mxu0 %v2695
    %2779 = vmatpush.msra.mxu0 %v2691
    %2780 = vmatpush.msra.mxu0 %v2687
    %2781 = vmatpush.msra.mxu0 %v2683
    %2782 = vmatpush.msra.mxu0 %v2679
    %2783 = vmatpush.msra.mxu0 %v2675
    %2784 = vmatpush.msra.mxu0 %v2671
    %2785 = vmatpush.msra.mxu0 %v2667
    %2786 = vmatpush.msra.mxu0 %v2663
    %2787 = vmatpush.msra.mxu0 %v2659
    %2788 = vmatpush.msra.mxu0 %v2655
    %2789 = vmatpush.msra.mxu0 %v2651
    %2790 = vmatpush.msra.mxu0 %v2647
    %2791 = vmatmul.f32.gmra.mxu0 %v2645
    %v2792 = vpop.f32.mrf.mxu0
    %v2793 = vadd.f32 0.0, %v2792
    %2794 = vdwg.mxu0
    %2795 = vmatpush.msra.mxu0 %v2771
    %2796 = vmatpush.msra.mxu0 %v2767
    %2797 = vmatpush.msra.mxu0 %v2763
    %2798 = vmatpush.msra.mxu0 %v2759
    %2799 = vmatpush.msra.mxu0 %v2755
    %2800 = vmatpush.msra.mxu0 %v2751
    %2801 = vmatpush.msra.mxu0 %v2747
    %2802 = vmatpush.msra.mxu0 %v2743
    %2803 = vmatpush.msra.mxu0 %v2739
    %2804 = vmatpush.msra.mxu0 %v2735
    %2805 = vmatpush.msra.mxu0 %v2731
    %2806 = vmatpush.msra.mxu0 %v2727
    %2807 = vmatpush.msra.mxu0 %v2723
    %2808 = vmatpush.msra.mxu0 %v2719
    %2809 = vmatpush.msra.mxu0 %v2715
    %2810 = vmatpush.msra.mxu0 %v2711
    %2811 = vmatmul.f32.gmra.mxu0 %v2646
    %v2812 = vpop.f32.mrf.mxu0
    %v2813 = vadd.f32 %v2793, %v2812
    %2814 = vdwg.mxu0
    %2815 = vmatpush.msra.mxu0 %v2708
    %2816 = vmatpush.msra.mxu0 %v2704
    %2817 = vmatpush.msra.mxu0 %v2700
    %2818 = vmatpush.msra.mxu0 %v2696
    %2819 = vmatpush.msra.mxu0 %v2692
    %2820 = vmatpush.msra.mxu0 %v2688
    %2821 = vmatpush.msra.mxu0 %v2684
    %2822 = vmatpush.msra.mxu0 %v2680
    %2823 = vmatpush.msra.mxu0 %v2676
    %2824 = vmatpush.msra.mxu0 %v2672
    %2825 = vmatpush.msra.mxu0 %v2668
    %2826 = vmatpush.msra.mxu0 %v2664
    %2827 = vmatpush.msra.mxu0 %v2660
    %2828 = vmatpush.msra.mxu0 %v2656
    %2829 = vmatpush.msra.mxu0 %v2652
    %2830 = vmatpush.msra.mxu0 %v2648
    %2831 = vmatmul.f32.gmra.mxu0 %v2645
    %v2832 = vpop.f32.mrf.mxu0
    %v2833 = vadd.f32 0.0, %v2832
    %2834 = vdwg.mxu0
    %2835 = vmatpush.msra.mxu0 %v2772
    %2836 = vmatpush.msra.mxu0 %v2768
    %2837 = vmatpush.msra.mxu0 %v2764
    %2838 = vmatpush.msra.mxu0 %v2760
    %2839 = vmatpush.msra.mxu0 %v2756
    %2840 = vmatpush.msra.mxu0 %v2752
    %2841 = vmatpush.msra.mxu0 %v2748
    %2842 = vmatpush.msra.mxu0 %v2744
    %2843 = vmatpush.msra.mxu0 %v2740
    %2844 = vmatpush.msra.mxu0 %v2736
    %2845 = vmatpush.msra.mxu0 %v2732
    %2846 = vmatpush.msra.mxu0 %v2728
    %2847 = vmatpush.msra.mxu0 %v2724
    %2848 = vmatpush.msra.mxu0 %v2720
    %2849 = vmatpush.msra.mxu0 %v2716
    %2850 = vmatpush.msra.mxu0 %v2712
    %2851 = vmatmul.f32.gmra.mxu0 %v2646
    %v2852 = vpop.f32.mrf.mxu0
    %v2853 = vadd.f32 %v2833, %v2852
    %2854 = vdwg.mxu0
    %2855 = vmatpush.msra.mxu0 %v2709
    %2856 = vmatpush.msra.mxu0 %v2705
    %2857 = vmatpush.msra.mxu0 %v2701
    %2858 = vmatpush.msra.mxu0 %v2697
    %2859 = vmatpush.msra.mxu0 %v2693
    %2860 = vmatpush.msra.mxu0 %v2689
    %2861 = vmatpush.msra.mxu0 %v2685
    %2862 = vmatpush.msra.mxu0 %v2681
    %2863 = vmatpush.msra.mxu0 %v2677
    %2864 = vmatpush.msra.mxu0 %v2673
    %2865 = vmatpush.msra.mxu0 %v2669
    %2866 = vmatpush.msra.mxu0 %v2665
    %2867 = vmatpush.msra.mxu0 %v2661
    %2868 = vmatpush.msra.mxu0 %v2657
    %2869 = vmatpush.msra.mxu0 %v2653
    %2870 = vmatpush.msra.mxu0 %v2649
    %2871 = vmatmul.f32.gmra.mxu0 %v2645
    %v2872 = vpop.f32.mrf.mxu0
    %v2873 = vadd.f32 0.0, %v2872
    %2874 = vdwg.mxu0
    %2875 = vmatpush.msra.mxu0 %v2773
    %2876 = vmatpush.msra.mxu0 %v2769
    %2877 = vmatpush.msra.mxu0 %v2765
    %2878 = vmatpush.msra.mxu0 %v2761
    %2879 = vmatpush.msra.mxu0 %v2757
    %2880 = vmatpush.msra.mxu0 %v2753
    %2881 = vmatpush.msra.mxu0 %v2749
    %2882 = vmatpush.msra.mxu0 %v2745
    %2883 = vmatpush.msra.mxu0 %v2741
    %2884 = vmatpush.msra.mxu0 %v2737
    %2885 = vmatpush.msra.mxu0 %v2733
    %2886 = vmatpush.msra.mxu0 %v2729
    %2887 = vmatpush.msra.mxu0 %v2725
    %2888 = vmatpush.msra.mxu0 %v2721
    %2889 = vmatpush.msra.mxu0 %v2717
    %2890 = vmatpush.msra.mxu0 %v2713
    %2891 = vmatmul.f32.gmra.mxu0 %v2646
    %v2892 = vpop.f32.mrf.mxu0
    %v2893 = vadd.f32 %v2873, %v2892
    %2894 = vdwg.mxu0
    %2895 = vmatpush.msra.mxu0 %v2710
    %2896 = vmatpush.msra.mxu0 %v2706
    %2897 = vmatpush.msra.mxu0 %v2702
    %2898 = vmatpush.msra.mxu0 %v2698
    %2899 = vmatpush.msra.mxu0 %v2694
    %2900 = vmatpush.msra.mxu0 %v2690
    %2901 = vmatpush.msra.mxu0 %v2686
    %2902 = vmatpush.msra.mxu0 %v2682
    %2903 = vmatpush.msra.mxu0 %v2678
    %2904 = vmatpush.msra.mxu0 %v2674
    %2905 = vmatpush.msra.mxu0 %v2670
    %2906 = vmatpush.msra.mxu0 %v2666
    %2907 = vmatpush.msra.mxu0 %v2662
    %2908 = vmatpush.msra.mxu0 %v2658
    %2909 = vmatpush.msra.mxu0 %v2654
    %2910 = vmatpush.msra.mxu0 %v2650
    %2911 = vmatmul.f32.gmra.mxu0 %v2645
    %v2912 = vpop.f32.mrf.mxu0
    %v2913 = vadd.f32 0.0, %v2912
    %2914 = vdwg.mxu0
    %2915 = vmatpush.msra.mxu0 %v2774
    %2916 = vmatpush.msra.mxu0 %v2770
    %2917 = vmatpush.msra.mxu0 %v2766
    %2918 = vmatpush.msra.mxu0 %v2762
    %2919 = vmatpush.msra.mxu0 %v2758
    %2920 = vmatpush.msra.mxu0 %v2754
    %2921 = vmatpush.msra.mxu0 %v2750
    %2922 = vmatpush.msra.mxu0 %v2746
    %2923 = vmatpush.msra.mxu0 %v2742
    %2924 = vmatpush.msra.mxu0 %v2738
    %2925 = vmatpush.msra.mxu0 %v2734
    %2926 = vmatpush.msra.mxu0 %v2730
    %2927 = vmatpush.msra.mxu0 %v2726
    %2928 = vmatpush.msra.mxu0 %v2722
    %2929 = vmatpush.msra.mxu0 %v2718
    %2930 = vmatpush.msra.mxu0 %v2714
    %2931 = vmatmul.f32.gmra.mxu0 %v2646
    %v2932 = vpop.f32.mrf.mxu0
    %v2933 = vadd.f32 %v2913, %v2932
    %2934 = vdwg.mxu0
    %v2935 = vld [vmem:[%s4] sm:$0x7]
    %v2937 = vperm.slane %v2935, 0
    %v2938 = vperm.slane %v2935, 1
    %v2939 = vperm.slane %v2935, 2
    %v2943 = vadd.f32 %v2813, %v2937
    %v2944 = vadd.f32 %v2853, %v2938
    %v2945 = vadd.f32 %v2893, %v2939
    %v2946 = vld [vmem:[%s5] sm:$0x1]
    %v2948 = vperm.slane %v2946, 0
    %v2950 = vadd.f32 %v2933, %v2948
    %v2951 = vxor.u32 %v2943, 2147483648
    %v2952 = vmul.f32 %v2951, 1.442695
    %v2953 = vpow.pop %v2952
    %v2954 = vadd.f32 %v2953, 1.0
    %v2955 = vrcp.pop %v2954
    %v2956 = vmul.f32 %v2954, %v2955
    %v2957 = vsub.f32 1.0, %v2956
    %v2958 = vmul.f32 %v2955, %v2957
    %v2959 = vadd.f32 %v2955, %v2958
    %vm2960 = vweird.f32 %v2954
    %vm2961 = vweird.f32 %v2955
    %vm2962 = vmor %vm2960, %vm2961
    %v2963 = vsel %vm2962, %v2955, %v2959
    %v2964 = vand.u32 2147483647, %v2954
    %vm2965 = vcmp.eq.f32.partialorder %v2964, 8.507059e+37
    %v2966 = vand.u32 %v2954, 2147483648
    %v2967 = vor.u32 1.1754944e-38, %v2966
    %v2968 = vsel %vm2965, %v2967, %v2963
    %v2969 = vmul.f32 1.0, %v2968
    %v2970 = vxor.u32 %v2944, 2147483648
    %v2971 = vmul.f32 %v2970, 1.442695
    %v2972 = vpow.pop %v2971
    %v2973 = vadd.f32 %v2972, 1.0
    %v2974 = vrcp.pop %v2973
    %v2975 = vmul.f32 %v2973, %v2974
    %v2976 = vsub.f32 1.0, %v2975
    %v2977 = vmul.f32 %v2974, %v2976
    %v2978 = vadd.f32 %v2974, %v2977
    %vm2979 = vweird.f32 %v2973
    %vm2980 = vweird.f32 %v2974
    %vm2981 = vmor %vm2979, %vm2980
    %v2982 = vsel %vm2981, %v2974, %v2978
    %v2983 = vand.u32 2147483647, %v2973
    %vm2984 = vcmp.eq.f32.partialorder %v2983, 8.507059e+37
    %v2985 = vand.u32 %v2973, 2147483648
    %v2986 = vor.u32 1.1754944e-38, %v2985
    %v2987 = vsel %vm2984, %v2986, %v2982
    %v2988 = vmul.f32 1.0, %v2987
    %v2989 = vtanh.pop %v2945
    %v2990 = vxor.u32 %v2950, 2147483648
    %v2991 = vmul.f32 %v2990, 1.442695
    %v2992 = vpow.pop %v2991
    %v2993 = vadd.f32 %v2992, 1.0
    %v2994 = vrcp.pop %v2993
    %v2995 = vmul.f32 %v2993, %v2994
    %v2996 = vsub.f32 1.0, %v2995
    %v2997 = vmul.f32 %v2994, %v2996
    %v2998 = vadd.f32 %v2994, %v2997
    %vm2999 = vweird.f32 %v2993
    %vm3000 = vweird.f32 %v2994
    %vm3001 = vmor %vm2999, %vm3000
    %v3002 = vsel %vm3001, %v2994, %v2998
    %v3003 = vand.u32 2147483647, %v2993
    %vm3004 = vcmp.eq.f32.partialorder %v3003, 8.507059e+37
    %v3005 = vand.u32 %v2993, 2147483648
    %v3006 = vor.u32 1.1754944e-38, %v3005
    %v3007 = vsel %vm3004, %v3006, %v3002
    %v3008 = vmul.f32 1.0, %v3007
    %v3009 = vmul.f32 %v2969, %v2989
    %v3010 = vld [vmem:[#allocation3] sm:$0xf]
    %v3012 = vrot.slane %v3010, 7
    %v3014 = vmul.f32 %v3008, %v3012
    %v3016 = vrot.slane %v3014, 1
    %v3018 = vsel %vm467, %v3016, 0.0
    %v3019 = vrot.slane %v3018, 4
    %v3020 = vadd.f32 %v3018, %v3019
    %v3021 = vrot.slane %v3020, 2
    %v3022 = vadd.f32 %v3020, %v3021
    %v3023 = vrot.slane %v3022, 1
    %v3024 = vadd.f32 %v3022, %v3023
    %v3025 = vadd.f32 %v3009, %v3024
    %v3026 = vtanh.pop %v3025
    %v3027 = vmul.f32 %v2988, %v3026
    %s3028 = scalar_lea.vmem %s6, %s2607
    %3029 = vst [vmem:[%s3028] sm:$0x1] %v3025
    %s3030 = scalar_lea.vmem %s7, %s2607
    %3031 = vst [vmem:[%s3030] sm:$0x1] %v3027
    %s3032 = sld [smem:[#allocation5 + $0x7]]
    %s3033 = scalar_lea.vmem %s2, %s3032
    %v3034 = vld [vmem:[%s3033] sm:$0x1]
    %v3035 = vperm.slane %v3034, 0
    %3036 = vst [vmem:[#allocation2] sm:$0x1f] %v3035
    %s3037 = sld [smem:[#allocation6 + $0x1c]]
    %s3038 = scalar_lea.vmem %s7, %s3037
    %v3039 = vld [vmem:[%s3038] sm:$0x1]
    %3040 = vst [vmem:[#allocation2 + $0x9] sm:$0x1] %v3039
    %s3041 = scalar_lea.vmem %s6, %s3037
    %v3042 = vld [vmem:[%s3041] sm:$0x1]
    %3043 = vst [vmem:[#allocation3] sm:$0x1] %v3042
    %v3044 = vadd.f32 %v3039, 0.0
    %s3045 = sld [smem:[#allocation6 + $0x1d]]
    %s3046 = scalar_lea.vmem %s7, %s3045
    %v3047 = vld [vmem:[%s3046] sm:$0x1]
    %3048 = vst [vmem:[#allocation2 + $0xa] sm:$0x1] %v3047
    %s3049 = scalar_lea.vmem %s6, %s3045
    %v3050 = vld [vmem:[%s3049] sm:$0x1]
    %3051 = vst [vmem:[#allocation3 + $0x1] sm:$0x1] %v3050
    %v3052 = vadd.f32 %v3044, %v3047
    %s3053 = sld [smem:[#allocation6 + $0x1e]]
    %s3054 = scalar_lea.vmem %s7, %s3053
    %v3055 = vld [vmem:[%s3054] sm:$0x1]
    %3056 = vst [vmem:[#allocation2 + $0xb] sm:$0x1] %v3055
    %s3057 = scalar_lea.vmem %s6, %s3053
    %v3058 = vld [vmem:[%s3057] sm:$0x1]
    %3059 = vst [vmem:[#allocation3 + $0x2] sm:$0x1] %v3058
    %v3060 = vadd.f32 %v3052, %v3055
    %s3061 = sld [smem:[#allocation6 + $0x1f]]
    %s3062 = scalar_lea.vmem %s7, %s3061
    %v3063 = vld [vmem:[%s3062] sm:$0x1]
    %3064 = vst [vmem:[#allocation2 + $0xc] sm:$0x1] %v3063
    %s3065 = scalar_lea.vmem %s6, %s3061
    %v3066 = vld [vmem:[%s3065] sm:$0x1]
    %3067 = vst [vmem:[#allocation3 + $0x3] sm:$0x1] %v3066
    %v3068 = vadd.f32 %v3060, %v3063
    %3069 = vst [vmem:[#allocation2 + $0x8] sm:$0x1] %v3068
    %v3070 = vld [vmem:[#allocation2] sm:$0x1f]
    %v3071 = vld [vmem:[#allocation2 + $0x8] sm:$0x1f]
    %v3072 = vld [vmem:[#allocation7] sm:$0xff]
    %v3073 = vld [vmem:[#allocation7 + $0x8] sm:$0xff]
    %v3074 = vld [vmem:[#allocation7 + $0x10] sm:$0xff]
    %v3075 = vld [vmem:[#allocation7 + $0x18] sm:$0xff]
    %v3076 = vld [vmem:[#allocation7 + $0x20] sm:$0xff]
    %v3077 = vld [vmem:[#allocation7 + $0x28] sm:$0xff]
    %v3078 = vld [vmem:[#allocation7 + $0x30] sm:$0xff]
    %v3079 = vld [vmem:[#allocation7 + $0x38] sm:$0xff]
    %v3080 = vld [vmem:[#allocation7 + $0x40] sm:$0xff]
    %v3081 = vld [vmem:[#allocation7 + $0x48] sm:$0xff]
    %v3082 = vld [vmem:[#allocation7 + $0x50] sm:$0xff]
    %v3083 = vld [vmem:[#allocation7 + $0x58] sm:$0xff]
    %v3084 = vld [vmem:[#allocation7 + $0x60] sm:$0xff]
    %v3085 = vld [vmem:[#allocation7 + $0x68] sm:$0xff]
    %v3086 = vld [vmem:[#allocation7 + $0x70] sm:$0xff]
    %v3087 = vld [vmem:[#allocation7 + $0x78] sm:$0xff]
    %v3088 = vld [vmem:[#allocation7 + $0x80] sm:$0xff]
    %v3089 = vld [vmem:[#allocation7 + $0x88] sm:$0xff]
    %v3090 = vld [vmem:[#allocation7 + $0x90] sm:$0xff]
    %v3091 = vld [vmem:[#allocation7 + $0x98] sm:$0xff]
    %v3092 = vld [vmem:[#allocation7 + $0xa0] sm:$0xff]
    %v3093 = vld [vmem:[#allocation7 + $0xa8] sm:$0xff]
    %v3094 = vld [vmem:[#allocation7 + $0xb0] sm:$0xff]
    %v3095 = vld [vmem:[#allocation7 + $0xb8] sm:$0xff]
    %v3096 = vld [vmem:[#allocation7 + $0xc0] sm:$0xff]
    %v3097 = vld [vmem:[#allocation7 + $0xc8] sm:$0xff]
    %v3098 = vld [vmem:[#allocation7 + $0xd0] sm:$0xff]
    %v3099 = vld [vmem:[#allocation7 + $0xd8] sm:$0xff]
    %v3100 = vld [vmem:[#allocation7 + $0xe0] sm:$0xff]
    %v3101 = vld [vmem:[#allocation7 + $0xe8] sm:$0xff]
    %v3102 = vld [vmem:[#allocation7 + $0xf0] sm:$0xff]
    %v3103 = vld [vmem:[#allocation7 + $0xf8] sm:$0xff]
    %v3104 = vld [vmem:[#allocation7 + $0x100] sm:$0xff]
    %v3105 = vld [vmem:[#allocation7 + $0x108] sm:$0xff]
    %v3106 = vld [vmem:[#allocation7 + $0x110] sm:$0xff]
    %v3107 = vld [vmem:[#allocation7 + $0x118] sm:$0xff]
    %v3108 = vld [vmem:[#allocation7 + $0x120] sm:$0xff]
    %v3109 = vld [vmem:[#allocation7 + $0x128] sm:$0xff]
    %v3110 = vld [vmem:[#allocation7 + $0x130] sm:$0xff]
    %v3111 = vld [vmem:[#allocation7 + $0x138] sm:$0xff]
    %v3112 = vld [vmem:[#allocation7 + $0x140] sm:$0xff]
    %v3113 = vld [vmem:[#allocation7 + $0x148] sm:$0xff]
    %v3114 = vld [vmem:[#allocation7 + $0x150] sm:$0xff]
    %v3115 = vld [vmem:[#allocation7 + $0x158] sm:$0xff]
    %v3116 = vld [vmem:[#allocation7 + $0x160] sm:$0xff]
    %v3117 = vld [vmem:[#allocation7 + $0x168] sm:$0xff]
    %v3118 = vld [vmem:[#allocation7 + $0x170] sm:$0xff]
    %v3119 = vld [vmem:[#allocation7 + $0x178] sm:$0xff]
    %v3120 = vld [vmem:[#allocation7 + $0x180] sm:$0xff]
    %v3121 = vld [vmem:[#allocation7 + $0x188] sm:$0xff]
    %v3122 = vld [vmem:[#allocation7 + $0x190] sm:$0xff]
    %v3123 = vld [vmem:[#allocation7 + $0x198] sm:$0xff]
    %v3124 = vld [vmem:[#allocation7 + $0x1a0] sm:$0xff]
    %v3125 = vld [vmem:[#allocation7 + $0x1a8] sm:$0xff]
    %v3126 = vld [vmem:[#allocation7 + $0x1b0] sm:$0xff]
    %v3127 = vld [vmem:[#allocation7 + $0x1b8] sm:$0xff]
    %v3128 = vld [vmem:[#allocation7 + $0x1c0] sm:$0xff]
    %v3129 = vld [vmem:[#allocation7 + $0x1c8] sm:$0xff]
    %v3130 = vld [vmem:[#allocation7 + $0x1d0] sm:$0xff]
    %v3131 = vld [vmem:[#allocation7 + $0x1d8] sm:$0xff]
    %v3132 = vld [vmem:[#allocation7 + $0x1e0] sm:$0xff]
    %v3133 = vld [vmem:[#allocation7 + $0x1e8] sm:$0xff]
    %v3134 = vld [vmem:[#allocation7 + $0x1f0] sm:$0xff]
    %v3135 = vld [vmem:[#allocation7 + $0x1f8] sm:$0xff]
    %v3136 = vld [vmem:[#allocation7 + $0x200] sm:$0xff]
    %v3137 = vld [vmem:[#allocation7 + $0x208] sm:$0xff]
    %v3138 = vld [vmem:[#allocation7 + $0x210] sm:$0xff]
    %v3139 = vld [vmem:[#allocation7 + $0x218] sm:$0xff]
    %v3140 = vld [vmem:[#allocation7 + $0x220] sm:$0xff]
    %v3141 = vld [vmem:[#allocation7 + $0x228] sm:$0xff]
    %v3142 = vld [vmem:[#allocation7 + $0x230] sm:$0xff]
    %v3143 = vld [vmem:[#allocation7 + $0x238] sm:$0xff]
    %v3144 = vld [vmem:[#allocation7 + $0x240] sm:$0xff]
    %v3145 = vld [vmem:[#allocation7 + $0x248] sm:$0xff]
    %v3146 = vld [vmem:[#allocation7 + $0x250] sm:$0xff]
    %v3147 = vld [vmem:[#allocation7 + $0x258] sm:$0xff]
    %v3148 = vld [vmem:[#allocation7 + $0x260] sm:$0xff]
    %v3149 = vld [vmem:[#allocation7 + $0x268] sm:$0xff]
    %v3150 = vld [vmem:[#allocation7 + $0x270] sm:$0xff]
    %v3151 = vld [vmem:[#allocation7 + $0x278] sm:$0xff]
    %v3152 = vld [vmem:[#allocation7 + $0x280] sm:$0xff]
    %v3153 = vld [vmem:[#allocation7 + $0x288] sm:$0xff]
    %v3154 = vld [vmem:[#allocation7 + $0x290] sm:$0xff]
    %v3155 = vld [vmem:[#allocation7 + $0x298] sm:$0xff]
    %v3156 = vld [vmem:[#allocation7 + $0x2a0] sm:$0xff]
    %v3157 = vld [vmem:[#allocation7 + $0x2a8] sm:$0xff]
    %v3158 = vld [vmem:[#allocation7 + $0x2b0] sm:$0xff]
    %v3159 = vld [vmem:[#allocation7 + $0x2b8] sm:$0xff]
    %v3160 = vld [vmem:[#allocation7 + $0x2c0] sm:$0xff]
    %v3161 = vld [vmem:[#allocation7 + $0x2c8] sm:$0xff]
    %v3162 = vld [vmem:[#allocation7 + $0x2d0] sm:$0xff]
    %v3163 = vld [vmem:[#allocation7 + $0x2d8] sm:$0xff]
    %v3164 = vld [vmem:[#allocation7 + $0x2e0] sm:$0xff]
    %v3165 = vld [vmem:[#allocation7 + $0x2e8] sm:$0xff]
    %v3166 = vld [vmem:[#allocation7 + $0x2f0] sm:$0xff]
    %v3167 = vld [vmem:[#allocation7 + $0x2f8] sm:$0xff]
    %v3168 = vld [vmem:[#allocation7 + $0x300] sm:$0xff]
    %v3169 = vld [vmem:[#allocation7 + $0x308] sm:$0xff]
    %v3170 = vld [vmem:[#allocation7 + $0x310] sm:$0xff]
    %v3171 = vld [vmem:[#allocation7 + $0x318] sm:$0xff]
    %v3172 = vld [vmem:[#allocation7 + $0x320] sm:$0xff]
    %v3173 = vld [vmem:[#allocation7 + $0x328] sm:$0xff]
    %v3174 = vld [vmem:[#allocation7 + $0x330] sm:$0xff]
    %v3175 = vld [vmem:[#allocation7 + $0x338] sm:$0xff]
    %v3176 = vld [vmem:[#allocation7 + $0x340] sm:$0xff]
    %v3177 = vld [vmem:[#allocation7 + $0x348] sm:$0xff]
    %v3178 = vld [vmem:[#allocation7 + $0x350] sm:$0xff]
    %v3179 = vld [vmem:[#allocation7 + $0x358] sm:$0xff]
    %v3180 = vld [vmem:[#allocation7 + $0x360] sm:$0xff]
    %v3181 = vld [vmem:[#allocation7 + $0x368] sm:$0xff]
    %v3182 = vld [vmem:[#allocation7 + $0x370] sm:$0xff]
    %v3183 = vld [vmem:[#allocation7 + $0x378] sm:$0xff]
    %v3184 = vld [vmem:[#allocation7 + $0x380] sm:$0xff]
    %v3185 = vld [vmem:[#allocation7 + $0x388] sm:$0xff]
    %v3186 = vld [vmem:[#allocation7 + $0x390] sm:$0xff]
    %v3187 = vld [vmem:[#allocation7 + $0x398] sm:$0xff]
    %v3188 = vld [vmem:[#allocation7 + $0x3a0] sm:$0xff]
    %v3189 = vld [vmem:[#allocation7 + $0x3a8] sm:$0xff]
    %v3190 = vld [vmem:[#allocation7 + $0x3b0] sm:$0xff]
    %v3191 = vld [vmem:[#allocation7 + $0x3b8] sm:$0xff]
    %v3192 = vld [vmem:[#allocation7 + $0x3c0] sm:$0xff]
    %v3193 = vld [vmem:[#allocation7 + $0x3c8] sm:$0xff]
    %v3194 = vld [vmem:[#allocation7 + $0x3d0] sm:$0xff]
    %v3195 = vld [vmem:[#allocation7 + $0x3d8] sm:$0xff]
    %v3196 = vld [vmem:[#allocation7 + $0x3e0] sm:$0xff]
    %v3197 = vld [vmem:[#allocation7 + $0x3e8] sm:$0xff]
    %v3198 = vld [vmem:[#allocation7 + $0x3f0] sm:$0xff]
    %v3199 = vld [vmem:[#allocation7 + $0x3f8] sm:$0xff]
    %3200 = vmatpush.msra.mxu0 %v3132
    %3201 = vmatpush.msra.mxu0 %v3128
    %3202 = vmatpush.msra.mxu0 %v3124
    %3203 = vmatpush.msra.mxu0 %v3120
    %3204 = vmatpush.msra.mxu0 %v3116
    %3205 = vmatpush.msra.mxu0 %v3112
    %3206 = vmatpush.msra.mxu0 %v3108
    %3207 = vmatpush.msra.mxu0 %v3104
    %3208 = vmatpush.msra.mxu0 %v3100
    %3209 = vmatpush.msra.mxu0 %v3096
    %3210 = vmatpush.msra.mxu0 %v3092
    %3211 = vmatpush.msra.mxu0 %v3088
    %3212 = vmatpush.msra.mxu0 %v3084
    %3213 = vmatpush.msra.mxu0 %v3080
    %3214 = vmatpush.msra.mxu0 %v3076
    %3215 = vmatpush.msra.mxu0 %v3072
    %3216 = vmatmul.f32.gmra.mxu0 %v3070
    %v3217 = vpop.f32.mrf.mxu0
    %v3218 = vadd.f32 0.0, %v3217
    %3219 = vdwg.mxu0
    %3220 = vmatpush.msra.mxu0 %v3196
    %3221 = vmatpush.msra.mxu0 %v3192
    %3222 = vmatpush.msra.mxu0 %v3188
    %3223 = vmatpush.msra.mxu0 %v3184
    %3224 = vmatpush.msra.mxu0 %v3180
    %3225 = vmatpush.msra.mxu0 %v3176
    %3226 = vmatpush.msra.mxu0 %v3172
    %3227 = vmatpush.msra.mxu0 %v3168
    %3228 = vmatpush.msra.mxu0 %v3164
    %3229 = vmatpush.msra.mxu0 %v3160
    %3230 = vmatpush.msra.mxu0 %v3156
    %3231 = vmatpush.msra.mxu0 %v3152
    %3232 = vmatpush.msra.mxu0 %v3148
    %3233 = vmatpush.msra.mxu0 %v3144
    %3234 = vmatpush.msra.mxu0 %v3140
    %3235 = vmatpush.msra.mxu0 %v3136
    %3236 = vmatmul.f32.gmra.mxu0 %v3071
    %v3237 = vpop.f32.mrf.mxu0
    %v3238 = vadd.f32 %v3218, %v3237
    %3239 = vdwg.mxu0
    %3240 = vmatpush.msra.mxu0 %v3133
    %3241 = vmatpush.msra.mxu0 %v3129
    %3242 = vmatpush.msra.mxu0 %v3125
    %3243 = vmatpush.msra.mxu0 %v3121
    %3244 = vmatpush.msra.mxu0 %v3117
    %3245 = vmatpush.msra.mxu0 %v3113
    %3246 = vmatpush.msra.mxu0 %v3109
    %3247 = vmatpush.msra.mxu0 %v3105
    %3248 = vmatpush.msra.mxu0 %v3101
    %3249 = vmatpush.msra.mxu0 %v3097
    %3250 = vmatpush.msra.mxu0 %v3093
    %3251 = vmatpush.msra.mxu0 %v3089
    %3252 = vmatpush.msra.mxu0 %v3085
    %3253 = vmatpush.msra.mxu0 %v3081
    %3254 = vmatpush.msra.mxu0 %v3077
    %3255 = vmatpush.msra.mxu0 %v3073
    %3256 = vmatmul.f32.gmra.mxu0 %v3070
    %v3257 = vpop.f32.mrf.mxu0
    %v3258 = vadd.f32 0.0, %v3257
    %3259 = vdwg.mxu0
    %3260 = vmatpush.msra.mxu0 %v3197
    %3261 = vmatpush.msra.mxu0 %v3193
    %3262 = vmatpush.msra.mxu0 %v3189
    %3263 = vmatpush.msra.mxu0 %v3185
    %3264 = vmatpush.msra.mxu0 %v3181
    %3265 = vmatpush.msra.mxu0 %v3177
    %3266 = vmatpush.msra.mxu0 %v3173
    %3267 = vmatpush.msra.mxu0 %v3169
    %3268 = vmatpush.msra.mxu0 %v3165
    %3269 = vmatpush.msra.mxu0 %v3161
    %3270 = vmatpush.msra.mxu0 %v3157
    %3271 = vmatpush.msra.mxu0 %v3153
    %3272 = vmatpush.msra.mxu0 %v3149
    %3273 = vmatpush.msra.mxu0 %v3145
    %3274 = vmatpush.msra.mxu0 %v3141
    %3275 = vmatpush.msra.mxu0 %v3137
    %3276 = vmatmul.f32.gmra.mxu0 %v3071
    %v3277 = vpop.f32.mrf.mxu0
    %v3278 = vadd.f32 %v3258, %v3277
    %3279 = vdwg.mxu0
    %3280 = vmatpush.msra.mxu0 %v3134
    %3281 = vmatpush.msra.mxu0 %v3130
    %3282 = vmatpush.msra.mxu0 %v3126
    %3283 = vmatpush.msra.mxu0 %v3122
    %3284 = vmatpush.msra.mxu0 %v3118
    %3285 = vmatpush.msra.mxu0 %v3114
    %3286 = vmatpush.msra.mxu0 %v3110
    %3287 = vmatpush.msra.mxu0 %v3106
    %3288 = vmatpush.msra.mxu0 %v3102
    %3289 = vmatpush.msra.mxu0 %v3098
    %3290 = vmatpush.msra.mxu0 %v3094
    %3291 = vmatpush.msra.mxu0 %v3090
    %3292 = vmatpush.msra.mxu0 %v3086
    %3293 = vmatpush.msra.mxu0 %v3082
    %3294 = vmatpush.msra.mxu0 %v3078
    %3295 = vmatpush.msra.mxu0 %v3074
    %3296 = vmatmul.f32.gmra.mxu0 %v3070
    %v3297 = vpop.f32.mrf.mxu0
    %v3298 = vadd.f32 0.0, %v3297
    %3299 = vdwg.mxu0
    %3300 = vmatpush.msra.mxu0 %v3198
    %3301 = vmatpush.msra.mxu0 %v3194
    %3302 = vmatpush.msra.mxu0 %v3190
    %3303 = vmatpush.msra.mxu0 %v3186
    %3304 = vmatpush.msra.mxu0 %v3182
    %3305 = vmatpush.msra.mxu0 %v3178
    %3306 = vmatpush.msra.mxu0 %v3174
    %3307 = vmatpush.msra.mxu0 %v3170
    %3308 = vmatpush.msra.mxu0 %v3166
    %3309 = vmatpush.msra.mxu0 %v3162
    %3310 = vmatpush.msra.mxu0 %v3158
    %3311 = vmatpush.msra.mxu0 %v3154
    %3312 = vmatpush.msra.mxu0 %v3150
    %3313 = vmatpush.msra.mxu0 %v3146
    %3314 = vmatpush.msra.mxu0 %v3142
    %3315 = vmatpush.msra.mxu0 %v3138
    %3316 = vmatmul.f32.gmra.mxu0 %v3071
    %v3317 = vpop.f32.mrf.mxu0
    %v3318 = vadd.f32 %v3298, %v3317
    %3319 = vdwg.mxu0
    %3320 = vmatpush.msra.mxu0 %v3135
    %3321 = vmatpush.msra.mxu0 %v3131
    %3322 = vmatpush.msra.mxu0 %v3127
    %3323 = vmatpush.msra.mxu0 %v3123
    %3324 = vmatpush.msra.mxu0 %v3119
    %3325 = vmatpush.msra.mxu0 %v3115
    %3326 = vmatpush.msra.mxu0 %v3111
    %3327 = vmatpush.msra.mxu0 %v3107
    %3328 = vmatpush.msra.mxu0 %v3103
    %3329 = vmatpush.msra.mxu0 %v3099
    %3330 = vmatpush.msra.mxu0 %v3095
    %3331 = vmatpush.msra.mxu0 %v3091
    %3332 = vmatpush.msra.mxu0 %v3087
    %3333 = vmatpush.msra.mxu0 %v3083
    %3334 = vmatpush.msra.mxu0 %v3079
    %3335 = vmatpush.msra.mxu0 %v3075
    %3336 = vmatmul.f32.gmra.mxu0 %v3070
    %v3337 = vpop.f32.mrf.mxu0
    %v3338 = vadd.f32 0.0, %v3337
    %3339 = vdwg.mxu0
    %3340 = vmatpush.msra.mxu0 %v3199
    %3341 = vmatpush.msra.mxu0 %v3195
    %3342 = vmatpush.msra.mxu0 %v3191
    %3343 = vmatpush.msra.mxu0 %v3187
    %3344 = vmatpush.msra.mxu0 %v3183
    %3345 = vmatpush.msra.mxu0 %v3179
    %3346 = vmatpush.msra.mxu0 %v3175
    %3347 = vmatpush.msra.mxu0 %v3171
    %3348 = vmatpush.msra.mxu0 %v3167
    %3349 = vmatpush.msra.mxu0 %v3163
    %3350 = vmatpush.msra.mxu0 %v3159
    %3351 = vmatpush.msra.mxu0 %v3155
    %3352 = vmatpush.msra.mxu0 %v3151
    %3353 = vmatpush.msra.mxu0 %v3147
    %3354 = vmatpush.msra.mxu0 %v3143
    %3355 = vmatpush.msra.mxu0 %v3139
    %3356 = vmatmul.f32.gmra.mxu0 %v3071
    %v3357 = vpop.f32.mrf.mxu0
    %v3358 = vadd.f32 %v3338, %v3357
    %3359 = vdwg.mxu0
    %v3360 = vld [vmem:[%s4] sm:$0x7]
    %v3362 = vperm.slane %v3360, 0
    %v3363 = vperm.slane %v3360, 1
    %v3364 = vperm.slane %v3360, 2
    %v3368 = vadd.f32 %v3238, %v3362
    %v3369 = vadd.f32 %v3278, %v3363
    %v3370 = vadd.f32 %v3318, %v3364
    %v3371 = vld [vmem:[%s5] sm:$0x1]
    %v3373 = vperm.slane %v3371, 0
    %v3375 = vadd.f32 %v3358, %v3373
    %v3376 = vxor.u32 %v3368, 2147483648
    %v3377 = vmul.f32 %v3376, 1.442695
    %v3378 = vpow.pop %v3377
    %v3379 = vadd.f32 %v3378, 1.0
    %v3380 = vrcp.pop %v3379
    %v3381 = vmul.f32 %v3379, %v3380
    %v3382 = vsub.f32 1.0, %v3381
    %v3383 = vmul.f32 %v3380, %v3382
    %v3384 = vadd.f32 %v3380, %v3383
    %vm3385 = vweird.f32 %v3379
    %vm3386 = vweird.f32 %v3380
    %vm3387 = vmor %vm3385, %vm3386
    %v3388 = vsel %vm3387, %v3380, %v3384
    %v3389 = vand.u32 2147483647, %v3379
    %vm3390 = vcmp.eq.f32.partialorder %v3389, 8.507059e+37
    %v3391 = vand.u32 %v3379, 2147483648
    %v3392 = vor.u32 1.1754944e-38, %v3391
    %v3393 = vsel %vm3390, %v3392, %v3388
    %v3394 = vmul.f32 1.0, %v3393
    %v3395 = vxor.u32 %v3369, 2147483648
    %v3396 = vmul.f32 %v3395, 1.442695
    %v3397 = vpow.pop %v3396
    %v3398 = vadd.f32 %v3397, 1.0
    %v3399 = vrcp.pop %v3398
    %v3400 = vmul.f32 %v3398, %v3399
    %v3401 = vsub.f32 1.0, %v3400
    %v3402 = vmul.f32 %v3399, %v3401
    %v3403 = vadd.f32 %v3399, %v3402
    %vm3404 = vweird.f32 %v3398
    %vm3405 = vweird.f32 %v3399
    %vm3406 = vmor %vm3404, %vm3405
    %v3407 = vsel %vm3406, %v3399, %v3403
    %v3408 = vand.u32 2147483647, %v3398
    %vm3409 = vcmp.eq.f32.partialorder %v3408, 8.507059e+37
    %v3410 = vand.u32 %v3398, 2147483648
    %v3411 = vor.u32 1.1754944e-38, %v3410
    %v3412 = vsel %vm3409, %v3411, %v3407
    %v3413 = vmul.f32 1.0, %v3412
    %v3414 = vtanh.pop %v3370
    %v3415 = vxor.u32 %v3375, 2147483648
    %v3416 = vmul.f32 %v3415, 1.442695
    %v3417 = vpow.pop %v3416
    %v3418 = vadd.f32 %v3417, 1.0
    %v3419 = vrcp.pop %v3418
    %v3420 = vmul.f32 %v3418, %v3419
    %v3421 = vsub.f32 1.0, %v3420
    %v3422 = vmul.f32 %v3419, %v3421
    %v3423 = vadd.f32 %v3419, %v3422
    %vm3424 = vweird.f32 %v3418
    %vm3425 = vweird.f32 %v3419
    %vm3426 = vmor %vm3424, %vm3425
    %v3427 = vsel %vm3426, %v3419, %v3423
    %v3428 = vand.u32 2147483647, %v3418
    %vm3429 = vcmp.eq.f32.partialorder %v3428, 8.507059e+37
    %v3430 = vand.u32 %v3418, 2147483648
    %v3431 = vor.u32 1.1754944e-38, %v3430
    %v3432 = vsel %vm3429, %v3431, %v3427
    %v3433 = vmul.f32 1.0, %v3432
    %v3434 = vmul.f32 %v3394, %v3414
    %v3435 = vld [vmem:[#allocation3] sm:$0xf]
    %v3437 = vrot.slane %v3435, 7
    %v3439 = vmul.f32 %v3433, %v3437
    %v3441 = vrot.slane %v3439, 1
    %v3443 = vsel %vm467, %v3441, 0.0
    %v3444 = vrot.slane %v3443, 4
    %v3445 = vadd.f32 %v3443, %v3444
    %v3446 = vrot.slane %v3445, 2
    %v3447 = vadd.f32 %v3445, %v3446
    %v3448 = vrot.slane %v3447, 1
    %v3449 = vadd.f32 %v3447, %v3448
    %v3450 = vadd.f32 %v3434, %v3449
    %v3451 = vtanh.pop %v3450
    %v3452 = vmul.f32 %v3413, %v3451
    %s3453 = scalar_lea.vmem %s6, %s3032
    %3454 = vst [vmem:[%s3453] sm:$0x1] %v3450
    %s3455 = scalar_lea.vmem %s7, %s3032
    %3456 = vst [vmem:[%s3455] sm:$0x1] %v3452
    // Predicated region
    $region22: #{run.1} parent=1 // pred_check
      _
    $region23: #{run.1} parent=1 // pred_check_branch
      %3458 = sbr.rel (0) target = $region25
    $region24: #{run.1} parent=1 // pred_region
      _
    $region25: #{run.1} parent=1 // pred_fallthru
      _
    // Predicated region
    $region26: #{run.1} parent=1 // pred_check
      _
    $region27: #{run.1} parent=1 // pred_check_branch
      %3460 = sbr.rel (0) target = $region29
    $region28: #{run.1} parent=1 // pred_region
      _
    $region29: #{run.1} parent=1 // pred_fallthru
      _
    // Predicated region
    $region30: #{run.1} parent=1 // pred_check
      _
    $region31: #{run.1} parent=1 // pred_check_branch
      %3462 = sbr.rel (0) target = $region33
    $region32: #{run.1} parent=1 // pred_region
      _
    $region33: #{run.1} parent=1 // pred_fallthru
      _
    // Predicated region
    $region34: #{run.1} parent=1 // pred_check
      _
    $region35: #{run.1} parent=1 // pred_check_branch
      %3464 = sbr.rel (0) target = $region37
    $region36: #{run.1} parent=1 // pred_region
      _
    $region37: #{run.1} parent=1 // pred_fallthru
      _
    %3465 = vsyncpa [#allocation8], 1

</llo_original>
